<compile_context>
chip_gen: v6e
topology: v6e:2x2x1
jax: 0.10.0
libtpu: 0.0.40
codegen_flags: <defaults>
</compile_context>

<pallas_src>
import jax
import jax.numpy as jnp
from jax.experimental import pallas as pl
from jax.experimental.pallas import tpu as pltpu

# ----- small config consistent with the module's __init__ -----
B = 2            # batch
L = 8            # max_seq_length
D = 32           # hidden_size
H = 2            # num_attention_heads
DH = D // H      # attention head size
NL = 2           # num_hidden_layers
FF = 4 * D       # intermediate (feed-forward) size
ITEM_SIZE = 50   # item vocabulary
EPS = 1e-12      # LayerNorm eps
STD = 0.02       # initializer_range

# ----- packed parameter slab layout: [TOTAL_ROWS, 128] f32 ------------------
PAD = 128                       # lane width (lane-dense slab)
G_ROWS = 8                      # global block (ln0_w, ln0_b, padding)
R_LN0_W, R_LN0_B = 0, 1
LW_QKV = 0                      # [D, 3D]  rows  0 .. 31
LW_O = D                        # [D, D]   rows 32 .. 63
LW_FF1 = 2 * D                  # [D, FF]  rows 64 .. 95
LW_FF2 = 3 * D                  # [FF, D]  rows 96 .. 223
LW_VEC = 3 * D + FF             # 8 vector rows, 224 .. 231
LAYER_ROWS = 3 * D + FF + 8     # 232 (multiple of 8)
TOTAL_ROWS = G_ROWS + NL * LAYER_ROWS
V_BQKV, V_BO, V_LN1W, V_LN1B, V_B1, V_B2, V_LN2W, V_LN2B = range(8)


def _layer_norm(x, w, b):
    # torch-style LayerNorm: (x - mean) / sqrt(var + eps) * w + b
    u = jnp.mean(x, axis=-1, keepdims=True)
    s = jnp.mean((x - u) ** 2, axis=-1, keepdims=True)
    return w * (x - u) * jax.lax.rsqrt(s + EPS) + b


def sasrec_kernel(emb_ref, mi_ref, p_ref, out_ref, ctx_ref):
    f32 = jnp.float32
    x = emb_ref[...]                                   # [B*L, D]

    def vec(row, n=D):                                 # one bias/LN vector row
        return p_ref[row:row + 1, 0:n]                 # [1, n]

    # add_position_embedding: LayerNorm (dropout == identity in eval mode)
    x = _layer_norm(x, vec(R_LN0_W), vec(R_LN0_B))

    # ---- build per-batch additive attention mask & rating weight mask ------
    mi = mi_ref[...]                                   # [2B, L]: rows 0..B-1 pad mask, B..2B-1 ratings
    row_i = jax.lax.broadcasted_iota(jnp.int32, (L, L), 0)
    col_j = jax.lax.broadcasted_iota(jnp.int32, (L, L), 1)
    # torch: (tril(ones(L, L), diagonal=1) == 0)  ->  col > row + 1
    subseq = (col_j > row_i + 1).astype(f32)           # [L, L]
    add_masks, weight_masks = [], []
    for b in range(B):
        am_row = mi[b:b + 1, :]                        # [1, L] padding mask
        wt_row = mi[B + b:B + b + 1, :] * 0.2          # [1, L] ratings / 5
        add_masks.append((1.0 - am_row * subseq) * -10000.0)   # [L, L]
        weight_masks.append(wt_row * subseq)                    # [L, L]

    inv_sqrt_dh = 1.0 / (DH ** 0.5)

    for l in range(NL):                                # static unrolled layers
        o = G_ROWS + l * LAYER_ROWS
        wqkv = p_ref[o + LW_QKV: o + LW_QKV + D, 0:3 * D]   # [D, 3D]
        w_o = p_ref[o + LW_O:   o + LW_O + D, 0:D]          # [D, D]
        w1 = p_ref[o + LW_FF1: o + LW_FF1 + D, 0:FF]        # [D, FF]
        w2 = p_ref[o + LW_FF2: o + LW_FF2 + FF, 0:D]        # [FF, D]
        v_off = o + LW_VEC
        bqkv = vec(v_off + V_BQKV, 3 * D)
        b_o = vec(v_off + V_BO)
        ln1w, ln1b = vec(v_off + V_LN1W), vec(v_off + V_LN1B)
        b1 = vec(v_off + V_B1, FF)
        b2 = vec(v_off + V_B2)
        ln2w, ln2b = vec(v_off + V_LN2W), vec(v_off + V_LN2B)

        # ---------- fused QKV projection: one MXU push -> [B*L, 3D] ----------
        qkv = jnp.dot(x, wqkv, preferred_element_type=f32) + bqkv

        # ---------- multi-head self-attention (per batch / per head) --------
        for b in range(B):                             # masks differ per batch
            r0 = b * L
            for h in range(H):
                c = h * DH
                qh = qkv[r0:r0 + L, c:c + DH]
                kh = qkv[r0:r0 + L, D + c:D + c + DH]
                vh = qkv[r0:r0 + L, 2 * D + c:2 * D + c + DH]
                s = jax.lax.dot_general(qh, kh, (((1,), (1,)), ((), ())),
                                        preferred_element_type=f32)
                s = s * inv_sqrt_dh + add_masks[b]
                s = s - jnp.max(s, axis=-1, keepdims=True)
                p = jnp.exp(s)
                inv_den = pl.reciprocal(jnp.sum(p, axis=-1, keepdims=True),
                                        approx=True)
                # fold softmax normalization and explicit-rating weighting
                p = p * (inv_den * weight_masks[b])
                ctx_ref[r0:r0 + L, c:c + DH] = jnp.dot(
                    p, vh, preferred_element_type=f32)

        attn_out = jnp.dot(ctx_ref[...], w_o, preferred_element_type=f32) + b_o
        x = _layer_norm(attn_out + x, ln1w, ln1b)

        # ---------------- position-wise feed-forward ------------------------
        h1 = jnp.dot(x, w1, preferred_element_type=f32) + b1
        # TODO(synk): reference presumably uses exact erf-GELU; tanh
        # approximation used here (guaranteed Mosaic lowering, EUP path).
        h1 = jax.nn.gelu(h1, approximate=True)
        h2 = jnp.dot(h1, w2, preferred_element_type=f32) + b2
        x = _layer_norm(h2 + x, ln2w, ln2b)

    out_ref[...] = x.astype(out_ref.dtype)


# --------------------------- parameter packing ------------------------------
def pack_params(p):
    """Pack all encoder parameters into one lane-dense [TOTAL_ROWS, 128] slab."""
    def pad_mat(m):
        r, c = m.shape
        return jnp.pad(m, ((0, 0), (0, PAD - c)))

    def vec_row(v):
        v = jnp.asarray(v, jnp.float32).reshape(1, -1)
        return jnp.pad(v, ((0, 0), (0, PAD - v.shape[1])))[0]

    blocks = []
    g = jnp.zeros((G_ROWS, PAD), jnp.float32)
    g = g.at[R_LN0_W].set(vec_row(p["ln0_w"]))
    g = g.at[R_LN0_B].set(vec_row(p["ln0_b"]))
    blocks.append(g)
    for l in range(NL):
        wqkv = jnp.concatenate([p["wq"][l], p["wk"][l], p["wv"][l]], axis=1)
        bqkv = jnp.concatenate([p["bq"][l], p["bk"][l], p["bv"][l]], axis=0)
        blocks.append(pad_mat(wqkv))             # rows  0.. 31
        blocks.append(pad_mat(p["wo"][l]))       # rows 32.. 63
        blocks.append(pad_mat(p["w1"][l]))       # rows 64.. 95
        blocks.append(pad_mat(p["w2"][l]))       # rows 96..223
        v = jnp.zeros((8, PAD), jnp.float32)
        v = v.at[V_BQKV].set(vec_row(bqkv))
        v = v.at[V_BO].set(vec_row(p["bo"][l]))
        v = v.at[V_LN1W].set(vec_row(p["ln1_w"][l]))
        v = v.at[V_LN1B].set(vec_row(p["ln1_b"][l]))
        v = v.at[V_B1].set(vec_row(p["b1"][l]))
        v = v.at[V_B2].set(vec_row(p["b2"][l]))
        v = v.at[V_LN2W].set(vec_row(p["ln2_w"][l]))
        v = v.at[V_LN2B].set(vec_row(p["ln2_b"][l]))
        blocks.append(v)
    slab = jnp.concatenate(blocks, axis=0)
    assert slab.shape == (TOTAL_ROWS, PAD)
    return slab


# ------------------------------- wrapper -------------------------------------
def sasrec_forward(param_slab, item_emb, pos_emb, input_items, input_ratings):
    """Embedding gather + mask prep in plain JAX, then one pallas_call."""
    emb = (jnp.take(item_emb, input_items, axis=0)
           + pos_emb[None, :L, :]).reshape(B * L, D)              # [B*L, D]
    mask_info = jnp.concatenate(
        [(input_items > 0).astype(jnp.float32),                   # padding mask
         input_ratings.astype(jnp.float32)], axis=0)              # [2B, L]

    vmem_spec = pl.BlockSpec(memory_space=pltpu.MemorySpace.VMEM)
    out = pl.pallas_call(
        sasrec_kernel,
        out_shape=jax.ShapeDtypeStruct((B * L, D), jnp.float32),
        in_specs=[vmem_spec, vmem_spec, vmem_spec],
        out_specs=vmem_spec,
        scratch_shapes=[pltpu.VMEM((B * L, D), jnp.float32)],      # head-context scratch
    )(emb, mask_info, param_slab)
    return out.reshape(B, L, D)


# ------------------------------ init ------------------------------------------
def init_params(key):
    keys = jax.random.split(key, 8)
    n = lambda k, shape: STD * jax.random.normal(k, shape, jnp.float32)
    return {
        "item_emb": n(keys[0], (ITEM_SIZE, D)),
        "pos_emb":  n(keys[1], (L, D)),
        "ln0_w": jnp.ones((D,), jnp.float32), "ln0_b": jnp.zeros((D,), jnp.float32),
        "wq": n(keys[2], (NL, D, D)), "bq": jnp.zeros((NL, D), jnp.float32),
        "wk": n(keys[3], (NL, D, D)), "bk": jnp.zeros((NL, D), jnp.float32),
        "wv": n(keys[4], (NL, D, D)), "bv": jnp.zeros((NL, D), jnp.float32),
        "wo": n(keys[5], (NL, D, D)), "bo": jnp.zeros((NL, D), jnp.float32),
        "ln1_w": jnp.ones((NL, D), jnp.float32), "ln1_b": jnp.zeros((NL, D), jnp.float32),
        "w1": n(keys[6], (NL, D, FF)), "b1": jnp.zeros((NL, FF), jnp.float32),
        "w2": n(keys[7], (NL, FF, D)), "b2": jnp.zeros((NL, D), jnp.float32),
        "ln2_w": jnp.ones((NL, D), jnp.float32), "ln2_b": jnp.zeros((NL, D), jnp.float32),
    }


if __name__ == "__main__":
    key = jax.random.PRNGKey(0)
    pkey, ikey, rkey = jax.random.split(key, 3)
    params = init_params(pkey)
    param_slab = pack_params(params)

    input_items = jax.random.randint(ikey, (B, L), 0, ITEM_SIZE, dtype=jnp.int32)
    input_items = input_items.at[:, 0].set(0)          # ensure some padding ids
    input_ratings = jax.random.randint(rkey, (B, L), 1, 6).astype(jnp.float32)

    out = sasrec_forward(param_slab, params["item_emb"], params["pos_emb"],
                         input_items, input_ratings)
    out = jax.block_until_ready(out)

    assert out.shape == (B, L, D)
    assert bool(jnp.all(jnp.isfinite(out)))
    print("KERNEL_OK")
</pallas_src>

<mosaic_0001>
module attributes {stable_mosaic.version = 11 : i64} {
  func.func @sasrec_kernel(%arg0: memref<16x32xf32, #tpu.memory_space<vmem>>, %arg1: memref<4x8xf32, #tpu.memory_space<vmem>>, %arg2: memref<472x128xf32, #tpu.memory_space<vmem>>, %arg3: memref<16x32xf32, #tpu.memory_space<vmem>>, %arg4: memref<16x32xf32, #tpu.memory_space<vmem>>) attributes {dimension_semantics = [], scalar_prefetch = 0 : i64, scratch_operands = 1 : i64, tpu.core_type = #tpu.core_type<tc>} {
    %c0 = arith.constant 0 : index
    %c0_0 = arith.constant 0 : index
    %0 = vector.load %arg0[%c0, %c0_0] : memref<16x32xf32, #tpu.memory_space<vmem>>, vector<16x32xf32>
    %c0_1 = arith.constant 0 : index
    %c0_2 = arith.constant 0 : index
    %1 = vector.load %arg2[%c0_1, %c0_2] : memref<472x128xf32, #tpu.memory_space<vmem>>, vector<1x32xf32>
    %c1 = arith.constant 1 : index
    %c0_3 = arith.constant 0 : index
    %2 = vector.load %arg2[%c1, %c0_3] : memref<472x128xf32, #tpu.memory_space<vmem>>, vector<1x32xf32>
    %cst = arith.constant dense<0.000000e+00> : vector<16xf32>
    %3 = vector.multi_reduction <add>, %0, %cst [1] : vector<16x32xf32> to vector<16xf32>
    %4 = vector.shape_cast %3 : vector<16xf32> to vector<16x1xf32>
    %cst_4 = arith.constant 3.200000e+01 : f32
    %5 = vector.broadcast %cst_4 : f32 to vector<16x1xf32>
    %6 = arith.divf %4, %5 : vector<16x1xf32>
    %7 = vector.broadcast %6 : vector<16x1xf32> to vector<16x32xf32>
    %8 = arith.subf %0, %7 : vector<16x32xf32>
    %9 = arith.mulf %8, %8 : vector<16x32xf32>
    %cst_5 = arith.constant dense<0.000000e+00> : vector<16xf32>
    %10 = vector.multi_reduction <add>, %9, %cst_5 [1] : vector<16x32xf32> to vector<16xf32>
    %11 = vector.shape_cast %10 : vector<16xf32> to vector<16x1xf32>
    %cst_6 = arith.constant 3.200000e+01 : f32
    %12 = vector.broadcast %cst_6 : f32 to vector<16x1xf32>
    %13 = arith.divf %11, %12 : vector<16x1xf32>
    %14 = vector.broadcast %6 : vector<16x1xf32> to vector<16x32xf32>
    %15 = arith.subf %0, %14 : vector<16x32xf32>
    %16 = vector.broadcast %1 : vector<1x32xf32> to vector<16x32xf32>
    %17 = arith.mulf %16, %15 : vector<16x32xf32>
    %cst_7 = arith.constant 9.99999996E-13 : f32
    %18 = vector.broadcast %cst_7 : f32 to vector<16x1xf32>
    %19 = arith.addf %13, %18 : vector<16x1xf32>
    %20 = math.rsqrt %19 : vector<16x1xf32>
    %21 = vector.broadcast %20 : vector<16x1xf32> to vector<16x32xf32>
    %22 = arith.mulf %17, %21 : vector<16x32xf32>
    %23 = vector.broadcast %2 : vector<1x32xf32> to vector<16x32xf32>
    %24 = arith.addf %22, %23 : vector<16x32xf32>
    %c0_8 = arith.constant 0 : index
    %c0_9 = arith.constant 0 : index
    %25 = vector.load %arg1[%c0_8, %c0_9] : memref<4x8xf32, #tpu.memory_space<vmem>>, vector<4x8xf32>
    %26 = tpu.iota {dimensions = array<i32: 0>} : vector<8x8xi32>
    %27 = tpu.iota {dimensions = array<i32: 1>} : vector<8x8xi32>
    %c1_i32 = arith.constant 1 : i32
    %28 = vector.broadcast %c1_i32 : i32 to vector<8x8xi32>
    %29 = arith.addi %26, %28 : vector<8x8xi32>
    %30 = arith.cmpi sgt, %27, %29 : vector<8x8xi32>
    %31 = arith.extui %30 : vector<8x8xi1> to vector<8x8xi32>
    %32 = arith.sitofp %31 : vector<8x8xi32> to vector<8x8xf32>
    %33 = vector.extract_strided_slice %25 {offsets = [0, 0], sizes = [1, 8], strides = [1, 1]} : vector<4x8xf32> to vector<1x8xf32>
    %34 = vector.extract_strided_slice %25 {offsets = [2, 0], sizes = [1, 8], strides = [1, 1]} : vector<4x8xf32> to vector<1x8xf32>
    %cst_10 = arith.constant 2.000000e-01 : f32
    %35 = vector.broadcast %cst_10 : f32 to vector<1x8xf32>
    %36 = arith.mulf %34, %35 : vector<1x8xf32>
    %37 = vector.broadcast %33 : vector<1x8xf32> to vector<8x8xf32>
    %38 = arith.mulf %37, %32 : vector<8x8xf32>
    %cst_11 = arith.constant 1.000000e+00 : f32
    %39 = vector.broadcast %cst_11 : f32 to vector<8x8xf32>
    %40 = arith.subf %39, %38 : vector<8x8xf32>
    %cst_12 = arith.constant -1.000000e+04 : f32
    %41 = vector.broadcast %cst_12 : f32 to vector<8x8xf32>
    %42 = arith.mulf %40, %41 : vector<8x8xf32>
    %43 = vector.broadcast %36 : vector<1x8xf32> to vector<8x8xf32>
    %44 = arith.mulf %43, %32 : vector<8x8xf32>
    %45 = vector.extract_strided_slice %25 {offsets = [1, 0], sizes = [1, 8], strides = [1, 1]} : vector<4x8xf32> to vector<1x8xf32>
    %46 = vector.extract_strided_slice %25 {offsets = [3, 0], sizes = [1, 8], strides = [1, 1]} : vector<4x8xf32> to vector<1x8xf32>
    %cst_13 = arith.constant 2.000000e-01 : f32
    %47 = vector.broadcast %cst_13 : f32 to vector<1x8xf32>
    %48 = arith.mulf %46, %47 : vector<1x8xf32>
    %49 = vector.broadcast %45 : vector<1x8xf32> to vector<8x8xf32>
    %50 = arith.mulf %49, %32 : vector<8x8xf32>
    %cst_14 = arith.constant 1.000000e+00 : f32
    %51 = vector.broadcast %cst_14 : f32 to vector<8x8xf32>
    %52 = arith.subf %51, %50 : vector<8x8xf32>
    %cst_15 = arith.constant -1.000000e+04 : f32
    %53 = vector.broadcast %cst_15 : f32 to vector<8x8xf32>
    %54 = arith.mulf %52, %53 : vector<8x8xf32>
    %55 = vector.broadcast %48 : vector<1x8xf32> to vector<8x8xf32>
    %56 = arith.mulf %55, %32 : vector<8x8xf32>
    %c8 = arith.constant 8 : index
    %c0_16 = arith.constant 0 : index
    %57 = vector.load %arg2[%c8, %c0_16] : memref<472x128xf32, #tpu.memory_space<vmem>>, vector<32x96xf32>
    %c40 = arith.constant 40 : index
    %c0_17 = arith.constant 0 : index
    %58 = vector.load %arg2[%c40, %c0_17] : memref<472x128xf32, #tpu.memory_space<vmem>>, vector<32x32xf32>
    %c72 = arith.constant 72 : index
    %c0_18 = arith.constant 0 : index
    %59 = vector.load %arg2[%c72, %c0_18] : memref<472x128xf32, #tpu.memory_space<vmem>>, vector<32x128xf32>
    %c104 = arith.constant 104 : index
    %c0_19 = arith.constant 0 : index
    %60 = vector.load %arg2[%c104, %c0_19] : memref<472x128xf32, #tpu.memory_space<vmem>>, vector<128x32xf32>
    %c232 = arith.constant 232 : index
    %c0_20 = arith.constant 0 : index
    %61 = vector.load %arg2[%c232, %c0_20] : memref<472x128xf32, #tpu.memory_space<vmem>>, vector<1x96xf32>
    %c233 = arith.constant 233 : index
    %c0_21 = arith.constant 0 : index
    %62 = vector.load %arg2[%c233, %c0_21] : memref<472x128xf32, #tpu.memory_space<vmem>>, vector<1x32xf32>
    %c234 = arith.constant 234 : index
    %c0_22 = arith.constant 0 : index
    %63 = vector.load %arg2[%c234, %c0_22] : memref<472x128xf32, #tpu.memory_space<vmem>>, vector<1x32xf32>
    %c235 = arith.constant 235 : index
    %c0_23 = arith.constant 0 : index
    %64 = vector.load %arg2[%c235, %c0_23] : memref<472x128xf32, #tpu.memory_space<vmem>>, vector<1x32xf32>
    %c236 = arith.constant 236 : index
    %c0_24 = arith.constant 0 : index
    %65 = vector.load %arg2[%c236, %c0_24] : memref<472x128xf32, #tpu.memory_space<vmem>>, vector<1x128xf32>
    %c237 = arith.constant 237 : index
    %c0_25 = arith.constant 0 : index
    %66 = vector.load %arg2[%c237, %c0_25] : memref<472x128xf32, #tpu.memory_space<vmem>>, vector<1x32xf32>
    %c238 = arith.constant 238 : index
    %c0_26 = arith.constant 0 : index
    %67 = vector.load %arg2[%c238, %c0_26] : memref<472x128xf32, #tpu.memory_space<vmem>>, vector<1x32xf32>
    %c239 = arith.constant 239 : index
    %c0_27 = arith.constant 0 : index
    %68 = vector.load %arg2[%c239, %c0_27] : memref<472x128xf32, #tpu.memory_space<vmem>>, vector<1x32xf32>
    %cst_28 = arith.constant dense<0.000000e+00> : vector<16x96xf32>
    %69 = tpu.matmul %24, %57, %cst_28 {dimension_numbers = #tpu.dot_dimension_numbers<[1], [0], [0], [1], [0, 0, 1, 1], [], []>} : vector<16x32xf32>, vector<32x96xf32>, vector<16x96xf32> -> vector<16x96xf32>
    %70 = vector.broadcast %61 : vector<1x96xf32> to vector<16x96xf32>
    %71 = arith.addf %69, %70 : vector<16x96xf32>
    %72 = vector.extract_strided_slice %71 {offsets = [0, 0], sizes = [8, 16], strides = [1, 1]} : vector<16x96xf32> to vector<8x16xf32>
    %73 = vector.extract_strided_slice %71 {offsets = [0, 32], sizes = [8, 16], strides = [1, 1]} : vector<16x96xf32> to vector<8x16xf32>
    %74 = vector.extract_strided_slice %71 {offsets = [0, 64], sizes = [8, 16], strides = [1, 1]} : vector<16x96xf32> to vector<8x16xf32>
    %cst_29 = arith.constant dense<0.000000e+00> : vector<8x8xf32>
    %75 = tpu.matmul %72, %73, %cst_29 {dimension_numbers = #tpu.dot_dimension_numbers<[1], [1], [0], [0], [0, 0, 1, 0], [], []>} : vector<8x16xf32>, vector<8x16xf32>, vector<8x8xf32> -> vector<8x8xf32>
    %cst_30 = arith.constant 2.500000e-01 : f32
    %76 = vector.broadcast %cst_30 : f32 to vector<8x8xf32>
    %77 = arith.mulf %75, %76 : vector<8x8xf32>
    %78 = arith.addf %77, %42 : vector<8x8xf32>
    %cst_31 = arith.constant dense<0xFF800000> : vector<8xf32>
    %79 = vector.multi_reduction <maximumf>, %78, %cst_31 [1] : vector<8x8xf32> to vector<8xf32>
    %80 = vector.shape_cast %79 : vector<8xf32> to vector<8x1xf32>
    %81 = vector.broadcast %80 : vector<8x1xf32> to vector<8x8xf32>
    %82 = arith.subf %78, %81 : vector<8x8xf32>
    %83 = math.exp %82 : vector<8x8xf32>
    %cst_32 = arith.constant dense<0.000000e+00> : vector<8xf32>
    %84 = vector.multi_reduction <add>, %83, %cst_32 [1] : vector<8x8xf32> to vector<8xf32>
    %85 = vector.shape_cast %84 : vector<8xf32> to vector<8x1xf32>
    %86 = tpu.reciprocal %85 {approx = true} : vector<8x1xf32> -> vector<8x1xf32>
    %87 = vector.broadcast %86 : vector<8x1xf32> to vector<8x8xf32>
    %88 = arith.mulf %87, %44 : vector<8x8xf32>
    %89 = arith.mulf %83, %88 : vector<8x8xf32>
    %cst_33 = arith.constant dense<0.000000e+00> : vector<8x16xf32>
    %90 = tpu.matmul %89, %74, %cst_33 {dimension_numbers = #tpu.dot_dimension_numbers<[1], [0], [0], [1], [0, 0, 1, 1], [], []>} : vector<8x8xf32>, vector<8x16xf32>, vector<8x16xf32> -> vector<8x16xf32>
    %c0_34 = arith.constant 0 : index
    %c0_35 = arith.constant 0 : index
    %91 = vector.load %arg4[%c0_34, %c0_35] : memref<16x32xf32, #tpu.memory_space<vmem>>, vector<8x16xf32>
    tpu.vector_store %arg4[%c0_34, %c0_35], %90 {strides = array<i32>} : memref<16x32xf32, #tpu.memory_space<vmem>>, vector<8x16xf32>,
    %92 = vector.extract_strided_slice %71 {offsets = [0, 16], sizes = [8, 16], strides = [1, 1]} : vector<16x96xf32> to vector<8x16xf32>
    %93 = vector.extract_strided_slice %71 {offsets = [0, 48], sizes = [8, 16], strides = [1, 1]} : vector<16x96xf32> to vector<8x16xf32>
    %94 = vector.extract_strided_slice %71 {offsets = [0, 80], sizes = [8, 16], strides = [1, 1]} : vector<16x96xf32> to vector<8x16xf32>
    %cst_36 = arith.constant dense<0.000000e+00> : vector<8x8xf32>
    %95 = tpu.matmul %92, %93, %cst_36 {dimension_numbers = #tpu.dot_dimension_numbers<[1], [1], [0], [0], [0, 0, 1, 0], [], []>} : vector<8x16xf32>, vector<8x16xf32>, vector<8x8xf32> -> vector<8x8xf32>
    %cst_37 = arith.constant 2.500000e-01 : f32
    %96 = vector.broadcast %cst_37 : f32 to vector<8x8xf32>
    %97 = arith.mulf %95, %96 : vector<8x8xf32>
    %98 = arith.addf %97, %42 : vector<8x8xf32>
    %cst_38 = arith.constant dense<0xFF800000> : vector<8xf32>
    %99 = vector.multi_reduction <maximumf>, %98, %cst_38 [1] : vector<8x8xf32> to vector<8xf32>
    %100 = vector.shape_cast %99 : vector<8xf32> to vector<8x1xf32>
    %101 = vector.broadcast %100 : vector<8x1xf32> to vector<8x8xf32>
    %102 = arith.subf %98, %101 : vector<8x8xf32>
    %103 = math.exp %102 : vector<8x8xf32>
    %cst_39 = arith.constant dense<0.000000e+00> : vector<8xf32>
    %104 = vector.multi_reduction <add>, %103, %cst_39 [1] : vector<8x8xf32> to vector<8xf32>
    %105 = vector.shape_cast %104 : vector<8xf32> to vector<8x1xf32>
    %106 = tpu.reciprocal %105 {approx = true} : vector<8x1xf32> -> vector<8x1xf32>
    %107 = vector.broadcast %106 : vector<8x1xf32> to vector<8x8xf32>
    %108 = arith.mulf %107, %44 : vector<8x8xf32>
    %109 = arith.mulf %103, %108 : vector<8x8xf32>
    %cst_40 = arith.constant dense<0.000000e+00> : vector<8x16xf32>
    %110 = tpu.matmul %109, %94, %cst_40 {dimension_numbers = #tpu.dot_dimension_numbers<[1], [0], [0], [1], [0, 0, 1, 1], [], []>} : vector<8x8xf32>, vector<8x16xf32>, vector<8x16xf32> -> vector<8x16xf32>
    %c0_41 = arith.constant 0 : index
    %c16 = arith.constant 16 : index
    %111 = vector.load %arg4[%c0_41, %c16] : memref<16x32xf32, #tpu.memory_space<vmem>>, vector<8x16xf32>
    tpu.vector_store %arg4[%c0_41, %c16], %110 {strides = array<i32>} : memref<16x32xf32, #tpu.memory_space<vmem>>, vector<8x16xf32>,
    %112 = vector.extract_strided_slice %71 {offsets = [8, 0], sizes = [8, 16], strides = [1, 1]} : vector<16x96xf32> to vector<8x16xf32>
    %113 = vector.extract_strided_slice %71 {offsets = [8, 32], sizes = [8, 16], strides = [1, 1]} : vector<16x96xf32> to vector<8x16xf32>
    %114 = vector.extract_strided_slice %71 {offsets = [8, 64], sizes = [8, 16], strides = [1, 1]} : vector<16x96xf32> to vector<8x16xf32>
    %cst_42 = arith.constant dense<0.000000e+00> : vector<8x8xf32>
    %115 = tpu.matmul %112, %113, %cst_42 {dimension_numbers = #tpu.dot_dimension_numbers<[1], [1], [0], [0], [0, 0, 1, 0], [], []>} : vector<8x16xf32>, vector<8x16xf32>, vector<8x8xf32> -> vector<8x8xf32>
    %cst_43 = arith.constant 2.500000e-01 : f32
    %116 = vector.broadcast %cst_43 : f32 to vector<8x8xf32>
    %117 = arith.mulf %115, %116 : vector<8x8xf32>
    %118 = arith.addf %117, %54 : vector<8x8xf32>
    %cst_44 = arith.constant dense<0xFF800000> : vector<8xf32>
    %119 = vector.multi_reduction <maximumf>, %118, %cst_44 [1] : vector<8x8xf32> to vector<8xf32>
    %120 = vector.shape_cast %119 : vector<8xf32> to vector<8x1xf32>
    %121 = vector.broadcast %120 : vector<8x1xf32> to vector<8x8xf32>
    %122 = arith.subf %118, %121 : vector<8x8xf32>
    %123 = math.exp %122 : vector<8x8xf32>
    %cst_45 = arith.constant dense<0.000000e+00> : vector<8xf32>
    %124 = vector.multi_reduction <add>, %123, %cst_45 [1] : vector<8x8xf32> to vector<8xf32>
    %125 = vector.shape_cast %124 : vector<8xf32> to vector<8x1xf32>
    %126 = tpu.reciprocal %125 {approx = true} : vector<8x1xf32> -> vector<8x1xf32>
    %127 = vector.broadcast %126 : vector<8x1xf32> to vector<8x8xf32>
    %128 = arith.mulf %127, %56 : vector<8x8xf32>
    %129 = arith.mulf %123, %128 : vector<8x8xf32>
    %cst_46 = arith.constant dense<0.000000e+00> : vector<8x16xf32>
    %130 = tpu.matmul %129, %114, %cst_46 {dimension_numbers = #tpu.dot_dimension_numbers<[1], [0], [0], [1], [0, 0, 1, 1], [], []>} : vector<8x8xf32>, vector<8x16xf32>, vector<8x16xf32> -> vector<8x16xf32>
    %c8_47 = arith.constant 8 : index
    %c0_48 = arith.constant 0 : index
    %131 = vector.load %arg4[%c8_47, %c0_48] : memref<16x32xf32, #tpu.memory_space<vmem>>, vector<8x16xf32>
    tpu.vector_store %arg4[%c8_47, %c0_48], %130 {strides = array<i32>} : memref<16x32xf32, #tpu.memory_space<vmem>>, vector<8x16xf32>,
    %132 = vector.extract_strided_slice %71 {offsets = [8, 16], sizes = [8, 16], strides = [1, 1]} : vector<16x96xf32> to vector<8x16xf32>
    %133 = vector.extract_strided_slice %71 {offsets = [8, 48], sizes = [8, 16], strides = [1, 1]} : vector<16x96xf32> to vector<8x16xf32>
    %134 = vector.extract_strided_slice %71 {offsets = [8, 80], sizes = [8, 16], strides = [1, 1]} : vector<16x96xf32> to vector<8x16xf32>
    %cst_49 = arith.constant dense<0.000000e+00> : vector<8x8xf32>
    %135 = tpu.matmul %132, %133, %cst_49 {dimension_numbers = #tpu.dot_dimension_numbers<[1], [1], [0], [0], [0, 0, 1, 0], [], []>} : vector<8x16xf32>, vector<8x16xf32>, vector<8x8xf32> -> vector<8x8xf32>
    %cst_50 = arith.constant 2.500000e-01 : f32
    %136 = vector.broadcast %cst_50 : f32 to vector<8x8xf32>
    %137 = arith.mulf %135, %136 : vector<8x8xf32>
    %138 = arith.addf %137, %54 : vector<8x8xf32>
    %cst_51 = arith.constant dense<0xFF800000> : vector<8xf32>
    %139 = vector.multi_reduction <maximumf>, %138, %cst_51 [1] : vector<8x8xf32> to vector<8xf32>
    %140 = vector.shape_cast %139 : vector<8xf32> to vector<8x1xf32>
    %141 = vector.broadcast %140 : vector<8x1xf32> to vector<8x8xf32>
    %142 = arith.subf %138, %141 : vector<8x8xf32>
    %143 = math.exp %142 : vector<8x8xf32>
    %cst_52 = arith.constant dense<0.000000e+00> : vector<8xf32>
    %144 = vector.multi_reduction <add>, %143, %cst_52 [1] : vector<8x8xf32> to vector<8xf32>
    %145 = vector.shape_cast %144 : vector<8xf32> to vector<8x1xf32>
    %146 = tpu.reciprocal %145 {approx = true} : vector<8x1xf32> -> vector<8x1xf32>
    %147 = vector.broadcast %146 : vector<8x1xf32> to vector<8x8xf32>
    %148 = arith.mulf %147, %56 : vector<8x8xf32>
    %149 = arith.mulf %143, %148 : vector<8x8xf32>
    %cst_53 = arith.constant dense<0.000000e+00> : vector<8x16xf32>
    %150 = tpu.matmul %149, %134, %cst_53 {dimension_numbers = #tpu.dot_dimension_numbers<[1], [0], [0], [1], [0, 0, 1, 1], [], []>} : vector<8x8xf32>, vector<8x16xf32>, vector<8x16xf32> -> vector<8x16xf32>
    %c8_54 = arith.constant 8 : index
    %c16_55 = arith.constant 16 : index
    %151 = vector.load %arg4[%c8_54, %c16_55] : memref<16x32xf32, #tpu.memory_space<vmem>>, vector<8x16xf32>
    tpu.vector_store %arg4[%c8_54, %c16_55], %150 {strides = array<i32>} : memref<16x32xf32, #tpu.memory_space<vmem>>, vector<8x16xf32>,
    %c0_56 = arith.constant 0 : index
    %c0_57 = arith.constant 0 : index
    %152 = vector.load %arg4[%c0_56, %c0_57] : memref<16x32xf32, #tpu.memory_space<vmem>>, vector<16x32xf32>
    %cst_58 = arith.constant dense<0.000000e+00> : vector<16x32xf32>
    %153 = tpu.matmul %152, %58, %cst_58 {dimension_numbers = #tpu.dot_dimension_numbers<[1], [0], [0], [1], [0, 0, 1, 1], [], []>} : vector<16x32xf32>, vector<32x32xf32>, vector<16x32xf32> -> vector<16x32xf32>
    %154 = vector.broadcast %62 : vector<1x32xf32> to vector<16x32xf32>
    %155 = arith.addf %153, %154 : vector<16x32xf32>
    %156 = arith.addf %155, %24 : vector<16x32xf32>
    %cst_59 = arith.constant dense<0.000000e+00> : vector<16xf32>
    %157 = vector.multi_reduction <add>, %156, %cst_59 [1] : vector<16x32xf32> to vector<16xf32>
    %158 = vector.shape_cast %157 : vector<16xf32> to vector<16x1xf32>
    %cst_60 = arith.constant 3.200000e+01 : f32
    %159 = vector.broadcast %cst_60 : f32 to vector<16x1xf32>
    %160 = arith.divf %158, %159 : vector<16x1xf32>
    %161 = vector.broadcast %160 : vector<16x1xf32> to vector<16x32xf32>
    %162 = arith.subf %156, %161 : vector<16x32xf32>
    %163 = arith.mulf %162, %162 : vector<16x32xf32>
    %cst_61 = arith.constant dense<0.000000e+00> : vector<16xf32>
    %164 = vector.multi_reduction <add>, %163, %cst_61 [1] : vector<16x32xf32> to vector<16xf32>
    %165 = vector.shape_cast %164 : vector<16xf32> to vector<16x1xf32>
    %cst_62 = arith.constant 3.200000e+01 : f32
    %166 = vector.broadcast %cst_62 : f32 to vector<16x1xf32>
    %167 = arith.divf %165, %166 : vector<16x1xf32>
    %168 = vector.broadcast %160 : vector<16x1xf32> to vector<16x32xf32>
    %169 = arith.subf %156, %168 : vector<16x32xf32>
    %170 = vector.broadcast %63 : vector<1x32xf32> to vector<16x32xf32>
    %171 = arith.mulf %170, %169 : vector<16x32xf32>
    %cst_63 = arith.constant 9.99999996E-13 : f32
    %172 = vector.broadcast %cst_63 : f32 to vector<16x1xf32>
    %173 = arith.addf %167, %172 : vector<16x1xf32>
    %174 = math.rsqrt %173 : vector<16x1xf32>
    %175 = vector.broadcast %174 : vector<16x1xf32> to vector<16x32xf32>
    %176 = arith.mulf %171, %175 : vector<16x32xf32>
    %177 = vector.broadcast %64 : vector<1x32xf32> to vector<16x32xf32>
    %178 = arith.addf %176, %177 : vector<16x32xf32>
    %cst_64 = arith.constant dense<0.000000e+00> : vector<16x128xf32>
    %179 = tpu.matmul %178, %59, %cst_64 {dimension_numbers = #tpu.dot_dimension_numbers<[1], [0], [0], [1], [0, 0, 1, 1], [], []>} : vector<16x32xf32>, vector<32x128xf32>, vector<16x128xf32> -> vector<16x128xf32>
    %180 = vector.broadcast %65 : vector<1x128xf32> to vector<16x128xf32>
    %181 = arith.addf %179, %180 : vector<16x128xf32>
    %182 = arith.mulf %181, %181 : vector<16x128xf32>
    %183 = arith.mulf %181, %182 : vector<16x128xf32>
    %cst_65 = arith.constant 4.471500e-02 : f32
    %184 = vector.broadcast %cst_65 : f32 to vector<16x128xf32>
    %185 = arith.mulf %184, %183 : vector<16x128xf32>
    %186 = arith.addf %181, %185 : vector<16x128xf32>
    %cst_66 = arith.constant 0.797884583 : f32
    %187 = vector.broadcast %cst_66 : f32 to vector<16x128xf32>
    %188 = arith.mulf %187, %186 : vector<16x128xf32>
    %189 = math.tanh %188 : vector<16x128xf32>
    %cst_67 = arith.constant 1.000000e+00 : f32
    %190 = vector.broadcast %cst_67 : f32 to vector<16x128xf32>
    %191 = arith.addf %190, %189 : vector<16x128xf32>
    %cst_68 = arith.constant 5.000000e-01 : f32
    %192 = vector.broadcast %cst_68 : f32 to vector<16x128xf32>
    %193 = arith.mulf %192, %191 : vector<16x128xf32>
    %194 = arith.mulf %181, %193 : vector<16x128xf32>
    %cst_69 = arith.constant dense<0.000000e+00> : vector<16x32xf32>
    %195 = tpu.matmul %194, %60, %cst_69 {dimension_numbers = #tpu.dot_dimension_numbers<[1], [0], [0], [1], [0, 0, 1, 1], [], []>} : vector<16x128xf32>, vector<128x32xf32>, vector<16x32xf32> -> vector<16x32xf32>
    %196 = vector.broadcast %66 : vector<1x32xf32> to vector<16x32xf32>
    %197 = arith.addf %195, %196 : vector<16x32xf32>
    %198 = arith.addf %197, %178 : vector<16x32xf32>
    %cst_70 = arith.constant dense<0.000000e+00> : vector<16xf32>
    %199 = vector.multi_reduction <add>, %198, %cst_70 [1] : vector<16x32xf32> to vector<16xf32>
    %200 = vector.shape_cast %199 : vector<16xf32> to vector<16x1xf32>
    %cst_71 = arith.constant 3.200000e+01 : f32
    %201 = vector.broadcast %cst_71 : f32 to vector<16x1xf32>
    %202 = arith.divf %200, %201 : vector<16x1xf32>
    %203 = vector.broadcast %202 : vector<16x1xf32> to vector<16x32xf32>
    %204 = arith.subf %198, %203 : vector<16x32xf32>
    %205 = arith.mulf %204, %204 : vector<16x32xf32>
    %cst_72 = arith.constant dense<0.000000e+00> : vector<16xf32>
    %206 = vector.multi_reduction <add>, %205, %cst_72 [1] : vector<16x32xf32> to vector<16xf32>
    %207 = vector.shape_cast %206 : vector<16xf32> to vector<16x1xf32>
    %cst_73 = arith.constant 3.200000e+01 : f32
    %208 = vector.broadcast %cst_73 : f32 to vector<16x1xf32>
    %209 = arith.divf %207, %208 : vector<16x1xf32>
    %210 = vector.broadcast %202 : vector<16x1xf32> to vector<16x32xf32>
    %211 = arith.subf %198, %210 : vector<16x32xf32>
    %212 = vector.broadcast %67 : vector<1x32xf32> to vector<16x32xf32>
    %213 = arith.mulf %212, %211 : vector<16x32xf32>
    %cst_74 = arith.constant 9.99999996E-13 : f32
    %214 = vector.broadcast %cst_74 : f32 to vector<16x1xf32>
    %215 = arith.addf %209, %214 : vector<16x1xf32>
    %216 = math.rsqrt %215 : vector<16x1xf32>
    %217 = vector.broadcast %216 : vector<16x1xf32> to vector<16x32xf32>
    %218 = arith.mulf %213, %217 : vector<16x32xf32>
    %219 = vector.broadcast %68 : vector<1x32xf32> to vector<16x32xf32>
    %220 = arith.addf %218, %219 : vector<16x32xf32>
    %c240 = arith.constant 240 : index
    %c0_75 = arith.constant 0 : index
    %221 = vector.load %arg2[%c240, %c0_75] : memref<472x128xf32, #tpu.memory_space<vmem>>, vector<32x96xf32>
    %c272 = arith.constant 272 : index
    %c0_76 = arith.constant 0 : index
    %222 = vector.load %arg2[%c272, %c0_76] : memref<472x128xf32, #tpu.memory_space<vmem>>, vector<32x32xf32>
    %c304 = arith.constant 304 : index
    %c0_77 = arith.constant 0 : index
    %223 = vector.load %arg2[%c304, %c0_77] : memref<472x128xf32, #tpu.memory_space<vmem>>, vector<32x128xf32>
    %c336 = arith.constant 336 : index
    %c0_78 = arith.constant 0 : index
    %224 = vector.load %arg2[%c336, %c0_78] : memref<472x128xf32, #tpu.memory_space<vmem>>, vector<128x32xf32>
    %c464 = arith.constant 464 : index
    %c0_79 = arith.constant 0 : index
    %225 = vector.load %arg2[%c464, %c0_79] : memref<472x128xf32, #tpu.memory_space<vmem>>, vector<1x96xf32>
    %c465 = arith.constant 465 : index
    %c0_80 = arith.constant 0 : index
    %226 = vector.load %arg2[%c465, %c0_80] : memref<472x128xf32, #tpu.memory_space<vmem>>, vector<1x32xf32>
    %c466 = arith.constant 466 : index
    %c0_81 = arith.constant 0 : index
    %227 = vector.load %arg2[%c466, %c0_81] : memref<472x128xf32, #tpu.memory_space<vmem>>, vector<1x32xf32>
    %c467 = arith.constant 467 : index
    %c0_82 = arith.constant 0 : index
    %228 = vector.load %arg2[%c467, %c0_82] : memref<472x128xf32, #tpu.memory_space<vmem>>, vector<1x32xf32>
    %c468 = arith.constant 468 : index
    %c0_83 = arith.constant 0 : index
    %229 = vector.load %arg2[%c468, %c0_83] : memref<472x128xf32, #tpu.memory_space<vmem>>, vector<1x128xf32>
    %c469 = arith.constant 469 : index
    %c0_84 = arith.constant 0 : index
    %230 = vector.load %arg2[%c469, %c0_84] : memref<472x128xf32, #tpu.memory_space<vmem>>, vector<1x32xf32>
    %c470 = arith.constant 470 : index
    %c0_85 = arith.constant 0 : index
    %231 = vector.load %arg2[%c470, %c0_85] : memref<472x128xf32, #tpu.memory_space<vmem>>, vector<1x32xf32>
    %c471 = arith.constant 471 : index
    %c0_86 = arith.constant 0 : index
    %232 = vector.load %arg2[%c471, %c0_86] : memref<472x128xf32, #tpu.memory_space<vmem>>, vector<1x32xf32>
    %cst_87 = arith.constant dense<0.000000e+00> : vector<16x96xf32>
    %233 = tpu.matmul %220, %221, %cst_87 {dimension_numbers = #tpu.dot_dimension_numbers<[1], [0], [0], [1], [0, 0, 1, 1], [], []>} : vector<16x32xf32>, vector<32x96xf32>, vector<16x96xf32> -> vector<16x96xf32>
    %234 = vector.broadcast %225 : vector<1x96xf32> to vector<16x96xf32>
    %235 = arith.addf %233, %234 : vector<16x96xf32>
    %236 = vector.extract_strided_slice %235 {offsets = [0, 0], sizes = [8, 16], strides = [1, 1]} : vector<16x96xf32> to vector<8x16xf32>
    %237 = vector.extract_strided_slice %235 {offsets = [0, 32], sizes = [8, 16], strides = [1, 1]} : vector<16x96xf32> to vector<8x16xf32>
    %238 = vector.extract_strided_slice %235 {offsets = [0, 64], sizes = [8, 16], strides = [1, 1]} : vector<16x96xf32> to vector<8x16xf32>
    %cst_88 = arith.constant dense<0.000000e+00> : vector<8x8xf32>
    %239 = tpu.matmul %236, %237, %cst_88 {dimension_numbers = #tpu.dot_dimension_numbers<[1], [1], [0], [0], [0, 0, 1, 0], [], []>} : vector<8x16xf32>, vector<8x16xf32>, vector<8x8xf32> -> vector<8x8xf32>
    %cst_89 = arith.constant 2.500000e-01 : f32
    %240 = vector.broadcast %cst_89 : f32 to vector<8x8xf32>
    %241 = arith.mulf %239, %240 : vector<8x8xf32>
    %242 = arith.addf %241, %42 : vector<8x8xf32>
    %cst_90 = arith.constant dense<0xFF800000> : vector<8xf32>
    %243 = vector.multi_reduction <maximumf>, %242, %cst_90 [1] : vector<8x8xf32> to vector<8xf32>
    %244 = vector.shape_cast %243 : vector<8xf32> to vector<8x1xf32>
    %245 = vector.broadcast %244 : vector<8x1xf32> to vector<8x8xf32>
    %246 = arith.subf %242, %245 : vector<8x8xf32>
    %247 = math.exp %246 : vector<8x8xf32>
    %cst_91 = arith.constant dense<0.000000e+00> : vector<8xf32>
    %248 = vector.multi_reduction <add>, %247, %cst_91 [1] : vector<8x8xf32> to vector<8xf32>
    %249 = vector.shape_cast %248 : vector<8xf32> to vector<8x1xf32>
    %250 = tpu.reciprocal %249 {approx = true} : vector<8x1xf32> -> vector<8x1xf32>
    %251 = vector.broadcast %250 : vector<8x1xf32> to vector<8x8xf32>
    %252 = arith.mulf %251, %44 : vector<8x8xf32>
    %253 = arith.mulf %247, %252 : vector<8x8xf32>
    %cst_92 = arith.constant dense<0.000000e+00> : vector<8x16xf32>
    %254 = tpu.matmul %253, %238, %cst_92 {dimension_numbers = #tpu.dot_dimension_numbers<[1], [0], [0], [1], [0, 0, 1, 1], [], []>} : vector<8x8xf32>, vector<8x16xf32>, vector<8x16xf32> -> vector<8x16xf32>
    %c0_93 = arith.constant 0 : index
    %c0_94 = arith.constant 0 : index
    %255 = vector.load %arg4[%c0_93, %c0_94] : memref<16x32xf32, #tpu.memory_space<vmem>>, vector<8x16xf32>
    tpu.vector_store %arg4[%c0_93, %c0_94], %254 {strides = array<i32>} : memref<16x32xf32, #tpu.memory_space<vmem>>, vector<8x16xf32>,
    %256 = vector.extract_strided_slice %235 {offsets = [0, 16], sizes = [8, 16], strides = [1, 1]} : vector<16x96xf32> to vector<8x16xf32>
    %257 = vector.extract_strided_slice %235 {offsets = [0, 48], sizes = [8, 16], strides = [1, 1]} : vector<16x96xf32> to vector<8x16xf32>
    %258 = vector.extract_strided_slice %235 {offsets = [0, 80], sizes = [8, 16], strides = [1, 1]} : vector<16x96xf32> to vector<8x16xf32>
    %cst_95 = arith.constant dense<0.000000e+00> : vector<8x8xf32>
    %259 = tpu.matmul %256, %257, %cst_95 {dimension_numbers = #tpu.dot_dimension_numbers<[1], [1], [0], [0], [0, 0, 1, 0], [], []>} : vector<8x16xf32>, vector<8x16xf32>, vector<8x8xf32> -> vector<8x8xf32>
    %cst_96 = arith.constant 2.500000e-01 : f32
    %260 = vector.broadcast %cst_96 : f32 to vector<8x8xf32>
    %261 = arith.mulf %259, %260 : vector<8x8xf32>
    %262 = arith.addf %261, %42 : vector<8x8xf32>
    %cst_97 = arith.constant dense<0xFF800000> : vector<8xf32>
    %263 = vector.multi_reduction <maximumf>, %262, %cst_97 [1] : vector<8x8xf32> to vector<8xf32>
    %264 = vector.shape_cast %263 : vector<8xf32> to vector<8x1xf32>
    %265 = vector.broadcast %264 : vector<8x1xf32> to vector<8x8xf32>
    %266 = arith.subf %262, %265 : vector<8x8xf32>
    %267 = math.exp %266 : vector<8x8xf32>
    %cst_98 = arith.constant dense<0.000000e+00> : vector<8xf32>
    %268 = vector.multi_reduction <add>, %267, %cst_98 [1] : vector<8x8xf32> to vector<8xf32>
    %269 = vector.shape_cast %268 : vector<8xf32> to vector<8x1xf32>
    %270 = tpu.reciprocal %269 {approx = true} : vector<8x1xf32> -> vector<8x1xf32>
    %271 = vector.broadcast %270 : vector<8x1xf32> to vector<8x8xf32>
    %272 = arith.mulf %271, %44 : vector<8x8xf32>
    %273 = arith.mulf %267, %272 : vector<8x8xf32>
    %cst_99 = arith.constant dense<0.000000e+00> : vector<8x16xf32>
    %274 = tpu.matmul %273, %258, %cst_99 {dimension_numbers = #tpu.dot_dimension_numbers<[1], [0], [0], [1], [0, 0, 1, 1], [], []>} : vector<8x8xf32>, vector<8x16xf32>, vector<8x16xf32> -> vector<8x16xf32>
    %c0_100 = arith.constant 0 : index
    %c16_101 = arith.constant 16 : index
    %275 = vector.load %arg4[%c0_100, %c16_101] : memref<16x32xf32, #tpu.memory_space<vmem>>, vector<8x16xf32>
    tpu.vector_store %arg4[%c0_100, %c16_101], %274 {strides = array<i32>} : memref<16x32xf32, #tpu.memory_space<vmem>>, vector<8x16xf32>,
    %276 = vector.extract_strided_slice %235 {offsets = [8, 0], sizes = [8, 16], strides = [1, 1]} : vector<16x96xf32> to vector<8x16xf32>
    %277 = vector.extract_strided_slice %235 {offsets = [8, 32], sizes = [8, 16], strides = [1, 1]} : vector<16x96xf32> to vector<8x16xf32>
    %278 = vector.extract_strided_slice %235 {offsets = [8, 64], sizes = [8, 16], strides = [1, 1]} : vector<16x96xf32> to vector<8x16xf32>
    %cst_102 = arith.constant dense<0.000000e+00> : vector<8x8xf32>
    %279 = tpu.matmul %276, %277, %cst_102 {dimension_numbers = #tpu.dot_dimension_numbers<[1], [1], [0], [0], [0, 0, 1, 0], [], []>} : vector<8x16xf32>, vector<8x16xf32>, vector<8x8xf32> -> vector<8x8xf32>
    %cst_103 = arith.constant 2.500000e-01 : f32
    %280 = vector.broadcast %cst_103 : f32 to vector<8x8xf32>
    %281 = arith.mulf %279, %280 : vector<8x8xf32>
    %282 = arith.addf %281, %54 : vector<8x8xf32>
    %cst_104 = arith.constant dense<0xFF800000> : vector<8xf32>
    %283 = vector.multi_reduction <maximumf>, %282, %cst_104 [1] : vector<8x8xf32> to vector<8xf32>
    %284 = vector.shape_cast %283 : vector<8xf32> to vector<8x1xf32>
    %285 = vector.broadcast %284 : vector<8x1xf32> to vector<8x8xf32>
    %286 = arith.subf %282, %285 : vector<8x8xf32>
    %287 = math.exp %286 : vector<8x8xf32>
    %cst_105 = arith.constant dense<0.000000e+00> : vector<8xf32>
    %288 = vector.multi_reduction <add>, %287, %cst_105 [1] : vector<8x8xf32> to vector<8xf32>
    %289 = vector.shape_cast %288 : vector<8xf32> to vector<8x1xf32>
    %290 = tpu.reciprocal %289 {approx = true} : vector<8x1xf32> -> vector<8x1xf32>
    %291 = vector.broadcast %290 : vector<8x1xf32> to vector<8x8xf32>
    %292 = arith.mulf %291, %56 : vector<8x8xf32>
    %293 = arith.mulf %287, %292 : vector<8x8xf32>
    %cst_106 = arith.constant dense<0.000000e+00> : vector<8x16xf32>
    %294 = tpu.matmul %293, %278, %cst_106 {dimension_numbers = #tpu.dot_dimension_numbers<[1], [0], [0], [1], [0, 0, 1, 1], [], []>} : vector<8x8xf32>, vector<8x16xf32>, vector<8x16xf32> -> vector<8x16xf32>
    %c8_107 = arith.constant 8 : index
    %c0_108 = arith.constant 0 : index
    %295 = vector.load %arg4[%c8_107, %c0_108] : memref<16x32xf32, #tpu.memory_space<vmem>>, vector<8x16xf32>
    tpu.vector_store %arg4[%c8_107, %c0_108], %294 {strides = array<i32>} : memref<16x32xf32, #tpu.memory_space<vmem>>, vector<8x16xf32>,
    %296 = vector.extract_strided_slice %235 {offsets = [8, 16], sizes = [8, 16], strides = [1, 1]} : vector<16x96xf32> to vector<8x16xf32>
    %297 = vector.extract_strided_slice %235 {offsets = [8, 48], sizes = [8, 16], strides = [1, 1]} : vector<16x96xf32> to vector<8x16xf32>
    %298 = vector.extract_strided_slice %235 {offsets = [8, 80], sizes = [8, 16], strides = [1, 1]} : vector<16x96xf32> to vector<8x16xf32>
    %cst_109 = arith.constant dense<0.000000e+00> : vector<8x8xf32>
    %299 = tpu.matmul %296, %297, %cst_109 {dimension_numbers = #tpu.dot_dimension_numbers<[1], [1], [0], [0], [0, 0, 1, 0], [], []>} : vector<8x16xf32>, vector<8x16xf32>, vector<8x8xf32> -> vector<8x8xf32>
    %cst_110 = arith.constant 2.500000e-01 : f32
    %300 = vector.broadcast %cst_110 : f32 to vector<8x8xf32>
    %301 = arith.mulf %299, %300 : vector<8x8xf32>
    %302 = arith.addf %301, %54 : vector<8x8xf32>
    %cst_111 = arith.constant dense<0xFF800000> : vector<8xf32>
    %303 = vector.multi_reduction <maximumf>, %302, %cst_111 [1] : vector<8x8xf32> to vector<8xf32>
    %304 = vector.shape_cast %303 : vector<8xf32> to vector<8x1xf32>
    %305 = vector.broadcast %304 : vector<8x1xf32> to vector<8x8xf32>
    %306 = arith.subf %302, %305 : vector<8x8xf32>
    %307 = math.exp %306 : vector<8x8xf32>
    %cst_112 = arith.constant dense<0.000000e+00> : vector<8xf32>
    %308 = vector.multi_reduction <add>, %307, %cst_112 [1] : vector<8x8xf32> to vector<8xf32>
    %309 = vector.shape_cast %308 : vector<8xf32> to vector<8x1xf32>
    %310 = tpu.reciprocal %309 {approx = true} : vector<8x1xf32> -> vector<8x1xf32>
    %311 = vector.broadcast %310 : vector<8x1xf32> to vector<8x8xf32>
    %312 = arith.mulf %311, %56 : vector<8x8xf32>
    %313 = arith.mulf %307, %312 : vector<8x8xf32>
    %cst_113 = arith.constant dense<0.000000e+00> : vector<8x16xf32>
    %314 = tpu.matmul %313, %298, %cst_113 {dimension_numbers = #tpu.dot_dimension_numbers<[1], [0], [0], [1], [0, 0, 1, 1], [], []>} : vector<8x8xf32>, vector<8x16xf32>, vector<8x16xf32> -> vector<8x16xf32>
    %c8_114 = arith.constant 8 : index
    %c16_115 = arith.constant 16 : index
    %315 = vector.load %arg4[%c8_114, %c16_115] : memref<16x32xf32, #tpu.memory_space<vmem>>, vector<8x16xf32>
    tpu.vector_store %arg4[%c8_114, %c16_115], %314 {strides = array<i32>} : memref<16x32xf32, #tpu.memory_space<vmem>>, vector<8x16xf32>,
    %c0_116 = arith.constant 0 : index
    %c0_117 = arith.constant 0 : index
    %316 = vector.load %arg4[%c0_116, %c0_117] : memref<16x32xf32, #tpu.memory_space<vmem>>, vector<16x32xf32>
    %cst_118 = arith.constant dense<0.000000e+00> : vector<16x32xf32>
    %317 = tpu.matmul %316, %222, %cst_118 {dimension_numbers = #tpu.dot_dimension_numbers<[1], [0], [0], [1], [0, 0, 1, 1], [], []>} : vector<16x32xf32>, vector<32x32xf32>, vector<16x32xf32> -> vector<16x32xf32>
    %318 = vector.broadcast %226 : vector<1x32xf32> to vector<16x32xf32>
    %319 = arith.addf %317, %318 : vector<16x32xf32>
    %320 = arith.addf %319, %220 : vector<16x32xf32>
    %cst_119 = arith.constant dense<0.000000e+00> : vector<16xf32>
    %321 = vector.multi_reduction <add>, %320, %cst_119 [1] : vector<16x32xf32> to vector<16xf32>
    %322 = vector.shape_cast %321 : vector<16xf32> to vector<16x1xf32>
    %cst_120 = arith.constant 3.200000e+01 : f32
    %323 = vector.broadcast %cst_120 : f32 to vector<16x1xf32>
    %324 = arith.divf %322, %323 : vector<16x1xf32>
    %325 = vector.broadcast %324 : vector<16x1xf32> to vector<16x32xf32>
    %326 = arith.subf %320, %325 : vector<16x32xf32>
    %327 = arith.mulf %326, %326 : vector<16x32xf32>
    %cst_121 = arith.constant dense<0.000000e+00> : vector<16xf32>
    %328 = vector.multi_reduction <add>, %327, %cst_121 [1] : vector<16x32xf32> to vector<16xf32>
    %329 = vector.shape_cast %328 : vector<16xf32> to vector<16x1xf32>
    %cst_122 = arith.constant 3.200000e+01 : f32
    %330 = vector.broadcast %cst_122 : f32 to vector<16x1xf32>
    %331 = arith.divf %329, %330 : vector<16x1xf32>
    %332 = vector.broadcast %324 : vector<16x1xf32> to vector<16x32xf32>
    %333 = arith.subf %320, %332 : vector<16x32xf32>
    %334 = vector.broadcast %227 : vector<1x32xf32> to vector<16x32xf32>
    %335 = arith.mulf %334, %333 : vector<16x32xf32>
    %cst_123 = arith.constant 9.99999996E-13 : f32
    %336 = vector.broadcast %cst_123 : f32 to vector<16x1xf32>
    %337 = arith.addf %331, %336 : vector<16x1xf32>
    %338 = math.rsqrt %337 : vector<16x1xf32>
    %339 = vector.broadcast %338 : vector<16x1xf32> to vector<16x32xf32>
    %340 = arith.mulf %335, %339 : vector<16x32xf32>
    %341 = vector.broadcast %228 : vector<1x32xf32> to vector<16x32xf32>
    %342 = arith.addf %340, %341 : vector<16x32xf32>
    %cst_124 = arith.constant dense<0.000000e+00> : vector<16x128xf32>
    %343 = tpu.matmul %342, %223, %cst_124 {dimension_numbers = #tpu.dot_dimension_numbers<[1], [0], [0], [1], [0, 0, 1, 1], [], []>} : vector<16x32xf32>, vector<32x128xf32>, vector<16x128xf32> -> vector<16x128xf32>
    %344 = vector.broadcast %229 : vector<1x128xf32> to vector<16x128xf32>
    %345 = arith.addf %343, %344 : vector<16x128xf32>
    %346 = arith.mulf %345, %345 : vector<16x128xf32>
    %347 = arith.mulf %345, %346 : vector<16x128xf32>
    %cst_125 = arith.constant 4.471500e-02 : f32
    %348 = vector.broadcast %cst_125 : f32 to vector<16x128xf32>
    %349 = arith.mulf %348, %347 : vector<16x128xf32>
    %350 = arith.addf %345, %349 : vector<16x128xf32>
    %cst_126 = arith.constant 0.797884583 : f32
    %351 = vector.broadcast %cst_126 : f32 to vector<16x128xf32>
    %352 = arith.mulf %351, %350 : vector<16x128xf32>
    %353 = math.tanh %352 : vector<16x128xf32>
    %cst_127 = arith.constant 1.000000e+00 : f32
    %354 = vector.broadcast %cst_127 : f32 to vector<16x128xf32>
    %355 = arith.addf %354, %353 : vector<16x128xf32>
    %cst_128 = arith.constant 5.000000e-01 : f32
    %356 = vector.broadcast %cst_128 : f32 to vector<16x128xf32>
    %357 = arith.mulf %356, %355 : vector<16x128xf32>
    %358 = arith.mulf %345, %357 : vector<16x128xf32>
    %cst_129 = arith.constant dense<0.000000e+00> : vector<16x32xf32>
    %359 = tpu.matmul %358, %224, %cst_129 {dimension_numbers = #tpu.dot_dimension_numbers<[1], [0], [0], [1], [0, 0, 1, 1], [], []>} : vector<16x128xf32>, vector<128x32xf32>, vector<16x32xf32> -> vector<16x32xf32>
    %360 = vector.broadcast %230 : vector<1x32xf32> to vector<16x32xf32>
    %361 = arith.addf %359, %360 : vector<16x32xf32>
    %362 = arith.addf %361, %342 : vector<16x32xf32>
    %cst_130 = arith.constant dense<0.000000e+00> : vector<16xf32>
    %363 = vector.multi_reduction <add>, %362, %cst_130 [1] : vector<16x32xf32> to vector<16xf32>
    %364 = vector.shape_cast %363 : vector<16xf32> to vector<16x1xf32>
    %cst_131 = arith.constant 3.200000e+01 : f32
    %365 = vector.broadcast %cst_131 : f32 to vector<16x1xf32>
    %366 = arith.divf %364, %365 : vector<16x1xf32>
    %367 = vector.broadcast %366 : vector<16x1xf32> to vector<16x32xf32>
    %368 = arith.subf %362, %367 : vector<16x32xf32>
    %369 = arith.mulf %368, %368 : vector<16x32xf32>
    %cst_132 = arith.constant dense<0.000000e+00> : vector<16xf32>
    %370 = vector.multi_reduction <add>, %369, %cst_132 [1] : vector<16x32xf32> to vector<16xf32>
    %371 = vector.shape_cast %370 : vector<16xf32> to vector<16x1xf32>
    %cst_133 = arith.constant 3.200000e+01 : f32
    %372 = vector.broadcast %cst_133 : f32 to vector<16x1xf32>
    %373 = arith.divf %371, %372 : vector<16x1xf32>
    %374 = vector.broadcast %366 : vector<16x1xf32> to vector<16x32xf32>
    %375 = arith.subf %362, %374 : vector<16x32xf32>
    %376 = vector.broadcast %231 : vector<1x32xf32> to vector<16x32xf32>
    %377 = arith.mulf %376, %375 : vector<16x32xf32>
    %cst_134 = arith.constant 9.99999996E-13 : f32
    %378 = vector.broadcast %cst_134 : f32 to vector<16x1xf32>
    %379 = arith.addf %373, %378 : vector<16x1xf32>
    %380 = math.rsqrt %379 : vector<16x1xf32>
    %381 = vector.broadcast %380 : vector<16x1xf32> to vector<16x32xf32>
    %382 = arith.mulf %377, %381 : vector<16x32xf32>
    %383 = vector.broadcast %232 : vector<1x32xf32> to vector<16x32xf32>
    %384 = arith.addf %382, %383 : vector<16x32xf32>
    %c0_135 = arith.constant 0 : index
    %c0_136 = arith.constant 0 : index
    %385 = vector.load %arg3[%c0_135, %c0_136] : memref<16x32xf32, #tpu.memory_space<vmem>>, vector<16x32xf32>
    tpu.vector_store %arg3[%c0_135, %c0_136], %384 {strides = array<i32>} : memref<16x32xf32, #tpu.memory_space<vmem>>, vector<16x32xf32>,
    return
  }
}

</mosaic_0001>

<llo_original>
// kernel: tpu_custom_call.1
$region0: #{tpu_custom_call.1}
  #allocation0 [shape = 'u32[]', space=smem, size = 0x4, offset = 0x4, fixed_abs, tag = 'smem constant byte address 0x4 - core index']
  #allocation1 [shape = 'u32[144,128]{1,0:T(1,128)}', space=vmem, size = 0x12000, scoped, tag = 'internal scratch']
  #allocation2 [shape = 'f32[16,32]{1,0:T(8,128)}', space=vmem, size = 0x2000, scoped, tag = 'scratch operand']
  %s0 = inlined_call_operand.hbm [shape: f32[16,32], index: 0, kind: input, shape index: {}]
  %s1 = inlined_call_operand.hbm [shape: f32[4,8], index: 1, kind: input, shape index: {}]
  %s2 = inlined_call_operand.hbm [shape: f32[472,128], index: 2, kind: input, shape index: {}]
  %s3 = inlined_call_operand.hbm [shape: f32[16,32], index: 3, kind: output, shape index: {}]
  %s4 = sld [smem:[#allocation0]]
  $region34: #{tpu_custom_call.1} parent=0
    _
  %s6 = ssub.s32 1, %s4
  %s7 = scalar_select 0, %s6, %s4
  $region1: #{tpu_custom_call.1} parent=0
    #allocation3 [shape = 'u8[8192]{0}', space=vmem, size = 0x2000, scoped, tag = 'input window, operand 0, single buffered']
    #allocation4 [shape = 's32[1]{0}', space=sflag, size = 0x4, scoped, tag = 'scoped memory for tpu_custom_call.1']
    #allocation5 [shape = 's32[1]{0}', space=sflag, size = 0x4, scoped, tag = 'scoped memory for tpu_custom_call.1']
    #allocation6 [shape = 'u8[2048]{0}', space=vmem, size = 0x800, scoped, tag = 'input window, operand 1, single buffered']
    #allocation7 [shape = 's32[1]{0}', space=sflag, size = 0x4, scoped, tag = 'scoped memory for tpu_custom_call.1']
    #allocation8 [shape = 'u8[241664]{0}', space=vmem, size = 0x3b000, scoped, tag = 'input window, operand 2, single buffered']
    #allocation9 [shape = 'u8[8192]{0}', space=vmem, size = 0x2000, scoped, tag = 'output window, operand 0, single buffered']
    %8 = vsyncpa [#allocation4], 0
    %9 = vsyncpa [#allocation7], 0
    %10 = vsyncpa [#allocation5], 0
    // Predicated region
    $region2: #{tpu_custom_call.1} parent=1 // pred_check
      _
    $region3: #{tpu_custom_call.1} parent=1 // pred_check_branch
      %12 = sbr.rel (0) target = $region5
    $region4: #{tpu_custom_call.1} parent=1 // pred_region
      %s14 = ssub.s32 256, 256
      %15 = vsyncadd [#allocation4], %s14
      %s16 = sshll.u32 [#allocation3], 4
      %s17 = int_to_ptr.vmem [resolvable:$true] %s16
      %22 = dma.hbm_to_vmem [thread:$0]  %s0, 256, %s17, [#allocation4], 128, 128, 8
    $region5: #{tpu_custom_call.1} parent=1 // pred_fallthru
      _
    // Predicated region
    $region6: #{tpu_custom_call.1} parent=1 // pred_check
      _
    $region7: #{tpu_custom_call.1} parent=1 // pred_check_branch
      %24 = sbr.rel (0) target = $region9
    $region8: #{tpu_custom_call.1} parent=1 // pred_region
      %s26 = ssub.s32 64, 64
      %27 = vsyncadd [#allocation7], %s26
      %s29 = sshll.u32 [#allocation6], 4
      %s30 = int_to_ptr.vmem [resolvable:$true] %s29
      %32 = dma.hbm_to_vmem [thread:$0]  %s1, 64, %s30, [#allocation7]
    $region9: #{tpu_custom_call.1} parent=1 // pred_fallthru
      _
    // Predicated region
    $region10: #{tpu_custom_call.1} parent=1 // pred_check
      _
    $region11: #{tpu_custom_call.1} parent=1 // pred_check_branch
      %34 = sbr.rel (0) target = $region13
    $region12: #{tpu_custom_call.1} parent=1 // pred_region
      %s36 = ssub.s32 7552, 7552
      %37 = vsyncadd [#allocation7], %s36
      %s38 = sshll.u32 [#allocation8], 4
      %s39 = int_to_ptr.vmem [resolvable:$true] %s38
      %44 = dma.hbm_to_vmem [thread:$0]  %s2, 7552, %s39, [#allocation7], 128, 128, 8
    $region13: #{tpu_custom_call.1} parent=1 // pred_fallthru
      _
    // Predicated region
    $region14: #{tpu_custom_call.1} parent=1 // pred_check
      _
    $region15: #{tpu_custom_call.1} parent=1 // pred_check_branch
      %46 = sbr.rel (0) target = $region17
    $region16: #{tpu_custom_call.1} parent=1 // pred_region
      %47 = dma.done [#allocation4], 256
    $region17: #{tpu_custom_call.1} parent=1 // pred_fallthru
      _
    // Predicated region
    $region18: #{tpu_custom_call.1} parent=1 // pred_check
      _
    $region19: #{tpu_custom_call.1} parent=1 // pred_check_branch
      %49 = sbr.rel (0) target = $region21
    $region20: #{tpu_custom_call.1} parent=1 // pred_region
      %50 = dma.done [#allocation7], 64
    $region21: #{tpu_custom_call.1} parent=1 // pred_fallthru
      _
    // Predicated region
    $region22: #{tpu_custom_call.1} parent=1 // pred_check
      _
    $region23: #{tpu_custom_call.1} parent=1 // pred_check_branch
      %52 = sbr.rel (0) target = $region25
    $region24: #{tpu_custom_call.1} parent=1 // pred_region
      %53 = dma.done [#allocation7], 7552
    $region25: #{tpu_custom_call.1} parent=1 // pred_fallthru
      _
    %v54 = vld [vmem:[#allocation3] sm:$0xff]
    %v55 = vld [vmem:[#allocation3 + $0x8] sm:$0xff]
    %v56 = vld [vmem:[#allocation8] sm:$0x1]
    %v57 = vld [vmem:[#allocation8 + $0x1] sm:$0x1]
    %vm58 = vcmask 261120
    %v59 = vsel %vm58, %v54, 0.0
    %60 = vadd.xlane.f32.xlu0 %v59
    %v61 = vpop.xlane.xlu0 %60
    %v62 = vsel %vm58, %v55, 0.0
    %63 = vadd.xlane.f32.xlu0 %v62
    %v64 = vpop.xlane.xlu0 %63
    %v65 = vrcp.pop 32.0
    %v66 = vmul.f32 %v61, %v65
    %v67 = vmul.f32 %v64, %v65
    %v68 = vsub.f32 %v54, %v66
    %v69 = vsub.f32 %v55, %v67
    %v70 = vmul.f32 %v68, %v68
    %v71 = vmul.f32 %v69, %v69
    %v72 = vsel %vm58, %v70, 0.0
    %73 = vadd.xlane.f32.xlu0 %v72
    %v74 = vpop.xlane.xlu0 %73
    %v75 = vsel %vm58, %v71, 0.0
    %76 = vadd.xlane.f32.xlu0 %v75
    %v77 = vpop.xlane.xlu0 %76
    %v78 = vmul.f32 %v74, %v65
    %v79 = vmul.f32 %v77, %v65
    %v80 = vlaneseq
    %v81 = vshrl.u32 %v80, 7
    %v82 = vsub.s32 0, %v81
    %v83 = vrot.slane %v56, %v82
    %v84 = vmul.f32 %v83, %v68
    %v85 = vmul.f32 %v83, %v69
    %v86 = vadd.f32 %v78, 1e-12
    %v87 = vadd.f32 %v79, 1e-12
    %v88 = vrsqrt.pop %v86
    %v89 = vrsqrt.pop %v87
    %v90 = vmul.f32 %v84, %v88
    %v91 = vmul.f32 %v85, %v89
    %v92 = vlaneseq
    %v93 = vshrl.u32 %v92, 7
    %v94 = vsub.s32 0, %v93
    %v95 = vrot.slane %v57, %v94
    %v96 = vadd.f32 %v90, %v95
    %v97 = vadd.f32 %v91, %v95
    %v98 = vld [vmem:[#allocation6] sm:$0xf]
    %v99 = vlaneseq
    %v100 = vshrl.u32 %v99, 7
    %v101 = vlaneseq
    %v102 = vand.u32 %v101, 127
    %v103 = vadd.s32 %v100, 1
    %vm104 = vcmp.gt.s32.totalorder %v102, %v103
    %v105 = vsel %vm104, 1, 0
    %v106 = vcvt.s32.f32 %v105
    %v107 = vmul.f32 %v98, 0.2
    %v108 = vlaneseq
    %v109 = vshrl.u32 %v108, 7
    %v110 = vsub.s32 0, %v109
    %v111 = vrot.slane %v98, %v110
    %v112 = vmul.f32 %v111, %v106
    %v113 = vsub.f32 1.0, %v112
    %v114 = vmul.f32 %v113, -10000.0
    %v115 = vlaneseq
    %v116 = vshrl.u32 %v115, 7
    %v117 = vsub.s32 2, %v116
    %v118 = vrot.slane %v107, %v117
    %v119 = vmul.f32 %v118, %v106
    %v120 = vlaneseq
    %v121 = vshrl.u32 %v120, 7
    %v122 = vsub.s32 1, %v121
    %v123 = vrot.slane %v98, %v122
    %v124 = vmul.f32 %v123, %v106
    %v125 = vsub.f32 1.0, %v124
    %v126 = vmul.f32 %v125, -10000.0
    %v127 = vlaneseq
    %v128 = vshrl.u32 %v127, 7
    %v129 = vsub.s32 3, %v128
    %v130 = vrot.slane %v107, %v129
    %v131 = vmul.f32 %v130, %v106
    %v132 = vld [vmem:[#allocation8 + $0x8] sm:$0xff]
    %v133 = vld [vmem:[#allocation8 + $0x10] sm:$0xff]
    %v134 = vld [vmem:[#allocation8 + $0x18] sm:$0xff]
    %v135 = vld [vmem:[#allocation8 + $0x20] sm:$0xff]
    %v136 = vld [vmem:[#allocation8 + $0x28] sm:$0xff]
    %v137 = vld [vmem:[#allocation8 + $0x30] sm:$0xff]
    %v138 = vld [vmem:[#allocation8 + $0x38] sm:$0xff]
    %v139 = vld [vmem:[#allocation8 + $0x40] sm:$0xff]
    %v140 = vld [vmem:[#allocation8 + $0x48] sm:$0xff]
    %v141 = vld [vmem:[#allocation8 + $0x50] sm:$0xff]
    %v142 = vld [vmem:[#allocation8 + $0x58] sm:$0xff]
    %v143 = vld [vmem:[#allocation8 + $0x60] sm:$0xff]
    %v144 = vld [vmem:[#allocation8 + $0x68] sm:$0xff]
    %v145 = vld [vmem:[#allocation8 + $0x70] sm:$0xff]
    %v146 = vld [vmem:[#allocation8 + $0x78] sm:$0xff]
    %v147 = vld [vmem:[#allocation8 + $0x80] sm:$0xff]
    %v148 = vld [vmem:[#allocation8 + $0x88] sm:$0xff]
    %v149 = vld [vmem:[#allocation8 + $0x90] sm:$0xff]
    %v150 = vld [vmem:[#allocation8 + $0x98] sm:$0xff]
    %v151 = vld [vmem:[#allocation8 + $0xa0] sm:$0xff]
    %v152 = vld [vmem:[#allocation8 + $0xa8] sm:$0xff]
    %v153 = vld [vmem:[#allocation8 + $0xb0] sm:$0xff]
    %v154 = vld [vmem:[#allocation8 + $0xb8] sm:$0xff]
    %v155 = vld [vmem:[#allocation8 + $0xc0] sm:$0xff]
    %v156 = vld [vmem:[#allocation8 + $0xc8] sm:$0xff]
    %v157 = vld [vmem:[#allocation8 + $0xd0] sm:$0xff]
    %v158 = vld [vmem:[#allocation8 + $0xd8] sm:$0xff]
    %v159 = vld [vmem:[#allocation8 + $0xe0] sm:$0xff]
    %v160 = vld [vmem:[#allocation8 + $0xe8] sm:$0x1]
    %v161 = vld [vmem:[#allocation8 + $0xe9] sm:$0x1]
    %v162 = vld [vmem:[#allocation8 + $0xea] sm:$0x1]
    %v163 = vld [vmem:[#allocation8 + $0xeb] sm:$0x1]
    %v164 = vld [vmem:[#allocation8 + $0xec] sm:$0x1]
    %v165 = vld [vmem:[#allocation8 + $0xed] sm:$0x1]
    %v166 = vld [vmem:[#allocation8 + $0xee] sm:$0x1]
    %v167 = vld [vmem:[#allocation8 + $0xef] sm:$0x1]
    %v168 = vlaneseq
    %v169 = vshrl.u32 %v168, 7
    %v170 = vsub.s32 0, %v169
    %v171 = vrot.slane %v160, %v170
    %v173 = vsel %vm58, %v96, 0
    %v176 = vsel %vm58, %v97, 0
    %178 = vmatprep.subr.mxu0 0.0
    %179 = vmatpush1.msra.mxu0 0.0
    %180 = vmatprep.subr.mxu0 0.0
    %181 = vmatpush1.msra.mxu0 0.0
    %182 = vmatprep.subr.mxu0 0.0
    %183 = vmatpush1.msra.mxu0 0.0
    %184 = vmatprep.subr.mxu0 0.0
    %185 = vmatpush1.msra.mxu0 0.0
    %186 = vmatprep.subr.mxu0 0.0
    %187 = vmatpush1.msra.mxu0 0.0
    %188 = vmatprep.subr.mxu0 0.0
    %189 = vmatpush1.msra.mxu0 0.0
    %190 = vmatprep.subr.mxu0 0.0
    %191 = vmatpush1.msra.mxu0 0.0
    %192 = vmatprep.subr.mxu0 0.0
    %193 = vmatpush1.msra.mxu0 0.0
    %194 = vmatprep.subr.mxu0 0.0
    %195 = vmatpush1.msra.mxu0 0.0
    %196 = vmatprep.subr.mxu0 0.0
    %197 = vmatpush1.msra.mxu0 0.0
    %198 = vmatprep.subr.mxu0 0.0
    %199 = vmatpush1.msra.mxu0 0.0
    %200 = vmatprep.subr.mxu0 0.0
    %201 = vmatpush1.msra.mxu0 0.0
    %202 = vmatprep.subr.mxu0 0.0
    %203 = vmatpush1.msra.mxu0 %v135
    %204 = vmatprep.subr.mxu0 0.0
    %205 = vmatpush1.msra.mxu0 %v134
    %206 = vmatprep.subr.mxu0 0.0
    %207 = vmatpush1.msra.mxu0 %v133
    %208 = vmatprep.subr.mxu0 0.0
    %209 = vmatpush1.msra.mxu0 %v132
    %210 = vmatprep.subr.mxu0 0.0
    %211 = vmatpush2.msra.mxu0 0.0
    %212 = vmatprep.subr.mxu0 0.0
    %213 = vmatpush2.msra.mxu0 0.0
    %214 = vmatprep.subr.mxu0 0.0
    %215 = vmatpush2.msra.mxu0 0.0
    %216 = vmatprep.subr.mxu0 0.0
    %217 = vmatpush2.msra.mxu0 0.0
    %218 = vmatprep.subr.mxu0 0.0
    %219 = vmatpush2.msra.mxu0 0.0
    %220 = vmatprep.subr.mxu0 0.0
    %221 = vmatpush2.msra.mxu0 0.0
    %222 = vmatprep.subr.mxu0 0.0
    %223 = vmatpush2.msra.mxu0 0.0
    %224 = vmatprep.subr.mxu0 0.0
    %225 = vmatpush2.msra.mxu0 0.0
    %226 = vmatprep.subr.mxu0 0.0
    %227 = vmatpush2.msra.mxu0 0.0
    %228 = vmatprep.subr.mxu0 0.0
    %229 = vmatpush2.msra.mxu0 0.0
    %230 = vmatprep.subr.mxu0 0.0
    %231 = vmatpush2.msra.mxu0 0.0
    %232 = vmatprep.subr.mxu0 0.0
    %233 = vmatpush2.msra.mxu0 0.0
    %234 = vmatprep.subr.mxu0 0.0
    %235 = vmatpush2.msra.mxu0 0.0
    %236 = vmatprep.subr.mxu0 0.0
    %237 = vmatpush2.msra.mxu0 0.0
    %238 = vmatprep.subr.mxu0 0.0
    %239 = vmatpush2.msra.mxu0 0.0
    %240 = vmatprep.subr.mxu0 0.0
    %241 = vmatpush2.msra.mxu0 0.0
    %242 = vmatprep.mubr.f32.mxu0 0.0
    %243 = vmatmul.mubr.f32.gmra.mxu0 %v173
    %v244 = vpop.f32.mrf.mxu0
    %v245 = vadd.f32 %v171, %v244
    %v246 = vpop.f32.mrf.mxu0
    %247 = vmatprep.mubr.f32.mxu0 0.0
    %248 = vmatmul.mubr.f32.gmra.mxu0 %v176
    %v249 = vpop.f32.mrf.mxu0
    %v250 = vadd.f32 %v171, %v249
    %v251 = vpop.f32.mrf.mxu0
    %252 = vdwg.mxu0
    %254 = vrot.lane.b32.xlu0 %v245, 96
    %v255 = vpop.permute.xlu0 %254
    %vm256 = vcmask 130048
    %v257 = vsel %vm256, %v245, 0
    %v259 = vsel %vm256, %v255, 0
    %261 = vmatprep.subr.mxu0 0.0
    %262 = vmatpush1.xpose.msra.mxu0 0.0
    %263 = vmatprep.subr.mxu0 0.0
    %264 = vmatpush1.xpose.msra.mxu0 0.0
    %265 = vmatprep.subr.mxu0 0.0
    %266 = vmatpush1.xpose.msra.mxu0 0.0
    %267 = vmatprep.subr.mxu0 0.0
    %268 = vmatpush1.xpose.msra.mxu0 0.0
    %269 = vmatprep.subr.mxu0 0.0
    %270 = vmatpush1.xpose.msra.mxu0 0.0
    %271 = vmatprep.subr.mxu0 0.0
    %272 = vmatpush1.xpose.msra.mxu0 0.0
    %273 = vmatprep.subr.mxu0 0.0
    %274 = vmatpush1.xpose.msra.mxu0 0.0
    %275 = vmatprep.subr.mxu0 0.0
    %276 = vmatpush1.xpose.msra.mxu0 0.0
    %277 = vmatprep.subr.mxu0 0.0
    %278 = vmatpush1.xpose.msra.mxu0 0.0
    %279 = vmatprep.subr.mxu0 0.0
    %280 = vmatpush1.xpose.msra.mxu0 0.0
    %281 = vmatprep.subr.mxu0 0.0
    %282 = vmatpush1.xpose.msra.mxu0 0.0
    %283 = vmatprep.subr.mxu0 0.0
    %284 = vmatpush1.xpose.msra.mxu0 0.0
    %285 = vmatprep.subr.mxu0 0.0
    %286 = vmatpush1.xpose.msra.mxu0 0.0
    %287 = vmatprep.subr.mxu0 0.0
    %288 = vmatpush1.xpose.msra.mxu0 0.0
    %289 = vmatprep.subr.mxu0 0.0
    %290 = vmatpush1.xpose.msra.mxu0 0.0
    %291 = vmatprep.subr.mxu0 0.0
    %292 = vmatpush1.xpose.msra.mxu0 %v259
    %293 = vmatprep.subr.mxu0 0.0
    %294 = vmatpush2.xpose.msra.mxu0 0.0
    %295 = vmatprep.subr.mxu0 0.0
    %296 = vmatpush2.xpose.msra.mxu0 0.0
    %297 = vmatprep.subr.mxu0 0.0
    %298 = vmatpush2.xpose.msra.mxu0 0.0
    %299 = vmatprep.subr.mxu0 0.0
    %300 = vmatpush2.xpose.msra.mxu0 0.0
    %301 = vmatprep.subr.mxu0 0.0
    %302 = vmatpush2.xpose.msra.mxu0 0.0
    %303 = vmatprep.subr.mxu0 0.0
    %304 = vmatpush2.xpose.msra.mxu0 0.0
    %305 = vmatprep.subr.mxu0 0.0
    %306 = vmatpush2.xpose.msra.mxu0 0.0
    %307 = vmatprep.subr.mxu0 0.0
    %308 = vmatpush2.xpose.msra.mxu0 0.0
    %309 = vmatprep.subr.mxu0 0.0
    %310 = vmatpush2.xpose.msra.mxu0 0.0
    %311 = vmatprep.subr.mxu0 0.0
    %312 = vmatpush2.xpose.msra.mxu0 0.0
    %313 = vmatprep.subr.mxu0 0.0
    %314 = vmatpush2.xpose.msra.mxu0 0.0
    %315 = vmatprep.subr.mxu0 0.0
    %316 = vmatpush2.xpose.msra.mxu0 0.0
    %317 = vmatprep.subr.mxu0 0.0
    %318 = vmatpush2.xpose.msra.mxu0 0.0
    %319 = vmatprep.subr.mxu0 0.0
    %320 = vmatpush2.xpose.msra.mxu0 0.0
    %321 = vmatprep.subr.mxu0 0.0
    %322 = vmatpush2.xpose.msra.mxu0 0.0
    %323 = vmatprep.subr.mxu0 0.0
    %324 = vmatpush2.xpose.msra.mxu0 0.0
    %325 = vmatprep.mubr.f32.mxu0 0.0
    %326 = vmatmul.mubr.f32.gmra.mxu0 %v257
    %v327 = vpop.f32.mrf.mxu0
    %v328 = vadd.f32 0.0, %v327
    %v329 = vpop.f32.mrf.mxu0
    %330 = vdwg.mxu0
    %v331 = vmul.f32 %v328, 0.25
    %v332 = vadd.f32 %v331, %v114
    %vm333 = vcmask 64512
    %v334 = vsel %vm333, %v332, -inf
    %335 = vmax.xlane.f32.xlu0 %v334
    %v336 = vpop.xlane.xlu0 %335
    %v337 = vsub.f32 %v332, %v336
    %v338 = vmul.f32 %v337, 1.442695
    %v339 = vpow.pop %v338
    %v340 = vsel %vm333, %v339, 0.0
    %341 = vadd.xlane.f32.xlu0 %v340
    %v342 = vpop.xlane.xlu0 %341
    %v343 = vrcp.pop %v342
    %v344 = vmul.f32 %v343, %v119
    %v345 = vmul.f32 %v339, %v344
    %346 = vrot.lane.b32.xlu0 %v245, 64
    %v347 = vpop.permute.xlu0 %346
    %v350 = vsel %vm333, %v345, 0
    %352 = vmatprep.subr.mxu0 0.0
    %353 = vmatpush1.msra.mxu0 0.0
    %354 = vmatprep.subr.mxu0 0.0
    %355 = vmatpush1.msra.mxu0 0.0
    %356 = vmatprep.subr.mxu0 0.0
    %357 = vmatpush1.msra.mxu0 0.0
    %358 = vmatprep.subr.mxu0 0.0
    %359 = vmatpush1.msra.mxu0 0.0
    %360 = vmatprep.subr.mxu0 0.0
    %361 = vmatpush1.msra.mxu0 0.0
    %362 = vmatprep.subr.mxu0 0.0
    %363 = vmatpush1.msra.mxu0 0.0
    %364 = vmatprep.subr.mxu0 0.0
    %365 = vmatpush1.msra.mxu0 0.0
    %366 = vmatprep.subr.mxu0 0.0
    %367 = vmatpush1.msra.mxu0 0.0
    %368 = vmatprep.subr.mxu0 0.0
    %369 = vmatpush1.msra.mxu0 0.0
    %370 = vmatprep.subr.mxu0 0.0
    %371 = vmatpush1.msra.mxu0 0.0
    %372 = vmatprep.subr.mxu0 0.0
    %373 = vmatpush1.msra.mxu0 0.0
    %374 = vmatprep.subr.mxu0 0.0
    %375 = vmatpush1.msra.mxu0 0.0
    %376 = vmatprep.subr.mxu0 0.0
    %377 = vmatpush1.msra.mxu0 0.0
    %378 = vmatprep.subr.mxu0 0.0
    %379 = vmatpush1.msra.mxu0 0.0
    %380 = vmatprep.subr.mxu0 0.0
    %381 = vmatpush1.msra.mxu0 0.0
    %382 = vmatprep.subr.mxu0 0.0
    %383 = vmatpush1.msra.mxu0 %v347
    %384 = vmatprep.subr.mxu0 0.0
    %385 = vmatpush2.msra.mxu0 0.0
    %386 = vmatprep.subr.mxu0 0.0
    %387 = vmatpush2.msra.mxu0 0.0
    %388 = vmatprep.subr.mxu0 0.0
    %389 = vmatpush2.msra.mxu0 0.0
    %390 = vmatprep.subr.mxu0 0.0
    %391 = vmatpush2.msra.mxu0 0.0
    %392 = vmatprep.subr.mxu0 0.0
    %393 = vmatpush2.msra.mxu0 0.0
    %394 = vmatprep.subr.mxu0 0.0
    %395 = vmatpush2.msra.mxu0 0.0
    %396 = vmatprep.subr.mxu0 0.0
    %397 = vmatpush2.msra.mxu0 0.0
    %398 = vmatprep.subr.mxu0 0.0
    %399 = vmatpush2.msra.mxu0 0.0
    %400 = vmatprep.subr.mxu0 0.0
    %401 = vmatpush2.msra.mxu0 0.0
    %402 = vmatprep.subr.mxu0 0.0
    %403 = vmatpush2.msra.mxu0 0.0
    %404 = vmatprep.subr.mxu0 0.0
    %405 = vmatpush2.msra.mxu0 0.0
    %406 = vmatprep.subr.mxu0 0.0
    %407 = vmatpush2.msra.mxu0 0.0
    %408 = vmatprep.subr.mxu0 0.0
    %409 = vmatpush2.msra.mxu0 0.0
    %410 = vmatprep.subr.mxu0 0.0
    %411 = vmatpush2.msra.mxu0 0.0
    %412 = vmatprep.subr.mxu0 0.0
    %413 = vmatpush2.msra.mxu0 0.0
    %414 = vmatprep.subr.mxu0 0.0
    %415 = vmatpush2.msra.mxu0 0.0
    %416 = vmatprep.mubr.f32.mxu0 0.0
    %417 = vmatmul.mubr.f32.gmra.mxu0 %v350
    %v418 = vpop.f32.mrf.mxu0
    %v419 = vadd.f32 0.0, %v418
    %v420 = vpop.f32.mrf.mxu0
    %421 = vdwg.mxu0
    %422 = vst.msk [vmem:[#allocation2] sm:$0xff] %vm256, %v419
    %423 = vrot.lane.b32.xlu0 %v245, 112
    %v424 = vpop.permute.xlu0 %423
    %425 = vrot.lane.b32.xlu0 %v245, 80
    %v426 = vpop.permute.xlu0 %425
    %v427 = vsel %vm256, %v424, 0
    %v429 = vsel %vm256, %v426, 0
    %431 = vmatprep.subr.mxu0 0.0
    %432 = vmatpush1.xpose.msra.mxu0 0.0
    %433 = vmatprep.subr.mxu0 0.0
    %434 = vmatpush1.xpose.msra.mxu0 0.0
    %435 = vmatprep.subr.mxu0 0.0
    %436 = vmatpush1.xpose.msra.mxu0 0.0
    %437 = vmatprep.subr.mxu0 0.0
    %438 = vmatpush1.xpose.msra.mxu0 0.0
    %439 = vmatprep.subr.mxu0 0.0
    %440 = vmatpush1.xpose.msra.mxu0 0.0
    %441 = vmatprep.subr.mxu0 0.0
    %442 = vmatpush1.xpose.msra.mxu0 0.0
    %443 = vmatprep.subr.mxu0 0.0
    %444 = vmatpush1.xpose.msra.mxu0 0.0
    %445 = vmatprep.subr.mxu0 0.0
    %446 = vmatpush1.xpose.msra.mxu0 0.0
    %447 = vmatprep.subr.mxu0 0.0
    %448 = vmatpush1.xpose.msra.mxu0 0.0
    %449 = vmatprep.subr.mxu0 0.0
    %450 = vmatpush1.xpose.msra.mxu0 0.0
    %451 = vmatprep.subr.mxu0 0.0
    %452 = vmatpush1.xpose.msra.mxu0 0.0
    %453 = vmatprep.subr.mxu0 0.0
    %454 = vmatpush1.xpose.msra.mxu0 0.0
    %455 = vmatprep.subr.mxu0 0.0
    %456 = vmatpush1.xpose.msra.mxu0 0.0
    %457 = vmatprep.subr.mxu0 0.0
    %458 = vmatpush1.xpose.msra.mxu0 0.0
    %459 = vmatprep.subr.mxu0 0.0
    %460 = vmatpush1.xpose.msra.mxu0 0.0
    %461 = vmatprep.subr.mxu0 0.0
    %462 = vmatpush1.xpose.msra.mxu0 %v429
    %463 = vmatprep.subr.mxu0 0.0
    %464 = vmatpush2.xpose.msra.mxu0 0.0
    %465 = vmatprep.subr.mxu0 0.0
    %466 = vmatpush2.xpose.msra.mxu0 0.0
    %467 = vmatprep.subr.mxu0 0.0
    %468 = vmatpush2.xpose.msra.mxu0 0.0
    %469 = vmatprep.subr.mxu0 0.0
    %470 = vmatpush2.xpose.msra.mxu0 0.0
    %471 = vmatprep.subr.mxu0 0.0
    %472 = vmatpush2.xpose.msra.mxu0 0.0
    %473 = vmatprep.subr.mxu0 0.0
    %474 = vmatpush2.xpose.msra.mxu0 0.0
    %475 = vmatprep.subr.mxu0 0.0
    %476 = vmatpush2.xpose.msra.mxu0 0.0
    %477 = vmatprep.subr.mxu0 0.0
    %478 = vmatpush2.xpose.msra.mxu0 0.0
    %479 = vmatprep.subr.mxu0 0.0
    %480 = vmatpush2.xpose.msra.mxu0 0.0
    %481 = vmatprep.subr.mxu0 0.0
    %482 = vmatpush2.xpose.msra.mxu0 0.0
    %483 = vmatprep.subr.mxu0 0.0
    %484 = vmatpush2.xpose.msra.mxu0 0.0
    %485 = vmatprep.subr.mxu0 0.0
    %486 = vmatpush2.xpose.msra.mxu0 0.0
    %487 = vmatprep.subr.mxu0 0.0
    %488 = vmatpush2.xpose.msra.mxu0 0.0
    %489 = vmatprep.subr.mxu0 0.0
    %490 = vmatpush2.xpose.msra.mxu0 0.0
    %491 = vmatprep.subr.mxu0 0.0
    %492 = vmatpush2.xpose.msra.mxu0 0.0
    %493 = vmatprep.subr.mxu0 0.0
    %494 = vmatpush2.xpose.msra.mxu0 0.0
    %495 = vmatprep.mubr.f32.mxu0 0.0
    %496 = vmatmul.mubr.f32.gmra.mxu0 %v427
    %v497 = vpop.f32.mrf.mxu0
    %v498 = vadd.f32 0.0, %v497
    %v499 = vpop.f32.mrf.mxu0
    %500 = vdwg.mxu0
    %v501 = vmul.f32 %v498, 0.25
    %v502 = vadd.f32 %v501, %v114
    %v503 = vsel %vm333, %v502, -inf
    %504 = vmax.xlane.f32.xlu0 %v503
    %v505 = vpop.xlane.xlu0 %504
    %v506 = vsub.f32 %v502, %v505
    %v507 = vmul.f32 %v506, 1.442695
    %v508 = vpow.pop %v507
    %v509 = vsel %vm333, %v508, 0.0
    %510 = vadd.xlane.f32.xlu0 %v509
    %v511 = vpop.xlane.xlu0 %510
    %v512 = vrcp.pop %v511
    %v513 = vmul.f32 %v512, %v119
    %v514 = vmul.f32 %v508, %v513
    %515 = vrot.lane.b32.xlu0 %v245, 48
    %v516 = vpop.permute.xlu0 %515
    %v519 = vsel %vm333, %v514, 0
    %521 = vmatprep.subr.mxu0 0.0
    %522 = vmatpush1.msra.mxu0 0.0
    %523 = vmatprep.subr.mxu0 0.0
    %524 = vmatpush1.msra.mxu0 0.0
    %525 = vmatprep.subr.mxu0 0.0
    %526 = vmatpush1.msra.mxu0 0.0
    %527 = vmatprep.subr.mxu0 0.0
    %528 = vmatpush1.msra.mxu0 0.0
    %529 = vmatprep.subr.mxu0 0.0
    %530 = vmatpush1.msra.mxu0 0.0
    %531 = vmatprep.subr.mxu0 0.0
    %532 = vmatpush1.msra.mxu0 0.0
    %533 = vmatprep.subr.mxu0 0.0
    %534 = vmatpush1.msra.mxu0 0.0
    %535 = vmatprep.subr.mxu0 0.0
    %536 = vmatpush1.msra.mxu0 0.0
    %537 = vmatprep.subr.mxu0 0.0
    %538 = vmatpush1.msra.mxu0 0.0
    %539 = vmatprep.subr.mxu0 0.0
    %540 = vmatpush1.msra.mxu0 0.0
    %541 = vmatprep.subr.mxu0 0.0
    %542 = vmatpush1.msra.mxu0 0.0
    %543 = vmatprep.subr.mxu0 0.0
    %544 = vmatpush1.msra.mxu0 0.0
    %545 = vmatprep.subr.mxu0 0.0
    %546 = vmatpush1.msra.mxu0 0.0
    %547 = vmatprep.subr.mxu0 0.0
    %548 = vmatpush1.msra.mxu0 0.0
    %549 = vmatprep.subr.mxu0 0.0
    %550 = vmatpush1.msra.mxu0 0.0
    %551 = vmatprep.subr.mxu0 0.0
    %552 = vmatpush1.msra.mxu0 %v516
    %553 = vmatprep.subr.mxu0 0.0
    %554 = vmatpush2.msra.mxu0 0.0
    %555 = vmatprep.subr.mxu0 0.0
    %556 = vmatpush2.msra.mxu0 0.0
    %557 = vmatprep.subr.mxu0 0.0
    %558 = vmatpush2.msra.mxu0 0.0
    %559 = vmatprep.subr.mxu0 0.0
    %560 = vmatpush2.msra.mxu0 0.0
    %561 = vmatprep.subr.mxu0 0.0
    %562 = vmatpush2.msra.mxu0 0.0
    %563 = vmatprep.subr.mxu0 0.0
    %564 = vmatpush2.msra.mxu0 0.0
    %565 = vmatprep.subr.mxu0 0.0
    %566 = vmatpush2.msra.mxu0 0.0
    %567 = vmatprep.subr.mxu0 0.0
    %568 = vmatpush2.msra.mxu0 0.0
    %569 = vmatprep.subr.mxu0 0.0
    %570 = vmatpush2.msra.mxu0 0.0
    %571 = vmatprep.subr.mxu0 0.0
    %572 = vmatpush2.msra.mxu0 0.0
    %573 = vmatprep.subr.mxu0 0.0
    %574 = vmatpush2.msra.mxu0 0.0
    %575 = vmatprep.subr.mxu0 0.0
    %576 = vmatpush2.msra.mxu0 0.0
    %577 = vmatprep.subr.mxu0 0.0
    %578 = vmatpush2.msra.mxu0 0.0
    %579 = vmatprep.subr.mxu0 0.0
    %580 = vmatpush2.msra.mxu0 0.0
    %581 = vmatprep.subr.mxu0 0.0
    %582 = vmatpush2.msra.mxu0 0.0
    %583 = vmatprep.subr.mxu0 0.0
    %584 = vmatpush2.msra.mxu0 0.0
    %585 = vmatprep.mubr.f32.mxu0 0.0
    %586 = vmatmul.mubr.f32.gmra.mxu0 %v519
    %v587 = vpop.f32.mrf.mxu0
    %v588 = vadd.f32 0.0, %v587
    %v589 = vpop.f32.mrf.mxu0
    %590 = vdwg.mxu0
    %592 = vrot.lane.b32.xlu0 %v588, 16
    %v593 = vpop.permute.xlu0 %592
    %vm595 = vcmask 261248
    %596 = vst.msk [vmem:[#allocation2] sm:$0xff] %vm595, %v593
    %598 = vrot.lane.b32.xlu0 %v250, 96
    %v599 = vpop.permute.xlu0 %598
    %v600 = vsel %vm256, %v250, 0
    %v602 = vsel %vm256, %v599, 0
    %604 = vmatprep.subr.mxu0 0.0
    %605 = vmatpush1.xpose.msra.mxu0 0.0
    %606 = vmatprep.subr.mxu0 0.0
    %607 = vmatpush1.xpose.msra.mxu0 0.0
    %608 = vmatprep.subr.mxu0 0.0
    %609 = vmatpush1.xpose.msra.mxu0 0.0
    %610 = vmatprep.subr.mxu0 0.0
    %611 = vmatpush1.xpose.msra.mxu0 0.0
    %612 = vmatprep.subr.mxu0 0.0
    %613 = vmatpush1.xpose.msra.mxu0 0.0
    %614 = vmatprep.subr.mxu0 0.0
    %615 = vmatpush1.xpose.msra.mxu0 0.0
    %616 = vmatprep.subr.mxu0 0.0
    %617 = vmatpush1.xpose.msra.mxu0 0.0
    %618 = vmatprep.subr.mxu0 0.0
    %619 = vmatpush1.xpose.msra.mxu0 0.0
    %620 = vmatprep.subr.mxu0 0.0
    %621 = vmatpush1.xpose.msra.mxu0 0.0
    %622 = vmatprep.subr.mxu0 0.0
    %623 = vmatpush1.xpose.msra.mxu0 0.0
    %624 = vmatprep.subr.mxu0 0.0
    %625 = vmatpush1.xpose.msra.mxu0 0.0
    %626 = vmatprep.subr.mxu0 0.0
    %627 = vmatpush1.xpose.msra.mxu0 0.0
    %628 = vmatprep.subr.mxu0 0.0
    %629 = vmatpush1.xpose.msra.mxu0 0.0
    %630 = vmatprep.subr.mxu0 0.0
    %631 = vmatpush1.xpose.msra.mxu0 0.0
    %632 = vmatprep.subr.mxu0 0.0
    %633 = vmatpush1.xpose.msra.mxu0 0.0
    %634 = vmatprep.subr.mxu0 0.0
    %635 = vmatpush1.xpose.msra.mxu0 %v602
    %636 = vmatprep.subr.mxu0 0.0
    %637 = vmatpush2.xpose.msra.mxu0 0.0
    %638 = vmatprep.subr.mxu0 0.0
    %639 = vmatpush2.xpose.msra.mxu0 0.0
    %640 = vmatprep.subr.mxu0 0.0
    %641 = vmatpush2.xpose.msra.mxu0 0.0
    %642 = vmatprep.subr.mxu0 0.0
    %643 = vmatpush2.xpose.msra.mxu0 0.0
    %644 = vmatprep.subr.mxu0 0.0
    %645 = vmatpush2.xpose.msra.mxu0 0.0
    %646 = vmatprep.subr.mxu0 0.0
    %647 = vmatpush2.xpose.msra.mxu0 0.0
    %648 = vmatprep.subr.mxu0 0.0
    %649 = vmatpush2.xpose.msra.mxu0 0.0
    %650 = vmatprep.subr.mxu0 0.0
    %651 = vmatpush2.xpose.msra.mxu0 0.0
    %652 = vmatprep.subr.mxu0 0.0
    %653 = vmatpush2.xpose.msra.mxu0 0.0
    %654 = vmatprep.subr.mxu0 0.0
    %655 = vmatpush2.xpose.msra.mxu0 0.0
    %656 = vmatprep.subr.mxu0 0.0
    %657 = vmatpush2.xpose.msra.mxu0 0.0
    %658 = vmatprep.subr.mxu0 0.0
    %659 = vmatpush2.xpose.msra.mxu0 0.0
    %660 = vmatprep.subr.mxu0 0.0
    %661 = vmatpush2.xpose.msra.mxu0 0.0
    %662 = vmatprep.subr.mxu0 0.0
    %663 = vmatpush2.xpose.msra.mxu0 0.0
    %664 = vmatprep.subr.mxu0 0.0
    %665 = vmatpush2.xpose.msra.mxu0 0.0
    %666 = vmatprep.subr.mxu0 0.0
    %667 = vmatpush2.xpose.msra.mxu0 0.0
    %668 = vmatprep.mubr.f32.mxu0 0.0
    %669 = vmatmul.mubr.f32.gmra.mxu0 %v600
    %v670 = vpop.f32.mrf.mxu0
    %v671 = vadd.f32 0.0, %v670
    %v672 = vpop.f32.mrf.mxu0
    %673 = vdwg.mxu0
    %v674 = vmul.f32 %v671, 0.25
    %v675 = vadd.f32 %v674, %v126
    %v676 = vsel %vm333, %v675, -inf
    %677 = vmax.xlane.f32.xlu0 %v676
    %v678 = vpop.xlane.xlu0 %677
    %v679 = vsub.f32 %v675, %v678
    %v680 = vmul.f32 %v679, 1.442695
    %v681 = vpow.pop %v680
    %v682 = vsel %vm333, %v681, 0.0
    %683 = vadd.xlane.f32.xlu0 %v682
    %v684 = vpop.xlane.xlu0 %683
    %v685 = vrcp.pop %v684
    %v686 = vmul.f32 %v685, %v131
    %v687 = vmul.f32 %v681, %v686
    %688 = vrot.lane.b32.xlu0 %v250, 64
    %v689 = vpop.permute.xlu0 %688
    %v692 = vsel %vm333, %v687, 0
    %694 = vmatprep.subr.mxu0 0.0
    %695 = vmatpush1.msra.mxu0 0.0
    %696 = vmatprep.subr.mxu0 0.0
    %697 = vmatpush1.msra.mxu0 0.0
    %698 = vmatprep.subr.mxu0 0.0
    %699 = vmatpush1.msra.mxu0 0.0
    %700 = vmatprep.subr.mxu0 0.0
    %701 = vmatpush1.msra.mxu0 0.0
    %702 = vmatprep.subr.mxu0 0.0
    %703 = vmatpush1.msra.mxu0 0.0
    %704 = vmatprep.subr.mxu0 0.0
    %705 = vmatpush1.msra.mxu0 0.0
    %706 = vmatprep.subr.mxu0 0.0
    %707 = vmatpush1.msra.mxu0 0.0
    %708 = vmatprep.subr.mxu0 0.0
    %709 = vmatpush1.msra.mxu0 0.0
    %710 = vmatprep.subr.mxu0 0.0
    %711 = vmatpush1.msra.mxu0 0.0
    %712 = vmatprep.subr.mxu0 0.0
    %713 = vmatpush1.msra.mxu0 0.0
    %714 = vmatprep.subr.mxu0 0.0
    %715 = vmatpush1.msra.mxu0 0.0
    %716 = vmatprep.subr.mxu0 0.0
    %717 = vmatpush1.msra.mxu0 0.0
    %718 = vmatprep.subr.mxu0 0.0
    %719 = vmatpush1.msra.mxu0 0.0
    %720 = vmatprep.subr.mxu0 0.0
    %721 = vmatpush1.msra.mxu0 0.0
    %722 = vmatprep.subr.mxu0 0.0
    %723 = vmatpush1.msra.mxu0 0.0
    %724 = vmatprep.subr.mxu0 0.0
    %725 = vmatpush1.msra.mxu0 %v689
    %726 = vmatprep.subr.mxu0 0.0
    %727 = vmatpush2.msra.mxu0 0.0
    %728 = vmatprep.subr.mxu0 0.0
    %729 = vmatpush2.msra.mxu0 0.0
    %730 = vmatprep.subr.mxu0 0.0
    %731 = vmatpush2.msra.mxu0 0.0
    %732 = vmatprep.subr.mxu0 0.0
    %733 = vmatpush2.msra.mxu0 0.0
    %734 = vmatprep.subr.mxu0 0.0
    %735 = vmatpush2.msra.mxu0 0.0
    %736 = vmatprep.subr.mxu0 0.0
    %737 = vmatpush2.msra.mxu0 0.0
    %738 = vmatprep.subr.mxu0 0.0
    %739 = vmatpush2.msra.mxu0 0.0
    %740 = vmatprep.subr.mxu0 0.0
    %741 = vmatpush2.msra.mxu0 0.0
    %742 = vmatprep.subr.mxu0 0.0
    %743 = vmatpush2.msra.mxu0 0.0
    %744 = vmatprep.subr.mxu0 0.0
    %745 = vmatpush2.msra.mxu0 0.0
    %746 = vmatprep.subr.mxu0 0.0
    %747 = vmatpush2.msra.mxu0 0.0
    %748 = vmatprep.subr.mxu0 0.0
    %749 = vmatpush2.msra.mxu0 0.0
    %750 = vmatprep.subr.mxu0 0.0
    %751 = vmatpush2.msra.mxu0 0.0
    %752 = vmatprep.subr.mxu0 0.0
    %753 = vmatpush2.msra.mxu0 0.0
    %754 = vmatprep.subr.mxu0 0.0
    %755 = vmatpush2.msra.mxu0 0.0
    %756 = vmatprep.subr.mxu0 0.0
    %757 = vmatpush2.msra.mxu0 0.0
    %758 = vmatprep.mubr.f32.mxu0 0.0
    %759 = vmatmul.mubr.f32.gmra.mxu0 %v692
    %v760 = vpop.f32.mrf.mxu0
    %v761 = vadd.f32 0.0, %v760
    %v762 = vpop.f32.mrf.mxu0
    %763 = vdwg.mxu0
    %764 = vst.msk [vmem:[#allocation2 + $0x8] sm:$0xff] %vm256, %v761
    %765 = vrot.lane.b32.xlu0 %v250, 112
    %v766 = vpop.permute.xlu0 %765
    %767 = vrot.lane.b32.xlu0 %v250, 80
    %v768 = vpop.permute.xlu0 %767
    %v769 = vsel %vm256, %v766, 0
    %v771 = vsel %vm256, %v768, 0
    %773 = vmatprep.subr.mxu0 0.0
    %774 = vmatpush1.xpose.msra.mxu0 0.0
    %775 = vmatprep.subr.mxu0 0.0
    %776 = vmatpush1.xpose.msra.mxu0 0.0
    %777 = vmatprep.subr.mxu0 0.0
    %778 = vmatpush1.xpose.msra.mxu0 0.0
    %779 = vmatprep.subr.mxu0 0.0
    %780 = vmatpush1.xpose.msra.mxu0 0.0
    %781 = vmatprep.subr.mxu0 0.0
    %782 = vmatpush1.xpose.msra.mxu0 0.0
    %783 = vmatprep.subr.mxu0 0.0
    %784 = vmatpush1.xpose.msra.mxu0 0.0
    %785 = vmatprep.subr.mxu0 0.0
    %786 = vmatpush1.xpose.msra.mxu0 0.0
    %787 = vmatprep.subr.mxu0 0.0
    %788 = vmatpush1.xpose.msra.mxu0 0.0
    %789 = vmatprep.subr.mxu0 0.0
    %790 = vmatpush1.xpose.msra.mxu0 0.0
    %791 = vmatprep.subr.mxu0 0.0
    %792 = vmatpush1.xpose.msra.mxu0 0.0
    %793 = vmatprep.subr.mxu0 0.0
    %794 = vmatpush1.xpose.msra.mxu0 0.0
    %795 = vmatprep.subr.mxu0 0.0
    %796 = vmatpush1.xpose.msra.mxu0 0.0
    %797 = vmatprep.subr.mxu0 0.0
    %798 = vmatpush1.xpose.msra.mxu0 0.0
    %799 = vmatprep.subr.mxu0 0.0
    %800 = vmatpush1.xpose.msra.mxu0 0.0
    %801 = vmatprep.subr.mxu0 0.0
    %802 = vmatpush1.xpose.msra.mxu0 0.0
    %803 = vmatprep.subr.mxu0 0.0
    %804 = vmatpush1.xpose.msra.mxu0 %v771
    %805 = vmatprep.subr.mxu0 0.0
    %806 = vmatpush2.xpose.msra.mxu0 0.0
    %807 = vmatprep.subr.mxu0 0.0
    %808 = vmatpush2.xpose.msra.mxu0 0.0
    %809 = vmatprep.subr.mxu0 0.0
    %810 = vmatpush2.xpose.msra.mxu0 0.0
    %811 = vmatprep.subr.mxu0 0.0
    %812 = vmatpush2.xpose.msra.mxu0 0.0
    %813 = vmatprep.subr.mxu0 0.0
    %814 = vmatpush2.xpose.msra.mxu0 0.0
    %815 = vmatprep.subr.mxu0 0.0
    %816 = vmatpush2.xpose.msra.mxu0 0.0
    %817 = vmatprep.subr.mxu0 0.0
    %818 = vmatpush2.xpose.msra.mxu0 0.0
    %819 = vmatprep.subr.mxu0 0.0
    %820 = vmatpush2.xpose.msra.mxu0 0.0
    %821 = vmatprep.subr.mxu0 0.0
    %822 = vmatpush2.xpose.msra.mxu0 0.0
    %823 = vmatprep.subr.mxu0 0.0
    %824 = vmatpush2.xpose.msra.mxu0 0.0
    %825 = vmatprep.subr.mxu0 0.0
    %826 = vmatpush2.xpose.msra.mxu0 0.0
    %827 = vmatprep.subr.mxu0 0.0
    %828 = vmatpush2.xpose.msra.mxu0 0.0
    %829 = vmatprep.subr.mxu0 0.0
    %830 = vmatpush2.xpose.msra.mxu0 0.0
    %831 = vmatprep.subr.mxu0 0.0
    %832 = vmatpush2.xpose.msra.mxu0 0.0
    %833 = vmatprep.subr.mxu0 0.0
    %834 = vmatpush2.xpose.msra.mxu0 0.0
    %835 = vmatprep.subr.mxu0 0.0
    %836 = vmatpush2.xpose.msra.mxu0 0.0
    %837 = vmatprep.mubr.f32.mxu0 0.0
    %838 = vmatmul.mubr.f32.gmra.mxu0 %v769
    %v839 = vpop.f32.mrf.mxu0
    %v840 = vadd.f32 0.0, %v839
    %v841 = vpop.f32.mrf.mxu0
    %842 = vdwg.mxu0
    %v843 = vmul.f32 %v840, 0.25
    %v844 = vadd.f32 %v843, %v126
    %v845 = vsel %vm333, %v844, -inf
    %846 = vmax.xlane.f32.xlu0 %v845
    %v847 = vpop.xlane.xlu0 %846
    %v848 = vsub.f32 %v844, %v847
    %v849 = vmul.f32 %v848, 1.442695
    %v850 = vpow.pop %v849
    %v851 = vsel %vm333, %v850, 0.0
    %852 = vadd.xlane.f32.xlu0 %v851
    %v853 = vpop.xlane.xlu0 %852
    %v854 = vrcp.pop %v853
    %v855 = vmul.f32 %v854, %v131
    %v856 = vmul.f32 %v850, %v855
    %857 = vrot.lane.b32.xlu0 %v250, 48
    %v858 = vpop.permute.xlu0 %857
    %v861 = vsel %vm333, %v856, 0
    %863 = vmatprep.subr.mxu0 0.0
    %864 = vmatpush1.msra.mxu0 0.0
    %865 = vmatprep.subr.mxu0 0.0
    %866 = vmatpush1.msra.mxu0 0.0
    %867 = vmatprep.subr.mxu0 0.0
    %868 = vmatpush1.msra.mxu0 0.0
    %869 = vmatprep.subr.mxu0 0.0
    %870 = vmatpush1.msra.mxu0 0.0
    %871 = vmatprep.subr.mxu0 0.0
    %872 = vmatpush1.msra.mxu0 0.0
    %873 = vmatprep.subr.mxu0 0.0
    %874 = vmatpush1.msra.mxu0 0.0
    %875 = vmatprep.subr.mxu0 0.0
    %876 = vmatpush1.msra.mxu0 0.0
    %877 = vmatprep.subr.mxu0 0.0
    %878 = vmatpush1.msra.mxu0 0.0
    %879 = vmatprep.subr.mxu0 0.0
    %880 = vmatpush1.msra.mxu0 0.0
    %881 = vmatprep.subr.mxu0 0.0
    %882 = vmatpush1.msra.mxu0 0.0
    %883 = vmatprep.subr.mxu0 0.0
    %884 = vmatpush1.msra.mxu0 0.0
    %885 = vmatprep.subr.mxu0 0.0
    %886 = vmatpush1.msra.mxu0 0.0
    %887 = vmatprep.subr.mxu0 0.0
    %888 = vmatpush1.msra.mxu0 0.0
    %889 = vmatprep.subr.mxu0 0.0
    %890 = vmatpush1.msra.mxu0 0.0
    %891 = vmatprep.subr.mxu0 0.0
    %892 = vmatpush1.msra.mxu0 0.0
    %893 = vmatprep.subr.mxu0 0.0
    %894 = vmatpush1.msra.mxu0 %v858
    %895 = vmatprep.subr.mxu0 0.0
    %896 = vmatpush2.msra.mxu0 0.0
    %897 = vmatprep.subr.mxu0 0.0
    %898 = vmatpush2.msra.mxu0 0.0
    %899 = vmatprep.subr.mxu0 0.0
    %900 = vmatpush2.msra.mxu0 0.0
    %901 = vmatprep.subr.mxu0 0.0
    %902 = vmatpush2.msra.mxu0 0.0
    %903 = vmatprep.subr.mxu0 0.0
    %904 = vmatpush2.msra.mxu0 0.0
    %905 = vmatprep.subr.mxu0 0.0
    %906 = vmatpush2.msra.mxu0 0.0
    %907 = vmatprep.subr.mxu0 0.0
    %908 = vmatpush2.msra.mxu0 0.0
    %909 = vmatprep.subr.mxu0 0.0
    %910 = vmatpush2.msra.mxu0 0.0
    %911 = vmatprep.subr.mxu0 0.0
    %912 = vmatpush2.msra.mxu0 0.0
    %913 = vmatprep.subr.mxu0 0.0
    %914 = vmatpush2.msra.mxu0 0.0
    %915 = vmatprep.subr.mxu0 0.0
    %916 = vmatpush2.msra.mxu0 0.0
    %917 = vmatprep.subr.mxu0 0.0
    %918 = vmatpush2.msra.mxu0 0.0
    %919 = vmatprep.subr.mxu0 0.0
    %920 = vmatpush2.msra.mxu0 0.0
    %921 = vmatprep.subr.mxu0 0.0
    %922 = vmatpush2.msra.mxu0 0.0
    %923 = vmatprep.subr.mxu0 0.0
    %924 = vmatpush2.msra.mxu0 0.0
    %925 = vmatprep.subr.mxu0 0.0
    %926 = vmatpush2.msra.mxu0 0.0
    %927 = vmatprep.mubr.f32.mxu0 0.0
    %928 = vmatmul.mubr.f32.gmra.mxu0 %v861
    %v929 = vpop.f32.mrf.mxu0
    %v930 = vadd.f32 0.0, %v929
    %v931 = vpop.f32.mrf.mxu0
    %932 = vdwg.mxu0
    %934 = vrot.lane.b32.xlu0 %v930, 16
    %v935 = vpop.permute.xlu0 %934
    %937 = vst.msk [vmem:[#allocation2 + $0x8] sm:$0xff] %vm595, %v935
    %v938 = vld [vmem:[#allocation2] sm:$0xff]
    %v939 = vld [vmem:[#allocation2 + $0x8] sm:$0xff]
    %v940 = vlaneseq
    %v941 = vshrl.u32 %v940, 7
    %v942 = vsub.s32 0, %v941
    %v943 = vrot.slane %v161, %v942
    %v945 = vsel %vm58, %v938, 0
    %v948 = vsel %vm58, %v939, 0
    %950 = vmatprep.subr.mxu0 0.0
    %951 = vmatpush1.msra.mxu0 0.0
    %952 = vmatprep.subr.mxu0 0.0
    %953 = vmatpush1.msra.mxu0 0.0
    %954 = vmatprep.subr.mxu0 0.0
    %955 = vmatpush1.msra.mxu0 0.0
    %956 = vmatprep.subr.mxu0 0.0
    %957 = vmatpush1.msra.mxu0 0.0
    %958 = vmatprep.subr.mxu0 0.0
    %959 = vmatpush1.msra.mxu0 0.0
    %960 = vmatprep.subr.mxu0 0.0
    %961 = vmatpush1.msra.mxu0 0.0
    %962 = vmatprep.subr.mxu0 0.0
    %963 = vmatpush1.msra.mxu0 0.0
    %964 = vmatprep.subr.mxu0 0.0
    %965 = vmatpush1.msra.mxu0 0.0
    %966 = vmatprep.subr.mxu0 0.0
    %967 = vmatpush1.msra.mxu0 0.0
    %968 = vmatprep.subr.mxu0 0.0
    %969 = vmatpush1.msra.mxu0 0.0
    %970 = vmatprep.subr.mxu0 0.0
    %971 = vmatpush1.msra.mxu0 0.0
    %972 = vmatprep.subr.mxu0 0.0
    %973 = vmatpush1.msra.mxu0 0.0
    %974 = vmatprep.subr.mxu0 0.0
    %975 = vmatpush1.msra.mxu0 %v139
    %976 = vmatprep.subr.mxu0 0.0
    %977 = vmatpush1.msra.mxu0 %v138
    %978 = vmatprep.subr.mxu0 0.0
    %979 = vmatpush1.msra.mxu0 %v137
    %980 = vmatprep.subr.mxu0 0.0
    %981 = vmatpush1.msra.mxu0 %v136
    %982 = vmatprep.subr.mxu0 0.0
    %983 = vmatpush2.msra.mxu0 0.0
    %984 = vmatprep.subr.mxu0 0.0
    %985 = vmatpush2.msra.mxu0 0.0
    %986 = vmatprep.subr.mxu0 0.0
    %987 = vmatpush2.msra.mxu0 0.0
    %988 = vmatprep.subr.mxu0 0.0
    %989 = vmatpush2.msra.mxu0 0.0
    %990 = vmatprep.subr.mxu0 0.0
    %991 = vmatpush2.msra.mxu0 0.0
    %992 = vmatprep.subr.mxu0 0.0
    %993 = vmatpush2.msra.mxu0 0.0
    %994 = vmatprep.subr.mxu0 0.0
    %995 = vmatpush2.msra.mxu0 0.0
    %996 = vmatprep.subr.mxu0 0.0
    %997 = vmatpush2.msra.mxu0 0.0
    %998 = vmatprep.subr.mxu0 0.0
    %999 = vmatpush2.msra.mxu0 0.0
    %1000 = vmatprep.subr.mxu0 0.0
    %1001 = vmatpush2.msra.mxu0 0.0
    %1002 = vmatprep.subr.mxu0 0.0
    %1003 = vmatpush2.msra.mxu0 0.0
    %1004 = vmatprep.subr.mxu0 0.0
    %1005 = vmatpush2.msra.mxu0 0.0
    %1006 = vmatprep.subr.mxu0 0.0
    %1007 = vmatpush2.msra.mxu0 0.0
    %1008 = vmatprep.subr.mxu0 0.0
    %1009 = vmatpush2.msra.mxu0 0.0
    %1010 = vmatprep.subr.mxu0 0.0
    %1011 = vmatpush2.msra.mxu0 0.0
    %1012 = vmatprep.subr.mxu0 0.0
    %1013 = vmatpush2.msra.mxu0 0.0
    %1014 = vmatprep.mubr.f32.mxu0 0.0
    %1015 = vmatmul.mubr.f32.gmra.mxu0 %v945
    %v1016 = vpop.f32.mrf.mxu0
    %v1017 = vadd.f32 %v943, %v1016
    %v1018 = vpop.f32.mrf.mxu0
    %1019 = vmatprep.mubr.f32.mxu0 0.0
    %1020 = vmatmul.mubr.f32.gmra.mxu0 %v948
    %v1021 = vpop.f32.mrf.mxu0
    %v1022 = vadd.f32 %v943, %v1021
    %v1023 = vpop.f32.mrf.mxu0
    %1024 = vdwg.mxu0
    %v1025 = vadd.f32 %v1017, %v96
    %v1026 = vadd.f32 %v1022, %v97
    %v1027 = vsel %vm58, %v1025, 0.0
    %1028 = vadd.xlane.f32.xlu0 %v1027
    %v1029 = vpop.xlane.xlu0 %1028
    %v1030 = vsel %vm58, %v1026, 0.0
    %1031 = vadd.xlane.f32.xlu0 %v1030
    %v1032 = vpop.xlane.xlu0 %1031
    %v1033 = vmul.f32 %v1029, %v65
    %v1034 = vmul.f32 %v1032, %v65
    %v1035 = vsub.f32 %v1025, %v1033
    %v1036 = vsub.f32 %v1026, %v1034
    %v1037 = vmul.f32 %v1035, %v1035
    %v1038 = vmul.f32 %v1036, %v1036
    %v1039 = vsel %vm58, %v1037, 0.0
    %1040 = vadd.xlane.f32.xlu0 %v1039
    %v1041 = vpop.xlane.xlu0 %1040
    %v1042 = vsel %vm58, %v1038, 0.0
    %1043 = vadd.xlane.f32.xlu0 %v1042
    %v1044 = vpop.xlane.xlu0 %1043
    %v1045 = vmul.f32 %v1041, %v65
    %v1046 = vmul.f32 %v1044, %v65
    %v1047 = vlaneseq
    %v1048 = vshrl.u32 %v1047, 7
    %v1049 = vsub.s32 0, %v1048
    %v1050 = vrot.slane %v162, %v1049
    %v1051 = vmul.f32 %v1050, %v1035
    %v1052 = vmul.f32 %v1050, %v1036
    %v1053 = vadd.f32 %v1045, 1e-12
    %v1054 = vadd.f32 %v1046, 1e-12
    %v1055 = vrsqrt.pop %v1053
    %v1056 = vrsqrt.pop %v1054
    %v1057 = vmul.f32 %v1051, %v1055
    %v1058 = vmul.f32 %v1052, %v1056
    %v1059 = vlaneseq
    %v1060 = vshrl.u32 %v1059, 7
    %v1061 = vsub.s32 0, %v1060
    %v1062 = vrot.slane %v163, %v1061
    %v1063 = vadd.f32 %v1057, %v1062
    %v1064 = vadd.f32 %v1058, %v1062
    %v1065 = vlaneseq
    %v1066 = vshrl.u32 %v1065, 7
    %v1067 = vsub.s32 0, %v1066
    %v1068 = vrot.slane %v164, %v1067
    %v1070 = vsel %vm58, %v1063, 0
    %v1073 = vsel %vm58, %v1064, 0
    %1075 = vmatprep.subr.mxu0 0.0
    %1076 = vmatpush1.msra.mxu0 0.0
    %1077 = vmatprep.subr.mxu0 0.0
    %1078 = vmatpush1.msra.mxu0 0.0
    %1079 = vmatprep.subr.mxu0 0.0
    %1080 = vmatpush1.msra.mxu0 0.0
    %1081 = vmatprep.subr.mxu0 0.0
    %1082 = vmatpush1.msra.mxu0 0.0
    %1083 = vmatprep.subr.mxu0 0.0
    %1084 = vmatpush1.msra.mxu0 0.0
    %1085 = vmatprep.subr.mxu0 0.0
    %1086 = vmatpush1.msra.mxu0 0.0
    %1087 = vmatprep.subr.mxu0 0.0
    %1088 = vmatpush1.msra.mxu0 0.0
    %1089 = vmatprep.subr.mxu0 0.0
    %1090 = vmatpush1.msra.mxu0 0.0
    %1091 = vmatprep.subr.mxu0 0.0
    %1092 = vmatpush1.msra.mxu0 0.0
    %1093 = vmatprep.subr.mxu0 0.0
    %1094 = vmatpush1.msra.mxu0 0.0
    %1095 = vmatprep.subr.mxu0 0.0
    %1096 = vmatpush1.msra.mxu0 0.0
    %1097 = vmatprep.subr.mxu0 0.0
    %1098 = vmatpush1.msra.mxu0 0.0
    %1099 = vmatprep.subr.mxu0 0.0
    %1100 = vmatpush1.msra.mxu0 %v143
    %1101 = vmatprep.subr.mxu0 0.0
    %1102 = vmatpush1.msra.mxu0 %v142
    %1103 = vmatprep.subr.mxu0 0.0
    %1104 = vmatpush1.msra.mxu0 %v141
    %1105 = vmatprep.subr.mxu0 0.0
    %1106 = vmatpush1.msra.mxu0 %v140
    %1107 = vmatprep.subr.mxu0 0.0
    %1108 = vmatpush2.msra.mxu0 0.0
    %1109 = vmatprep.subr.mxu0 0.0
    %1110 = vmatpush2.msra.mxu0 0.0
    %1111 = vmatprep.subr.mxu0 0.0
    %1112 = vmatpush2.msra.mxu0 0.0
    %1113 = vmatprep.subr.mxu0 0.0
    %1114 = vmatpush2.msra.mxu0 0.0
    %1115 = vmatprep.subr.mxu0 0.0
    %1116 = vmatpush2.msra.mxu0 0.0
    %1117 = vmatprep.subr.mxu0 0.0
    %1118 = vmatpush2.msra.mxu0 0.0
    %1119 = vmatprep.subr.mxu0 0.0
    %1120 = vmatpush2.msra.mxu0 0.0
    %1121 = vmatprep.subr.mxu0 0.0
    %1122 = vmatpush2.msra.mxu0 0.0
    %1123 = vmatprep.subr.mxu0 0.0
    %1124 = vmatpush2.msra.mxu0 0.0
    %1125 = vmatprep.subr.mxu0 0.0
    %1126 = vmatpush2.msra.mxu0 0.0
    %1127 = vmatprep.subr.mxu0 0.0
    %1128 = vmatpush2.msra.mxu0 0.0
    %1129 = vmatprep.subr.mxu0 0.0
    %1130 = vmatpush2.msra.mxu0 0.0
    %1131 = vmatprep.subr.mxu0 0.0
    %1132 = vmatpush2.msra.mxu0 0.0
    %1133 = vmatprep.subr.mxu0 0.0
    %1134 = vmatpush2.msra.mxu0 0.0
    %1135 = vmatprep.subr.mxu0 0.0
    %1136 = vmatpush2.msra.mxu0 0.0
    %1137 = vmatprep.subr.mxu0 0.0
    %1138 = vmatpush2.msra.mxu0 0.0
    %1139 = vmatprep.mubr.f32.mxu0 0.0
    %1140 = vmatmul.mubr.f32.gmra.mxu0 %v1070
    %v1141 = vpop.f32.mrf.mxu0
    %v1142 = vadd.f32 %v1068, %v1141
    %v1143 = vpop.f32.mrf.mxu0
    %1144 = vmatprep.mubr.f32.mxu0 0.0
    %1145 = vmatmul.mubr.f32.gmra.mxu0 %v1073
    %v1146 = vpop.f32.mrf.mxu0
    %v1147 = vadd.f32 %v1068, %v1146
    %v1148 = vpop.f32.mrf.mxu0
    %1149 = vdwg.mxu0
    %v1150 = vmul.f32 %v1142, %v1142
    %v1151 = vmul.f32 %v1147, %v1147
    %v1152 = vmul.f32 %v1142, %v1150
    %v1153 = vmul.f32 %v1147, %v1151
    %v1154 = vmul.f32 %v1152, 0.044715
    %v1155 = vmul.f32 %v1153, 0.044715
    %v1156 = vadd.f32 %v1142, %v1154
    %v1157 = vadd.f32 %v1147, %v1155
    %v1158 = vmul.f32 %v1156, 0.7978846
    %v1159 = vmul.f32 %v1157, 0.7978846
    %v1160 = vtanh.pop %v1158
    %v1161 = vtanh.pop %v1159
    %v1162 = vadd.f32 %v1160, 1.0
    %v1163 = vadd.f32 %v1161, 1.0
    %v1164 = vmul.f32 %v1162, 0.5
    %v1165 = vmul.f32 %v1163, 0.5
    %v1166 = vmul.f32 %v1142, %v1164
    %v1167 = vmul.f32 %v1147, %v1165
    %v1168 = vlaneseq
    %v1169 = vshrl.u32 %v1168, 7
    %v1170 = vsub.s32 0, %v1169
    %v1171 = vrot.slane %v165, %v1170
    %1172 = vmatprep.subr.mxu0 0.0
    %1173 = vmatpush1.msra.mxu0 %v159
    %1174 = vmatprep.subr.mxu0 0.0
    %1175 = vmatpush1.msra.mxu0 %v158
    %1176 = vmatprep.subr.mxu0 0.0
    %1177 = vmatpush1.msra.mxu0 %v157
    %1178 = vmatprep.subr.mxu0 0.0
    %1179 = vmatpush1.msra.mxu0 %v156
    %1180 = vmatprep.subr.mxu0 0.0
    %1181 = vmatpush1.msra.mxu0 %v155
    %1182 = vmatprep.subr.mxu0 0.0
    %1183 = vmatpush1.msra.mxu0 %v154
    %1184 = vmatprep.subr.mxu0 0.0
    %1185 = vmatpush1.msra.mxu0 %v153
    %1186 = vmatprep.subr.mxu0 0.0
    %1187 = vmatpush1.msra.mxu0 %v152
    %1188 = vmatprep.subr.mxu0 0.0
    %1189 = vmatpush1.msra.mxu0 %v151
    %1190 = vmatprep.subr.mxu0 0.0
    %1191 = vmatpush1.msra.mxu0 %v150
    %1192 = vmatprep.subr.mxu0 0.0
    %1193 = vmatpush1.msra.mxu0 %v149
    %1194 = vmatprep.subr.mxu0 0.0
    %1195 = vmatpush1.msra.mxu0 %v148
    %1196 = vmatprep.subr.mxu0 0.0
    %1197 = vmatpush1.msra.mxu0 %v147
    %1198 = vmatprep.subr.mxu0 0.0
    %1199 = vmatpush1.msra.mxu0 %v146
    %1200 = vmatprep.subr.mxu0 0.0
    %1201 = vmatpush1.msra.mxu0 %v145
    %1202 = vmatprep.subr.mxu0 0.0
    %1203 = vmatpush1.msra.mxu0 %v144
    %1204 = vmatprep.subr.mxu0 0.0
    %1205 = vmatpush2.msra.mxu0 0.0
    %1206 = vmatprep.subr.mxu0 0.0
    %1207 = vmatpush2.msra.mxu0 0.0
    %1208 = vmatprep.subr.mxu0 0.0
    %1209 = vmatpush2.msra.mxu0 0.0
    %1210 = vmatprep.subr.mxu0 0.0
    %1211 = vmatpush2.msra.mxu0 0.0
    %1212 = vmatprep.subr.mxu0 0.0
    %1213 = vmatpush2.msra.mxu0 0.0
    %1214 = vmatprep.subr.mxu0 0.0
    %1215 = vmatpush2.msra.mxu0 0.0
    %1216 = vmatprep.subr.mxu0 0.0
    %1217 = vmatpush2.msra.mxu0 0.0
    %1218 = vmatprep.subr.mxu0 0.0
    %1219 = vmatpush2.msra.mxu0 0.0
    %1220 = vmatprep.subr.mxu0 0.0
    %1221 = vmatpush2.msra.mxu0 0.0
    %1222 = vmatprep.subr.mxu0 0.0
    %1223 = vmatpush2.msra.mxu0 0.0
    %1224 = vmatprep.subr.mxu0 0.0
    %1225 = vmatpush2.msra.mxu0 0.0
    %1226 = vmatprep.subr.mxu0 0.0
    %1227 = vmatpush2.msra.mxu0 0.0
    %1228 = vmatprep.subr.mxu0 0.0
    %1229 = vmatpush2.msra.mxu0 0.0
    %1230 = vmatprep.subr.mxu0 0.0
    %1231 = vmatpush2.msra.mxu0 0.0
    %1232 = vmatprep.subr.mxu0 0.0
    %1233 = vmatpush2.msra.mxu0 0.0
    %1234 = vmatprep.subr.mxu0 0.0
    %1235 = vmatpush2.msra.mxu0 0.0
    %1236 = vmatprep.mubr.f32.mxu0 0.0
    %1237 = vmatmul.mubr.f32.gmra.mxu0 %v1166
    %v1238 = vpop.f32.mrf.mxu0
    %v1239 = vadd.f32 %v1171, %v1238
    %v1240 = vpop.f32.mrf.mxu0
    %1241 = vmatprep.mubr.f32.mxu0 0.0
    %1242 = vmatmul.mubr.f32.gmra.mxu0 %v1167
    %v1243 = vpop.f32.mrf.mxu0
    %v1244 = vadd.f32 %v1171, %v1243
    %v1245 = vpop.f32.mrf.mxu0
    %1246 = vdwg.mxu0
    %v1247 = vadd.f32 %v1239, %v1063
    %v1248 = vadd.f32 %v1244, %v1064
    %v1249 = vsel %vm58, %v1247, 0.0
    %1250 = vadd.xlane.f32.xlu0 %v1249
    %v1251 = vpop.xlane.xlu0 %1250
    %v1252 = vsel %vm58, %v1248, 0.0
    %1253 = vadd.xlane.f32.xlu0 %v1252
    %v1254 = vpop.xlane.xlu0 %1253
    %v1255 = vmul.f32 %v1251, %v65
    %v1256 = vmul.f32 %v1254, %v65
    %v1257 = vsub.f32 %v1247, %v1255
    %v1258 = vsub.f32 %v1248, %v1256
    %v1259 = vmul.f32 %v1257, %v1257
    %v1260 = vmul.f32 %v1258, %v1258
    %v1261 = vsel %vm58, %v1259, 0.0
    %1262 = vadd.xlane.f32.xlu0 %v1261
    %v1263 = vpop.xlane.xlu0 %1262
    %v1264 = vsel %vm58, %v1260, 0.0
    %1265 = vadd.xlane.f32.xlu0 %v1264
    %v1266 = vpop.xlane.xlu0 %1265
    %v1267 = vmul.f32 %v1263, %v65
    %v1268 = vmul.f32 %v1266, %v65
    %v1269 = vlaneseq
    %v1270 = vshrl.u32 %v1269, 7
    %v1271 = vsub.s32 0, %v1270
    %v1272 = vrot.slane %v166, %v1271
    %v1273 = vmul.f32 %v1272, %v1257
    %v1274 = vmul.f32 %v1272, %v1258
    %v1275 = vadd.f32 %v1267, 1e-12
    %v1276 = vadd.f32 %v1268, 1e-12
    %v1277 = vrsqrt.pop %v1275
    %v1278 = vrsqrt.pop %v1276
    %v1279 = vmul.f32 %v1273, %v1277
    %v1280 = vmul.f32 %v1274, %v1278
    %v1281 = vlaneseq
    %v1282 = vshrl.u32 %v1281, 7
    %v1283 = vsub.s32 0, %v1282
    %v1284 = vrot.slane %v167, %v1283
    %v1285 = vadd.f32 %v1279, %v1284
    %v1286 = vadd.f32 %v1280, %v1284
    %v1287 = vld [vmem:[#allocation8 + $0xf0] sm:$0xff]
    %v1288 = vld [vmem:[#allocation8 + $0xf8] sm:$0xff]
    %v1289 = vld [vmem:[#allocation8 + $0x100] sm:$0xff]
    %v1290 = vld [vmem:[#allocation8 + $0x108] sm:$0xff]
    %v1291 = vld [vmem:[#allocation8 + $0x110] sm:$0xff]
    %v1292 = vld [vmem:[#allocation8 + $0x118] sm:$0xff]
    %v1293 = vld [vmem:[#allocation8 + $0x120] sm:$0xff]
    %v1294 = vld [vmem:[#allocation8 + $0x128] sm:$0xff]
    %v1295 = vld [vmem:[#allocation8 + $0x130] sm:$0xff]
    %v1296 = vld [vmem:[#allocation8 + $0x138] sm:$0xff]
    %v1297 = vld [vmem:[#allocation8 + $0x140] sm:$0xff]
    %v1298 = vld [vmem:[#allocation8 + $0x148] sm:$0xff]
    %v1299 = vld [vmem:[#allocation8 + $0x150] sm:$0xff]
    %v1300 = vld [vmem:[#allocation8 + $0x158] sm:$0xff]
    %v1301 = vld [vmem:[#allocation8 + $0x160] sm:$0xff]
    %v1302 = vld [vmem:[#allocation8 + $0x168] sm:$0xff]
    %v1303 = vld [vmem:[#allocation8 + $0x170] sm:$0xff]
    %v1304 = vld [vmem:[#allocation8 + $0x178] sm:$0xff]
    %v1305 = vld [vmem:[#allocation8 + $0x180] sm:$0xff]
    %v1306 = vld [vmem:[#allocation8 + $0x188] sm:$0xff]
    %v1307 = vld [vmem:[#allocation8 + $0x190] sm:$0xff]
    %v1308 = vld [vmem:[#allocation8 + $0x198] sm:$0xff]
    %v1309 = vld [vmem:[#allocation8 + $0x1a0] sm:$0xff]
    %v1310 = vld [vmem:[#allocation8 + $0x1a8] sm:$0xff]
    %v1311 = vld [vmem:[#allocation8 + $0x1b0] sm:$0xff]
    %v1312 = vld [vmem:[#allocation8 + $0x1b8] sm:$0xff]
    %v1313 = vld [vmem:[#allocation8 + $0x1c0] sm:$0xff]
    %v1314 = vld [vmem:[#allocation8 + $0x1c8] sm:$0xff]
    %v1315 = vld [vmem:[#allocation8 + $0x1d0] sm:$0x1]
    %v1316 = vld [vmem:[#allocation8 + $0x1d1] sm:$0x1]
    %v1317 = vld [vmem:[#allocation8 + $0x1d2] sm:$0x1]
    %v1318 = vld [vmem:[#allocation8 + $0x1d3] sm:$0x1]
    %v1319 = vld [vmem:[#allocation8 + $0x1d4] sm:$0x1]
    %v1320 = vld [vmem:[#allocation8 + $0x1d5] sm:$0x1]
    %v1321 = vld [vmem:[#allocation8 + $0x1d6] sm:$0x1]
    %v1322 = vld [vmem:[#allocation8 + $0x1d7] sm:$0x1]
    %v1323 = vlaneseq
    %v1324 = vshrl.u32 %v1323, 7
    %v1325 = vsub.s32 0, %v1324
    %v1326 = vrot.slane %v1315, %v1325
    %v1328 = vsel %vm58, %v1285, 0
    %v1331 = vsel %vm58, %v1286, 0
    %1333 = vmatprep.subr.mxu0 0.0
    %1334 = vmatpush1.msra.mxu0 0.0
    %1335 = vmatprep.subr.mxu0 0.0
    %1336 = vmatpush1.msra.mxu0 0.0
    %1337 = vmatprep.subr.mxu0 0.0
    %1338 = vmatpush1.msra.mxu0 0.0
    %1339 = vmatprep.subr.mxu0 0.0
    %1340 = vmatpush1.msra.mxu0 0.0
    %1341 = vmatprep.subr.mxu0 0.0
    %1342 = vmatpush1.msra.mxu0 0.0
    %1343 = vmatprep.subr.mxu0 0.0
    %1344 = vmatpush1.msra.mxu0 0.0
    %1345 = vmatprep.subr.mxu0 0.0
    %1346 = vmatpush1.msra.mxu0 0.0
    %1347 = vmatprep.subr.mxu0 0.0
    %1348 = vmatpush1.msra.mxu0 0.0
    %1349 = vmatprep.subr.mxu0 0.0
    %1350 = vmatpush1.msra.mxu0 0.0
    %1351 = vmatprep.subr.mxu0 0.0
    %1352 = vmatpush1.msra.mxu0 0.0
    %1353 = vmatprep.subr.mxu0 0.0
    %1354 = vmatpush1.msra.mxu0 0.0
    %1355 = vmatprep.subr.mxu0 0.0
    %1356 = vmatpush1.msra.mxu0 0.0
    %1357 = vmatprep.subr.mxu0 0.0
    %1358 = vmatpush1.msra.mxu0 %v1290
    %1359 = vmatprep.subr.mxu0 0.0
    %1360 = vmatpush1.msra.mxu0 %v1289
    %1361 = vmatprep.subr.mxu0 0.0
    %1362 = vmatpush1.msra.mxu0 %v1288
    %1363 = vmatprep.subr.mxu0 0.0
    %1364 = vmatpush1.msra.mxu0 %v1287
    %1365 = vmatprep.subr.mxu0 0.0
    %1366 = vmatpush2.msra.mxu0 0.0
    %1367 = vmatprep.subr.mxu0 0.0
    %1368 = vmatpush2.msra.mxu0 0.0
    %1369 = vmatprep.subr.mxu0 0.0
    %1370 = vmatpush2.msra.mxu0 0.0
    %1371 = vmatprep.subr.mxu0 0.0
    %1372 = vmatpush2.msra.mxu0 0.0
    %1373 = vmatprep.subr.mxu0 0.0
    %1374 = vmatpush2.msra.mxu0 0.0
    %1375 = vmatprep.subr.mxu0 0.0
    %1376 = vmatpush2.msra.mxu0 0.0
    %1377 = vmatprep.subr.mxu0 0.0
    %1378 = vmatpush2.msra.mxu0 0.0
    %1379 = vmatprep.subr.mxu0 0.0
    %1380 = vmatpush2.msra.mxu0 0.0
    %1381 = vmatprep.subr.mxu0 0.0
    %1382 = vmatpush2.msra.mxu0 0.0
    %1383 = vmatprep.subr.mxu0 0.0
    %1384 = vmatpush2.msra.mxu0 0.0
    %1385 = vmatprep.subr.mxu0 0.0
    %1386 = vmatpush2.msra.mxu0 0.0
    %1387 = vmatprep.subr.mxu0 0.0
    %1388 = vmatpush2.msra.mxu0 0.0
    %1389 = vmatprep.subr.mxu0 0.0
    %1390 = vmatpush2.msra.mxu0 0.0
    %1391 = vmatprep.subr.mxu0 0.0
    %1392 = vmatpush2.msra.mxu0 0.0
    %1393 = vmatprep.subr.mxu0 0.0
    %1394 = vmatpush2.msra.mxu0 0.0
    %1395 = vmatprep.subr.mxu0 0.0
    %1396 = vmatpush2.msra.mxu0 0.0
    %1397 = vmatprep.mubr.f32.mxu0 0.0
    %1398 = vmatmul.mubr.f32.gmra.mxu0 %v1328
    %v1399 = vpop.f32.mrf.mxu0
    %v1400 = vadd.f32 %v1326, %v1399
    %v1401 = vpop.f32.mrf.mxu0
    %1402 = vmatprep.mubr.f32.mxu0 0.0
    %1403 = vmatmul.mubr.f32.gmra.mxu0 %v1331
    %v1404 = vpop.f32.mrf.mxu0
    %v1405 = vadd.f32 %v1326, %v1404
    %v1406 = vpop.f32.mrf.mxu0
    %1407 = vdwg.mxu0
    %1409 = vrot.lane.b32.xlu0 %v1400, 96
    %v1410 = vpop.permute.xlu0 %1409
    %v1411 = vsel %vm256, %v1400, 0
    %v1413 = vsel %vm256, %v1410, 0
    %1415 = vmatprep.subr.mxu0 0.0
    %1416 = vmatpush1.xpose.msra.mxu0 0.0
    %1417 = vmatprep.subr.mxu0 0.0
    %1418 = vmatpush1.xpose.msra.mxu0 0.0
    %1419 = vmatprep.subr.mxu0 0.0
    %1420 = vmatpush1.xpose.msra.mxu0 0.0
    %1421 = vmatprep.subr.mxu0 0.0
    %1422 = vmatpush1.xpose.msra.mxu0 0.0
    %1423 = vmatprep.subr.mxu0 0.0
    %1424 = vmatpush1.xpose.msra.mxu0 0.0
    %1425 = vmatprep.subr.mxu0 0.0
    %1426 = vmatpush1.xpose.msra.mxu0 0.0
    %1427 = vmatprep.subr.mxu0 0.0
    %1428 = vmatpush1.xpose.msra.mxu0 0.0
    %1429 = vmatprep.subr.mxu0 0.0
    %1430 = vmatpush1.xpose.msra.mxu0 0.0
    %1431 = vmatprep.subr.mxu0 0.0
    %1432 = vmatpush1.xpose.msra.mxu0 0.0
    %1433 = vmatprep.subr.mxu0 0.0
    %1434 = vmatpush1.xpose.msra.mxu0 0.0
    %1435 = vmatprep.subr.mxu0 0.0
    %1436 = vmatpush1.xpose.msra.mxu0 0.0
    %1437 = vmatprep.subr.mxu0 0.0
    %1438 = vmatpush1.xpose.msra.mxu0 0.0
    %1439 = vmatprep.subr.mxu0 0.0
    %1440 = vmatpush1.xpose.msra.mxu0 0.0
    %1441 = vmatprep.subr.mxu0 0.0
    %1442 = vmatpush1.xpose.msra.mxu0 0.0
    %1443 = vmatprep.subr.mxu0 0.0
    %1444 = vmatpush1.xpose.msra.mxu0 0.0
    %1445 = vmatprep.subr.mxu0 0.0
    %1446 = vmatpush1.xpose.msra.mxu0 %v1413
    %1447 = vmatprep.subr.mxu0 0.0
    %1448 = vmatpush2.xpose.msra.mxu0 0.0
    %1449 = vmatprep.subr.mxu0 0.0
    %1450 = vmatpush2.xpose.msra.mxu0 0.0
    %1451 = vmatprep.subr.mxu0 0.0
    %1452 = vmatpush2.xpose.msra.mxu0 0.0
    %1453 = vmatprep.subr.mxu0 0.0
    %1454 = vmatpush2.xpose.msra.mxu0 0.0
    %1455 = vmatprep.subr.mxu0 0.0
    %1456 = vmatpush2.xpose.msra.mxu0 0.0
    %1457 = vmatprep.subr.mxu0 0.0
    %1458 = vmatpush2.xpose.msra.mxu0 0.0
    %1459 = vmatprep.subr.mxu0 0.0
    %1460 = vmatpush2.xpose.msra.mxu0 0.0
    %1461 = vmatprep.subr.mxu0 0.0
    %1462 = vmatpush2.xpose.msra.mxu0 0.0
    %1463 = vmatprep.subr.mxu0 0.0
    %1464 = vmatpush2.xpose.msra.mxu0 0.0
    %1465 = vmatprep.subr.mxu0 0.0
    %1466 = vmatpush2.xpose.msra.mxu0 0.0
    %1467 = vmatprep.subr.mxu0 0.0
    %1468 = vmatpush2.xpose.msra.mxu0 0.0
    %1469 = vmatprep.subr.mxu0 0.0
    %1470 = vmatpush2.xpose.msra.mxu0 0.0
    %1471 = vmatprep.subr.mxu0 0.0
    %1472 = vmatpush2.xpose.msra.mxu0 0.0
    %1473 = vmatprep.subr.mxu0 0.0
    %1474 = vmatpush2.xpose.msra.mxu0 0.0
    %1475 = vmatprep.subr.mxu0 0.0
    %1476 = vmatpush2.xpose.msra.mxu0 0.0
    %1477 = vmatprep.subr.mxu0 0.0
    %1478 = vmatpush2.xpose.msra.mxu0 0.0
    %1479 = vmatprep.mubr.f32.mxu0 0.0
    %1480 = vmatmul.mubr.f32.gmra.mxu0 %v1411
    %v1481 = vpop.f32.mrf.mxu0
    %v1482 = vadd.f32 0.0, %v1481
    %v1483 = vpop.f32.mrf.mxu0
    %1484 = vdwg.mxu0
    %v1485 = vmul.f32 %v1482, 0.25
    %v1486 = vadd.f32 %v1485, %v114
    %v1487 = vsel %vm333, %v1486, -inf
    %1488 = vmax.xlane.f32.xlu0 %v1487
    %v1489 = vpop.xlane.xlu0 %1488
    %v1490 = vsub.f32 %v1486, %v1489
    %v1491 = vmul.f32 %v1490, 1.442695
    %v1492 = vpow.pop %v1491
    %v1493 = vsel %vm333, %v1492, 0.0
    %1494 = vadd.xlane.f32.xlu0 %v1493
    %v1495 = vpop.xlane.xlu0 %1494
    %v1496 = vrcp.pop %v1495
    %v1497 = vmul.f32 %v1496, %v119
    %v1498 = vmul.f32 %v1492, %v1497
    %1499 = vrot.lane.b32.xlu0 %v1400, 64
    %v1500 = vpop.permute.xlu0 %1499
    %v1503 = vsel %vm333, %v1498, 0
    %1505 = vmatprep.subr.mxu0 0.0
    %1506 = vmatpush1.msra.mxu0 0.0
    %1507 = vmatprep.subr.mxu0 0.0
    %1508 = vmatpush1.msra.mxu0 0.0
    %1509 = vmatprep.subr.mxu0 0.0
    %1510 = vmatpush1.msra.mxu0 0.0
    %1511 = vmatprep.subr.mxu0 0.0
    %1512 = vmatpush1.msra.mxu0 0.0
    %1513 = vmatprep.subr.mxu0 0.0
    %1514 = vmatpush1.msra.mxu0 0.0
    %1515 = vmatprep.subr.mxu0 0.0
    %1516 = vmatpush1.msra.mxu0 0.0
    %1517 = vmatprep.subr.mxu0 0.0
    %1518 = vmatpush1.msra.mxu0 0.0
    %1519 = vmatprep.subr.mxu0 0.0
    %1520 = vmatpush1.msra.mxu0 0.0
    %1521 = vmatprep.subr.mxu0 0.0
    %1522 = vmatpush1.msra.mxu0 0.0
    %1523 = vmatprep.subr.mxu0 0.0
    %1524 = vmatpush1.msra.mxu0 0.0
    %1525 = vmatprep.subr.mxu0 0.0
    %1526 = vmatpush1.msra.mxu0 0.0
    %1527 = vmatprep.subr.mxu0 0.0
    %1528 = vmatpush1.msra.mxu0 0.0
    %1529 = vmatprep.subr.mxu0 0.0
    %1530 = vmatpush1.msra.mxu0 0.0
    %1531 = vmatprep.subr.mxu0 0.0
    %1532 = vmatpush1.msra.mxu0 0.0
    %1533 = vmatprep.subr.mxu0 0.0
    %1534 = vmatpush1.msra.mxu0 0.0
    %1535 = vmatprep.subr.mxu0 0.0
    %1536 = vmatpush1.msra.mxu0 %v1500
    %1537 = vmatprep.subr.mxu0 0.0
    %1538 = vmatpush2.msra.mxu0 0.0
    %1539 = vmatprep.subr.mxu0 0.0
    %1540 = vmatpush2.msra.mxu0 0.0
    %1541 = vmatprep.subr.mxu0 0.0
    %1542 = vmatpush2.msra.mxu0 0.0
    %1543 = vmatprep.subr.mxu0 0.0
    %1544 = vmatpush2.msra.mxu0 0.0
    %1545 = vmatprep.subr.mxu0 0.0
    %1546 = vmatpush2.msra.mxu0 0.0
    %1547 = vmatprep.subr.mxu0 0.0
    %1548 = vmatpush2.msra.mxu0 0.0
    %1549 = vmatprep.subr.mxu0 0.0
    %1550 = vmatpush2.msra.mxu0 0.0
    %1551 = vmatprep.subr.mxu0 0.0
    %1552 = vmatpush2.msra.mxu0 0.0
    %1553 = vmatprep.subr.mxu0 0.0
    %1554 = vmatpush2.msra.mxu0 0.0
    %1555 = vmatprep.subr.mxu0 0.0
    %1556 = vmatpush2.msra.mxu0 0.0
    %1557 = vmatprep.subr.mxu0 0.0
    %1558 = vmatpush2.msra.mxu0 0.0
    %1559 = vmatprep.subr.mxu0 0.0
    %1560 = vmatpush2.msra.mxu0 0.0
    %1561 = vmatprep.subr.mxu0 0.0
    %1562 = vmatpush2.msra.mxu0 0.0
    %1563 = vmatprep.subr.mxu0 0.0
    %1564 = vmatpush2.msra.mxu0 0.0
    %1565 = vmatprep.subr.mxu0 0.0
    %1566 = vmatpush2.msra.mxu0 0.0
    %1567 = vmatprep.subr.mxu0 0.0
    %1568 = vmatpush2.msra.mxu0 0.0
    %1569 = vmatprep.mubr.f32.mxu0 0.0
    %1570 = vmatmul.mubr.f32.gmra.mxu0 %v1503
    %v1571 = vpop.f32.mrf.mxu0
    %v1572 = vadd.f32 0.0, %v1571
    %v1573 = vpop.f32.mrf.mxu0
    %1574 = vdwg.mxu0
    %1575 = vst.msk [vmem:[#allocation2] sm:$0xff] %vm256, %v1572
    %1576 = vrot.lane.b32.xlu0 %v1400, 112
    %v1577 = vpop.permute.xlu0 %1576
    %1578 = vrot.lane.b32.xlu0 %v1400, 80
    %v1579 = vpop.permute.xlu0 %1578
    %v1580 = vsel %vm256, %v1577, 0
    %v1582 = vsel %vm256, %v1579, 0
    %1584 = vmatprep.subr.mxu0 0.0
    %1585 = vmatpush1.xpose.msra.mxu0 0.0
    %1586 = vmatprep.subr.mxu0 0.0
    %1587 = vmatpush1.xpose.msra.mxu0 0.0
    %1588 = vmatprep.subr.mxu0 0.0
    %1589 = vmatpush1.xpose.msra.mxu0 0.0
    %1590 = vmatprep.subr.mxu0 0.0
    %1591 = vmatpush1.xpose.msra.mxu0 0.0
    %1592 = vmatprep.subr.mxu0 0.0
    %1593 = vmatpush1.xpose.msra.mxu0 0.0
    %1594 = vmatprep.subr.mxu0 0.0
    %1595 = vmatpush1.xpose.msra.mxu0 0.0
    %1596 = vmatprep.subr.mxu0 0.0
    %1597 = vmatpush1.xpose.msra.mxu0 0.0
    %1598 = vmatprep.subr.mxu0 0.0
    %1599 = vmatpush1.xpose.msra.mxu0 0.0
    %1600 = vmatprep.subr.mxu0 0.0
    %1601 = vmatpush1.xpose.msra.mxu0 0.0
    %1602 = vmatprep.subr.mxu0 0.0
    %1603 = vmatpush1.xpose.msra.mxu0 0.0
    %1604 = vmatprep.subr.mxu0 0.0
    %1605 = vmatpush1.xpose.msra.mxu0 0.0
    %1606 = vmatprep.subr.mxu0 0.0
    %1607 = vmatpush1.xpose.msra.mxu0 0.0
    %1608 = vmatprep.subr.mxu0 0.0
    %1609 = vmatpush1.xpose.msra.mxu0 0.0
    %1610 = vmatprep.subr.mxu0 0.0
    %1611 = vmatpush1.xpose.msra.mxu0 0.0
    %1612 = vmatprep.subr.mxu0 0.0
    %1613 = vmatpush1.xpose.msra.mxu0 0.0
    %1614 = vmatprep.subr.mxu0 0.0
    %1615 = vmatpush1.xpose.msra.mxu0 %v1582
    %1616 = vmatprep.subr.mxu0 0.0
    %1617 = vmatpush2.xpose.msra.mxu0 0.0
    %1618 = vmatprep.subr.mxu0 0.0
    %1619 = vmatpush2.xpose.msra.mxu0 0.0
    %1620 = vmatprep.subr.mxu0 0.0
    %1621 = vmatpush2.xpose.msra.mxu0 0.0
    %1622 = vmatprep.subr.mxu0 0.0
    %1623 = vmatpush2.xpose.msra.mxu0 0.0
    %1624 = vmatprep.subr.mxu0 0.0
    %1625 = vmatpush2.xpose.msra.mxu0 0.0
    %1626 = vmatprep.subr.mxu0 0.0
    %1627 = vmatpush2.xpose.msra.mxu0 0.0
    %1628 = vmatprep.subr.mxu0 0.0
    %1629 = vmatpush2.xpose.msra.mxu0 0.0
    %1630 = vmatprep.subr.mxu0 0.0
    %1631 = vmatpush2.xpose.msra.mxu0 0.0
    %1632 = vmatprep.subr.mxu0 0.0
    %1633 = vmatpush2.xpose.msra.mxu0 0.0
    %1634 = vmatprep.subr.mxu0 0.0
    %1635 = vmatpush2.xpose.msra.mxu0 0.0
    %1636 = vmatprep.subr.mxu0 0.0
    %1637 = vmatpush2.xpose.msra.mxu0 0.0
    %1638 = vmatprep.subr.mxu0 0.0
    %1639 = vmatpush2.xpose.msra.mxu0 0.0
    %1640 = vmatprep.subr.mxu0 0.0
    %1641 = vmatpush2.xpose.msra.mxu0 0.0
    %1642 = vmatprep.subr.mxu0 0.0
    %1643 = vmatpush2.xpose.msra.mxu0 0.0
    %1644 = vmatprep.subr.mxu0 0.0
    %1645 = vmatpush2.xpose.msra.mxu0 0.0
    %1646 = vmatprep.subr.mxu0 0.0
    %1647 = vmatpush2.xpose.msra.mxu0 0.0
    %1648 = vmatprep.mubr.f32.mxu0 0.0
    %1649 = vmatmul.mubr.f32.gmra.mxu0 %v1580
    %v1650 = vpop.f32.mrf.mxu0
    %v1651 = vadd.f32 0.0, %v1650
    %v1652 = vpop.f32.mrf.mxu0
    %1653 = vdwg.mxu0
    %v1654 = vmul.f32 %v1651, 0.25
    %v1655 = vadd.f32 %v1654, %v114
    %v1656 = vsel %vm333, %v1655, -inf
    %1657 = vmax.xlane.f32.xlu0 %v1656
    %v1658 = vpop.xlane.xlu0 %1657
    %v1659 = vsub.f32 %v1655, %v1658
    %v1660 = vmul.f32 %v1659, 1.442695
    %v1661 = vpow.pop %v1660
    %v1662 = vsel %vm333, %v1661, 0.0
    %1663 = vadd.xlane.f32.xlu0 %v1662
    %v1664 = vpop.xlane.xlu0 %1663
    %v1665 = vrcp.pop %v1664
    %v1666 = vmul.f32 %v1665, %v119
    %v1667 = vmul.f32 %v1661, %v1666
    %1668 = vrot.lane.b32.xlu0 %v1400, 48
    %v1669 = vpop.permute.xlu0 %1668
    %v1672 = vsel %vm333, %v1667, 0
    %1674 = vmatprep.subr.mxu0 0.0
    %1675 = vmatpush1.msra.mxu0 0.0
    %1676 = vmatprep.subr.mxu0 0.0
    %1677 = vmatpush1.msra.mxu0 0.0
    %1678 = vmatprep.subr.mxu0 0.0
    %1679 = vmatpush1.msra.mxu0 0.0
    %1680 = vmatprep.subr.mxu0 0.0
    %1681 = vmatpush1.msra.mxu0 0.0
    %1682 = vmatprep.subr.mxu0 0.0
    %1683 = vmatpush1.msra.mxu0 0.0
    %1684 = vmatprep.subr.mxu0 0.0
    %1685 = vmatpush1.msra.mxu0 0.0
    %1686 = vmatprep.subr.mxu0 0.0
    %1687 = vmatpush1.msra.mxu0 0.0
    %1688 = vmatprep.subr.mxu0 0.0
    %1689 = vmatpush1.msra.mxu0 0.0
    %1690 = vmatprep.subr.mxu0 0.0
    %1691 = vmatpush1.msra.mxu0 0.0
    %1692 = vmatprep.subr.mxu0 0.0
    %1693 = vmatpush1.msra.mxu0 0.0
    %1694 = vmatprep.subr.mxu0 0.0
    %1695 = vmatpush1.msra.mxu0 0.0
    %1696 = vmatprep.subr.mxu0 0.0
    %1697 = vmatpush1.msra.mxu0 0.0
    %1698 = vmatprep.subr.mxu0 0.0
    %1699 = vmatpush1.msra.mxu0 0.0
    %1700 = vmatprep.subr.mxu0 0.0
    %1701 = vmatpush1.msra.mxu0 0.0
    %1702 = vmatprep.subr.mxu0 0.0
    %1703 = vmatpush1.msra.mxu0 0.0
    %1704 = vmatprep.subr.mxu0 0.0
    %1705 = vmatpush1.msra.mxu0 %v1669
    %1706 = vmatprep.subr.mxu0 0.0
    %1707 = vmatpush2.msra.mxu0 0.0
    %1708 = vmatprep.subr.mxu0 0.0
    %1709 = vmatpush2.msra.mxu0 0.0
    %1710 = vmatprep.subr.mxu0 0.0
    %1711 = vmatpush2.msra.mxu0 0.0
    %1712 = vmatprep.subr.mxu0 0.0
    %1713 = vmatpush2.msra.mxu0 0.0
    %1714 = vmatprep.subr.mxu0 0.0
    %1715 = vmatpush2.msra.mxu0 0.0
    %1716 = vmatprep.subr.mxu0 0.0
    %1717 = vmatpush2.msra.mxu0 0.0
    %1718 = vmatprep.subr.mxu0 0.0
    %1719 = vmatpush2.msra.mxu0 0.0
    %1720 = vmatprep.subr.mxu0 0.0
    %1721 = vmatpush2.msra.mxu0 0.0
    %1722 = vmatprep.subr.mxu0 0.0
    %1723 = vmatpush2.msra.mxu0 0.0
    %1724 = vmatprep.subr.mxu0 0.0
    %1725 = vmatpush2.msra.mxu0 0.0
    %1726 = vmatprep.subr.mxu0 0.0
    %1727 = vmatpush2.msra.mxu0 0.0
    %1728 = vmatprep.subr.mxu0 0.0
    %1729 = vmatpush2.msra.mxu0 0.0
    %1730 = vmatprep.subr.mxu0 0.0
    %1731 = vmatpush2.msra.mxu0 0.0
    %1732 = vmatprep.subr.mxu0 0.0
    %1733 = vmatpush2.msra.mxu0 0.0
    %1734 = vmatprep.subr.mxu0 0.0
    %1735 = vmatpush2.msra.mxu0 0.0
    %1736 = vmatprep.subr.mxu0 0.0
    %1737 = vmatpush2.msra.mxu0 0.0
    %1738 = vmatprep.mubr.f32.mxu0 0.0
    %1739 = vmatmul.mubr.f32.gmra.mxu0 %v1672
    %v1740 = vpop.f32.mrf.mxu0
    %v1741 = vadd.f32 0.0, %v1740
    %v1742 = vpop.f32.mrf.mxu0
    %1743 = vdwg.mxu0
    %1745 = vrot.lane.b32.xlu0 %v1741, 16
    %v1746 = vpop.permute.xlu0 %1745
    %1748 = vst.msk [vmem:[#allocation2] sm:$0xff] %vm595, %v1746
    %1750 = vrot.lane.b32.xlu0 %v1405, 96
    %v1751 = vpop.permute.xlu0 %1750
    %v1752 = vsel %vm256, %v1405, 0
    %v1754 = vsel %vm256, %v1751, 0
    %1756 = vmatprep.subr.mxu0 0.0
    %1757 = vmatpush1.xpose.msra.mxu0 0.0
    %1758 = vmatprep.subr.mxu0 0.0
    %1759 = vmatpush1.xpose.msra.mxu0 0.0
    %1760 = vmatprep.subr.mxu0 0.0
    %1761 = vmatpush1.xpose.msra.mxu0 0.0
    %1762 = vmatprep.subr.mxu0 0.0
    %1763 = vmatpush1.xpose.msra.mxu0 0.0
    %1764 = vmatprep.subr.mxu0 0.0
    %1765 = vmatpush1.xpose.msra.mxu0 0.0
    %1766 = vmatprep.subr.mxu0 0.0
    %1767 = vmatpush1.xpose.msra.mxu0 0.0
    %1768 = vmatprep.subr.mxu0 0.0
    %1769 = vmatpush1.xpose.msra.mxu0 0.0
    %1770 = vmatprep.subr.mxu0 0.0
    %1771 = vmatpush1.xpose.msra.mxu0 0.0
    %1772 = vmatprep.subr.mxu0 0.0
    %1773 = vmatpush1.xpose.msra.mxu0 0.0
    %1774 = vmatprep.subr.mxu0 0.0
    %1775 = vmatpush1.xpose.msra.mxu0 0.0
    %1776 = vmatprep.subr.mxu0 0.0
    %1777 = vmatpush1.xpose.msra.mxu0 0.0
    %1778 = vmatprep.subr.mxu0 0.0
    %1779 = vmatpush1.xpose.msra.mxu0 0.0
    %1780 = vmatprep.subr.mxu0 0.0
    %1781 = vmatpush1.xpose.msra.mxu0 0.0
    %1782 = vmatprep.subr.mxu0 0.0
    %1783 = vmatpush1.xpose.msra.mxu0 0.0
    %1784 = vmatprep.subr.mxu0 0.0
    %1785 = vmatpush1.xpose.msra.mxu0 0.0
    %1786 = vmatprep.subr.mxu0 0.0
    %1787 = vmatpush1.xpose.msra.mxu0 %v1754
    %1788 = vmatprep.subr.mxu0 0.0
    %1789 = vmatpush2.xpose.msra.mxu0 0.0
    %1790 = vmatprep.subr.mxu0 0.0
    %1791 = vmatpush2.xpose.msra.mxu0 0.0
    %1792 = vmatprep.subr.mxu0 0.0
    %1793 = vmatpush2.xpose.msra.mxu0 0.0
    %1794 = vmatprep.subr.mxu0 0.0
    %1795 = vmatpush2.xpose.msra.mxu0 0.0
    %1796 = vmatprep.subr.mxu0 0.0
    %1797 = vmatpush2.xpose.msra.mxu0 0.0
    %1798 = vmatprep.subr.mxu0 0.0
    %1799 = vmatpush2.xpose.msra.mxu0 0.0
    %1800 = vmatprep.subr.mxu0 0.0
    %1801 = vmatpush2.xpose.msra.mxu0 0.0
    %1802 = vmatprep.subr.mxu0 0.0
    %1803 = vmatpush2.xpose.msra.mxu0 0.0
    %1804 = vmatprep.subr.mxu0 0.0
    %1805 = vmatpush2.xpose.msra.mxu0 0.0
    %1806 = vmatprep.subr.mxu0 0.0
    %1807 = vmatpush2.xpose.msra.mxu0 0.0
    %1808 = vmatprep.subr.mxu0 0.0
    %1809 = vmatpush2.xpose.msra.mxu0 0.0
    %1810 = vmatprep.subr.mxu0 0.0
    %1811 = vmatpush2.xpose.msra.mxu0 0.0
    %1812 = vmatprep.subr.mxu0 0.0
    %1813 = vmatpush2.xpose.msra.mxu0 0.0
    %1814 = vmatprep.subr.mxu0 0.0
    %1815 = vmatpush2.xpose.msra.mxu0 0.0
    %1816 = vmatprep.subr.mxu0 0.0
    %1817 = vmatpush2.xpose.msra.mxu0 0.0
    %1818 = vmatprep.subr.mxu0 0.0
    %1819 = vmatpush2.xpose.msra.mxu0 0.0
    %1820 = vmatprep.mubr.f32.mxu0 0.0
    %1821 = vmatmul.mubr.f32.gmra.mxu0 %v1752
    %v1822 = vpop.f32.mrf.mxu0
    %v1823 = vadd.f32 0.0, %v1822
    %v1824 = vpop.f32.mrf.mxu0
    %1825 = vdwg.mxu0
    %v1826 = vmul.f32 %v1823, 0.25
    %v1827 = vadd.f32 %v1826, %v126
    %v1828 = vsel %vm333, %v1827, -inf
    %1829 = vmax.xlane.f32.xlu0 %v1828
    %v1830 = vpop.xlane.xlu0 %1829
    %v1831 = vsub.f32 %v1827, %v1830
    %v1832 = vmul.f32 %v1831, 1.442695
    %v1833 = vpow.pop %v1832
    %v1834 = vsel %vm333, %v1833, 0.0
    %1835 = vadd.xlane.f32.xlu0 %v1834
    %v1836 = vpop.xlane.xlu0 %1835
    %v1837 = vrcp.pop %v1836
    %v1838 = vmul.f32 %v1837, %v131
    %v1839 = vmul.f32 %v1833, %v1838
    %1840 = vrot.lane.b32.xlu0 %v1405, 64
    %v1841 = vpop.permute.xlu0 %1840
    %v1844 = vsel %vm333, %v1839, 0
    %1846 = vmatprep.subr.mxu0 0.0
    %1847 = vmatpush1.msra.mxu0 0.0
    %1848 = vmatprep.subr.mxu0 0.0
    %1849 = vmatpush1.msra.mxu0 0.0
    %1850 = vmatprep.subr.mxu0 0.0
    %1851 = vmatpush1.msra.mxu0 0.0
    %1852 = vmatprep.subr.mxu0 0.0
    %1853 = vmatpush1.msra.mxu0 0.0
    %1854 = vmatprep.subr.mxu0 0.0
    %1855 = vmatpush1.msra.mxu0 0.0
    %1856 = vmatprep.subr.mxu0 0.0
    %1857 = vmatpush1.msra.mxu0 0.0
    %1858 = vmatprep.subr.mxu0 0.0
    %1859 = vmatpush1.msra.mxu0 0.0
    %1860 = vmatprep.subr.mxu0 0.0
    %1861 = vmatpush1.msra.mxu0 0.0
    %1862 = vmatprep.subr.mxu0 0.0
    %1863 = vmatpush1.msra.mxu0 0.0
    %1864 = vmatprep.subr.mxu0 0.0
    %1865 = vmatpush1.msra.mxu0 0.0
    %1866 = vmatprep.subr.mxu0 0.0
    %1867 = vmatpush1.msra.mxu0 0.0
    %1868 = vmatprep.subr.mxu0 0.0
    %1869 = vmatpush1.msra.mxu0 0.0
    %1870 = vmatprep.subr.mxu0 0.0
    %1871 = vmatpush1.msra.mxu0 0.0
    %1872 = vmatprep.subr.mxu0 0.0
    %1873 = vmatpush1.msra.mxu0 0.0
    %1874 = vmatprep.subr.mxu0 0.0
    %1875 = vmatpush1.msra.mxu0 0.0
    %1876 = vmatprep.subr.mxu0 0.0
    %1877 = vmatpush1.msra.mxu0 %v1841
    %1878 = vmatprep.subr.mxu0 0.0
    %1879 = vmatpush2.msra.mxu0 0.0
    %1880 = vmatprep.subr.mxu0 0.0
    %1881 = vmatpush2.msra.mxu0 0.0
    %1882 = vmatprep.subr.mxu0 0.0
    %1883 = vmatpush2.msra.mxu0 0.0
    %1884 = vmatprep.subr.mxu0 0.0
    %1885 = vmatpush2.msra.mxu0 0.0
    %1886 = vmatprep.subr.mxu0 0.0
    %1887 = vmatpush2.msra.mxu0 0.0
    %1888 = vmatprep.subr.mxu0 0.0
    %1889 = vmatpush2.msra.mxu0 0.0
    %1890 = vmatprep.subr.mxu0 0.0
    %1891 = vmatpush2.msra.mxu0 0.0
    %1892 = vmatprep.subr.mxu0 0.0
    %1893 = vmatpush2.msra.mxu0 0.0
    %1894 = vmatprep.subr.mxu0 0.0
    %1895 = vmatpush2.msra.mxu0 0.0
    %1896 = vmatprep.subr.mxu0 0.0
    %1897 = vmatpush2.msra.mxu0 0.0
    %1898 = vmatprep.subr.mxu0 0.0
    %1899 = vmatpush2.msra.mxu0 0.0
    %1900 = vmatprep.subr.mxu0 0.0
    %1901 = vmatpush2.msra.mxu0 0.0
    %1902 = vmatprep.subr.mxu0 0.0
    %1903 = vmatpush2.msra.mxu0 0.0
    %1904 = vmatprep.subr.mxu0 0.0
    %1905 = vmatpush2.msra.mxu0 0.0
    %1906 = vmatprep.subr.mxu0 0.0
    %1907 = vmatpush2.msra.mxu0 0.0
    %1908 = vmatprep.subr.mxu0 0.0
    %1909 = vmatpush2.msra.mxu0 0.0
    %1910 = vmatprep.mubr.f32.mxu0 0.0
    %1911 = vmatmul.mubr.f32.gmra.mxu0 %v1844
    %v1912 = vpop.f32.mrf.mxu0
    %v1913 = vadd.f32 0.0, %v1912
    %v1914 = vpop.f32.mrf.mxu0
    %1915 = vdwg.mxu0
    %1916 = vst.msk [vmem:[#allocation2 + $0x8] sm:$0xff] %vm256, %v1913
    %1917 = vrot.lane.b32.xlu0 %v1405, 112
    %v1918 = vpop.permute.xlu0 %1917
    %1919 = vrot.lane.b32.xlu0 %v1405, 80
    %v1920 = vpop.permute.xlu0 %1919
    %v1921 = vsel %vm256, %v1918, 0
    %v1923 = vsel %vm256, %v1920, 0
    %1925 = vmatprep.subr.mxu0 0.0
    %1926 = vmatpush1.xpose.msra.mxu0 0.0
    %1927 = vmatprep.subr.mxu0 0.0
    %1928 = vmatpush1.xpose.msra.mxu0 0.0
    %1929 = vmatprep.subr.mxu0 0.0
    %1930 = vmatpush1.xpose.msra.mxu0 0.0
    %1931 = vmatprep.subr.mxu0 0.0
    %1932 = vmatpush1.xpose.msra.mxu0 0.0
    %1933 = vmatprep.subr.mxu0 0.0
    %1934 = vmatpush1.xpose.msra.mxu0 0.0
    %1935 = vmatprep.subr.mxu0 0.0
    %1936 = vmatpush1.xpose.msra.mxu0 0.0
    %1937 = vmatprep.subr.mxu0 0.0
    %1938 = vmatpush1.xpose.msra.mxu0 0.0
    %1939 = vmatprep.subr.mxu0 0.0
    %1940 = vmatpush1.xpose.msra.mxu0 0.0
    %1941 = vmatprep.subr.mxu0 0.0
    %1942 = vmatpush1.xpose.msra.mxu0 0.0
    %1943 = vmatprep.subr.mxu0 0.0
    %1944 = vmatpush1.xpose.msra.mxu0 0.0
    %1945 = vmatprep.subr.mxu0 0.0
    %1946 = vmatpush1.xpose.msra.mxu0 0.0
    %1947 = vmatprep.subr.mxu0 0.0
    %1948 = vmatpush1.xpose.msra.mxu0 0.0
    %1949 = vmatprep.subr.mxu0 0.0
    %1950 = vmatpush1.xpose.msra.mxu0 0.0
    %1951 = vmatprep.subr.mxu0 0.0
    %1952 = vmatpush1.xpose.msra.mxu0 0.0
    %1953 = vmatprep.subr.mxu0 0.0
    %1954 = vmatpush1.xpose.msra.mxu0 0.0
    %1955 = vmatprep.subr.mxu0 0.0
    %1956 = vmatpush1.xpose.msra.mxu0 %v1923
    %1957 = vmatprep.subr.mxu0 0.0
    %1958 = vmatpush2.xpose.msra.mxu0 0.0
    %1959 = vmatprep.subr.mxu0 0.0
    %1960 = vmatpush2.xpose.msra.mxu0 0.0
    %1961 = vmatprep.subr.mxu0 0.0
    %1962 = vmatpush2.xpose.msra.mxu0 0.0
    %1963 = vmatprep.subr.mxu0 0.0
    %1964 = vmatpush2.xpose.msra.mxu0 0.0
    %1965 = vmatprep.subr.mxu0 0.0
    %1966 = vmatpush2.xpose.msra.mxu0 0.0
    %1967 = vmatprep.subr.mxu0 0.0
    %1968 = vmatpush2.xpose.msra.mxu0 0.0
    %1969 = vmatprep.subr.mxu0 0.0
    %1970 = vmatpush2.xpose.msra.mxu0 0.0
    %1971 = vmatprep.subr.mxu0 0.0
    %1972 = vmatpush2.xpose.msra.mxu0 0.0
    %1973 = vmatprep.subr.mxu0 0.0
    %1974 = vmatpush2.xpose.msra.mxu0 0.0
    %1975 = vmatprep.subr.mxu0 0.0
    %1976 = vmatpush2.xpose.msra.mxu0 0.0
    %1977 = vmatprep.subr.mxu0 0.0
    %1978 = vmatpush2.xpose.msra.mxu0 0.0
    %1979 = vmatprep.subr.mxu0 0.0
    %1980 = vmatpush2.xpose.msra.mxu0 0.0
    %1981 = vmatprep.subr.mxu0 0.0
    %1982 = vmatpush2.xpose.msra.mxu0 0.0
    %1983 = vmatprep.subr.mxu0 0.0
    %1984 = vmatpush2.xpose.msra.mxu0 0.0
    %1985 = vmatprep.subr.mxu0 0.0
    %1986 = vmatpush2.xpose.msra.mxu0 0.0
    %1987 = vmatprep.subr.mxu0 0.0
    %1988 = vmatpush2.xpose.msra.mxu0 0.0
    %1989 = vmatprep.mubr.f32.mxu0 0.0
    %1990 = vmatmul.mubr.f32.gmra.mxu0 %v1921
    %v1991 = vpop.f32.mrf.mxu0
    %v1992 = vadd.f32 0.0, %v1991
    %v1993 = vpop.f32.mrf.mxu0
    %1994 = vdwg.mxu0
    %v1995 = vmul.f32 %v1992, 0.25
    %v1996 = vadd.f32 %v1995, %v126
    %v1997 = vsel %vm333, %v1996, -inf
    %1998 = vmax.xlane.f32.xlu0 %v1997
    %v1999 = vpop.xlane.xlu0 %1998
    %v2000 = vsub.f32 %v1996, %v1999
    %v2001 = vmul.f32 %v2000, 1.442695
    %v2002 = vpow.pop %v2001
    %v2003 = vsel %vm333, %v2002, 0.0
    %2004 = vadd.xlane.f32.xlu0 %v2003
    %v2005 = vpop.xlane.xlu0 %2004
    %v2006 = vrcp.pop %v2005
    %v2007 = vmul.f32 %v2006, %v131
    %v2008 = vmul.f32 %v2002, %v2007
    %2009 = vrot.lane.b32.xlu0 %v1405, 48
    %v2010 = vpop.permute.xlu0 %2009
    %v2013 = vsel %vm333, %v2008, 0
    %2015 = vmatprep.subr.mxu0 0.0
    %2016 = vmatpush1.msra.mxu0 0.0
    %2017 = vmatprep.subr.mxu0 0.0
    %2018 = vmatpush1.msra.mxu0 0.0
    %2019 = vmatprep.subr.mxu0 0.0
    %2020 = vmatpush1.msra.mxu0 0.0
    %2021 = vmatprep.subr.mxu0 0.0
    %2022 = vmatpush1.msra.mxu0 0.0
    %2023 = vmatprep.subr.mxu0 0.0
    %2024 = vmatpush1.msra.mxu0 0.0
    %2025 = vmatprep.subr.mxu0 0.0
    %2026 = vmatpush1.msra.mxu0 0.0
    %2027 = vmatprep.subr.mxu0 0.0
    %2028 = vmatpush1.msra.mxu0 0.0
    %2029 = vmatprep.subr.mxu0 0.0
    %2030 = vmatpush1.msra.mxu0 0.0
    %2031 = vmatprep.subr.mxu0 0.0
    %2032 = vmatpush1.msra.mxu0 0.0
    %2033 = vmatprep.subr.mxu0 0.0
    %2034 = vmatpush1.msra.mxu0 0.0
    %2035 = vmatprep.subr.mxu0 0.0
    %2036 = vmatpush1.msra.mxu0 0.0
    %2037 = vmatprep.subr.mxu0 0.0
    %2038 = vmatpush1.msra.mxu0 0.0
    %2039 = vmatprep.subr.mxu0 0.0
    %2040 = vmatpush1.msra.mxu0 0.0
    %2041 = vmatprep.subr.mxu0 0.0
    %2042 = vmatpush1.msra.mxu0 0.0
    %2043 = vmatprep.subr.mxu0 0.0
    %2044 = vmatpush1.msra.mxu0 0.0
    %2045 = vmatprep.subr.mxu0 0.0
    %2046 = vmatpush1.msra.mxu0 %v2010
    %2047 = vmatprep.subr.mxu0 0.0
    %2048 = vmatpush2.msra.mxu0 0.0
    %2049 = vmatprep.subr.mxu0 0.0
    %2050 = vmatpush2.msra.mxu0 0.0
    %2051 = vmatprep.subr.mxu0 0.0
    %2052 = vmatpush2.msra.mxu0 0.0
    %2053 = vmatprep.subr.mxu0 0.0
    %2054 = vmatpush2.msra.mxu0 0.0
    %2055 = vmatprep.subr.mxu0 0.0
    %2056 = vmatpush2.msra.mxu0 0.0
    %2057 = vmatprep.subr.mxu0 0.0
    %2058 = vmatpush2.msra.mxu0 0.0
    %2059 = vmatprep.subr.mxu0 0.0
    %2060 = vmatpush2.msra.mxu0 0.0
    %2061 = vmatprep.subr.mxu0 0.0
    %2062 = vmatpush2.msra.mxu0 0.0
    %2063 = vmatprep.subr.mxu0 0.0
    %2064 = vmatpush2.msra.mxu0 0.0
    %2065 = vmatprep.subr.mxu0 0.0
    %2066 = vmatpush2.msra.mxu0 0.0
    %2067 = vmatprep.subr.mxu0 0.0
    %2068 = vmatpush2.msra.mxu0 0.0
    %2069 = vmatprep.subr.mxu0 0.0
    %2070 = vmatpush2.msra.mxu0 0.0
    %2071 = vmatprep.subr.mxu0 0.0
    %2072 = vmatpush2.msra.mxu0 0.0
    %2073 = vmatprep.subr.mxu0 0.0
    %2074 = vmatpush2.msra.mxu0 0.0
    %2075 = vmatprep.subr.mxu0 0.0
    %2076 = vmatpush2.msra.mxu0 0.0
    %2077 = vmatprep.subr.mxu0 0.0
    %2078 = vmatpush2.msra.mxu0 0.0
    %2079 = vmatprep.mubr.f32.mxu0 0.0
    %2080 = vmatmul.mubr.f32.gmra.mxu0 %v2013
    %v2081 = vpop.f32.mrf.mxu0
    %v2082 = vadd.f32 0.0, %v2081
    %v2083 = vpop.f32.mrf.mxu0
    %2084 = vdwg.mxu0
    %2086 = vrot.lane.b32.xlu0 %v2082, 16
    %v2087 = vpop.permute.xlu0 %2086
    %2089 = vst.msk [vmem:[#allocation2 + $0x8] sm:$0xff] %vm595, %v2087
    %v2090 = vld [vmem:[#allocation2] sm:$0xff]
    %v2091 = vld [vmem:[#allocation2 + $0x8] sm:$0xff]
    %v2092 = vlaneseq
    %v2093 = vshrl.u32 %v2092, 7
    %v2094 = vsub.s32 0, %v2093
    %v2095 = vrot.slane %v1316, %v2094
    %v2097 = vsel %vm58, %v2090, 0
    %v2100 = vsel %vm58, %v2091, 0
    %2102 = vmatprep.subr.mxu0 0.0
    %2103 = vmatpush1.msra.mxu0 0.0
    %2104 = vmatprep.subr.mxu0 0.0
    %2105 = vmatpush1.msra.mxu0 0.0
    %2106 = vmatprep.subr.mxu0 0.0
    %2107 = vmatpush1.msra.mxu0 0.0
    %2108 = vmatprep.subr.mxu0 0.0
    %2109 = vmatpush1.msra.mxu0 0.0
    %2110 = vmatprep.subr.mxu0 0.0
    %2111 = vmatpush1.msra.mxu0 0.0
    %2112 = vmatprep.subr.mxu0 0.0
    %2113 = vmatpush1.msra.mxu0 0.0
    %2114 = vmatprep.subr.mxu0 0.0
    %2115 = vmatpush1.msra.mxu0 0.0
    %2116 = vmatprep.subr.mxu0 0.0
    %2117 = vmatpush1.msra.mxu0 0.0
    %2118 = vmatprep.subr.mxu0 0.0
    %2119 = vmatpush1.msra.mxu0 0.0
    %2120 = vmatprep.subr.mxu0 0.0
    %2121 = vmatpush1.msra.mxu0 0.0
    %2122 = vmatprep.subr.mxu0 0.0
    %2123 = vmatpush1.msra.mxu0 0.0
    %2124 = vmatprep.subr.mxu0 0.0
    %2125 = vmatpush1.msra.mxu0 0.0
    %2126 = vmatprep.subr.mxu0 0.0
    %2127 = vmatpush1.msra.mxu0 %v1294
    %2128 = vmatprep.subr.mxu0 0.0
    %2129 = vmatpush1.msra.mxu0 %v1293
    %2130 = vmatprep.subr.mxu0 0.0
    %2131 = vmatpush1.msra.mxu0 %v1292
    %2132 = vmatprep.subr.mxu0 0.0
    %2133 = vmatpush1.msra.mxu0 %v1291
    %2134 = vmatprep.subr.mxu0 0.0
    %2135 = vmatpush2.msra.mxu0 0.0
    %2136 = vmatprep.subr.mxu0 0.0
    %2137 = vmatpush2.msra.mxu0 0.0
    %2138 = vmatprep.subr.mxu0 0.0
    %2139 = vmatpush2.msra.mxu0 0.0
    %2140 = vmatprep.subr.mxu0 0.0
    %2141 = vmatpush2.msra.mxu0 0.0
    %2142 = vmatprep.subr.mxu0 0.0
    %2143 = vmatpush2.msra.mxu0 0.0
    %2144 = vmatprep.subr.mxu0 0.0
    %2145 = vmatpush2.msra.mxu0 0.0
    %2146 = vmatprep.subr.mxu0 0.0
    %2147 = vmatpush2.msra.mxu0 0.0
    %2148 = vmatprep.subr.mxu0 0.0
    %2149 = vmatpush2.msra.mxu0 0.0
    %2150 = vmatprep.subr.mxu0 0.0
    %2151 = vmatpush2.msra.mxu0 0.0
    %2152 = vmatprep.subr.mxu0 0.0
    %2153 = vmatpush2.msra.mxu0 0.0
    %2154 = vmatprep.subr.mxu0 0.0
    %2155 = vmatpush2.msra.mxu0 0.0
    %2156 = vmatprep.subr.mxu0 0.0
    %2157 = vmatpush2.msra.mxu0 0.0
    %2158 = vmatprep.subr.mxu0 0.0
    %2159 = vmatpush2.msra.mxu0 0.0
    %2160 = vmatprep.subr.mxu0 0.0
    %2161 = vmatpush2.msra.mxu0 0.0
    %2162 = vmatprep.subr.mxu0 0.0
    %2163 = vmatpush2.msra.mxu0 0.0
    %2164 = vmatprep.subr.mxu0 0.0
    %2165 = vmatpush2.msra.mxu0 0.0
    %2166 = vmatprep.mubr.f32.mxu0 0.0
    %2167 = vmatmul.mubr.f32.gmra.mxu0 %v2097
    %v2168 = vpop.f32.mrf.mxu0
    %v2169 = vadd.f32 %v2095, %v2168
    %v2170 = vpop.f32.mrf.mxu0
    %2171 = vmatprep.mubr.f32.mxu0 0.0
    %2172 = vmatmul.mubr.f32.gmra.mxu0 %v2100
    %v2173 = vpop.f32.mrf.mxu0
    %v2174 = vadd.f32 %v2095, %v2173
    %v2175 = vpop.f32.mrf.mxu0
    %2176 = vdwg.mxu0
    %v2177 = vadd.f32 %v2169, %v1285
    %v2178 = vadd.f32 %v2174, %v1286
    %v2179 = vsel %vm58, %v2177, 0.0
    %2180 = vadd.xlane.f32.xlu0 %v2179
    %v2181 = vpop.xlane.xlu0 %2180
    %v2182 = vsel %vm58, %v2178, 0.0
    %2183 = vadd.xlane.f32.xlu0 %v2182
    %v2184 = vpop.xlane.xlu0 %2183
    %v2185 = vmul.f32 %v2181, %v65
    %v2186 = vmul.f32 %v2184, %v65
    %v2187 = vsub.f32 %v2177, %v2185
    %v2188 = vsub.f32 %v2178, %v2186
    %v2189 = vmul.f32 %v2187, %v2187
    %v2190 = vmul.f32 %v2188, %v2188
    %v2191 = vsel %vm58, %v2189, 0.0
    %2192 = vadd.xlane.f32.xlu0 %v2191
    %v2193 = vpop.xlane.xlu0 %2192
    %v2194 = vsel %vm58, %v2190, 0.0
    %2195 = vadd.xlane.f32.xlu0 %v2194
    %v2196 = vpop.xlane.xlu0 %2195
    %v2197 = vmul.f32 %v2193, %v65
    %v2198 = vmul.f32 %v2196, %v65
    %v2199 = vlaneseq
    %v2200 = vshrl.u32 %v2199, 7
    %v2201 = vsub.s32 0, %v2200
    %v2202 = vrot.slane %v1317, %v2201
    %v2203 = vmul.f32 %v2202, %v2187
    %v2204 = vmul.f32 %v2202, %v2188
    %v2205 = vadd.f32 %v2197, 1e-12
    %v2206 = vadd.f32 %v2198, 1e-12
    %v2207 = vrsqrt.pop %v2205
    %v2208 = vrsqrt.pop %v2206
    %v2209 = vmul.f32 %v2203, %v2207
    %v2210 = vmul.f32 %v2204, %v2208
    %v2211 = vlaneseq
    %v2212 = vshrl.u32 %v2211, 7
    %v2213 = vsub.s32 0, %v2212
    %v2214 = vrot.slane %v1318, %v2213
    %v2215 = vadd.f32 %v2209, %v2214
    %v2216 = vadd.f32 %v2210, %v2214
    %v2217 = vlaneseq
    %v2218 = vshrl.u32 %v2217, 7
    %v2219 = vsub.s32 0, %v2218
    %v2220 = vrot.slane %v1319, %v2219
    %v2222 = vsel %vm58, %v2215, 0
    %v2225 = vsel %vm58, %v2216, 0
    %2227 = vmatprep.subr.mxu0 0.0
    %2228 = vmatpush1.msra.mxu0 0.0
    %2229 = vmatprep.subr.mxu0 0.0
    %2230 = vmatpush1.msra.mxu0 0.0
    %2231 = vmatprep.subr.mxu0 0.0
    %2232 = vmatpush1.msra.mxu0 0.0
    %2233 = vmatprep.subr.mxu0 0.0
    %2234 = vmatpush1.msra.mxu0 0.0
    %2235 = vmatprep.subr.mxu0 0.0
    %2236 = vmatpush1.msra.mxu0 0.0
    %2237 = vmatprep.subr.mxu0 0.0
    %2238 = vmatpush1.msra.mxu0 0.0
    %2239 = vmatprep.subr.mxu0 0.0
    %2240 = vmatpush1.msra.mxu0 0.0
    %2241 = vmatprep.subr.mxu0 0.0
    %2242 = vmatpush1.msra.mxu0 0.0
    %2243 = vmatprep.subr.mxu0 0.0
    %2244 = vmatpush1.msra.mxu0 0.0
    %2245 = vmatprep.subr.mxu0 0.0
    %2246 = vmatpush1.msra.mxu0 0.0
    %2247 = vmatprep.subr.mxu0 0.0
    %2248 = vmatpush1.msra.mxu0 0.0
    %2249 = vmatprep.subr.mxu0 0.0
    %2250 = vmatpush1.msra.mxu0 0.0
    %2251 = vmatprep.subr.mxu0 0.0
    %2252 = vmatpush1.msra.mxu0 %v1298
    %2253 = vmatprep.subr.mxu0 0.0
    %2254 = vmatpush1.msra.mxu0 %v1297
    %2255 = vmatprep.subr.mxu0 0.0
    %2256 = vmatpush1.msra.mxu0 %v1296
    %2257 = vmatprep.subr.mxu0 0.0
    %2258 = vmatpush1.msra.mxu0 %v1295
    %2259 = vmatprep.subr.mxu0 0.0
    %2260 = vmatpush2.msra.mxu0 0.0
    %2261 = vmatprep.subr.mxu0 0.0
    %2262 = vmatpush2.msra.mxu0 0.0
    %2263 = vmatprep.subr.mxu0 0.0
    %2264 = vmatpush2.msra.mxu0 0.0
    %2265 = vmatprep.subr.mxu0 0.0
    %2266 = vmatpush2.msra.mxu0 0.0
    %2267 = vmatprep.subr.mxu0 0.0
    %2268 = vmatpush2.msra.mxu0 0.0
    %2269 = vmatprep.subr.mxu0 0.0
    %2270 = vmatpush2.msra.mxu0 0.0
    %2271 = vmatprep.subr.mxu0 0.0
    %2272 = vmatpush2.msra.mxu0 0.0
    %2273 = vmatprep.subr.mxu0 0.0
    %2274 = vmatpush2.msra.mxu0 0.0
    %2275 = vmatprep.subr.mxu0 0.0
    %2276 = vmatpush2.msra.mxu0 0.0
    %2277 = vmatprep.subr.mxu0 0.0
    %2278 = vmatpush2.msra.mxu0 0.0
    %2279 = vmatprep.subr.mxu0 0.0
    %2280 = vmatpush2.msra.mxu0 0.0
    %2281 = vmatprep.subr.mxu0 0.0
    %2282 = vmatpush2.msra.mxu0 0.0
    %2283 = vmatprep.subr.mxu0 0.0
    %2284 = vmatpush2.msra.mxu0 0.0
    %2285 = vmatprep.subr.mxu0 0.0
    %2286 = vmatpush2.msra.mxu0 0.0
    %2287 = vmatprep.subr.mxu0 0.0
    %2288 = vmatpush2.msra.mxu0 0.0
    %2289 = vmatprep.subr.mxu0 0.0
    %2290 = vmatpush2.msra.mxu0 0.0
    %2291 = vmatprep.mubr.f32.mxu0 0.0
    %2292 = vmatmul.mubr.f32.gmra.mxu0 %v2222
    %v2293 = vpop.f32.mrf.mxu0
    %v2294 = vadd.f32 %v2220, %v2293
    %v2295 = vpop.f32.mrf.mxu0
    %2296 = vmatprep.mubr.f32.mxu0 0.0
    %2297 = vmatmul.mubr.f32.gmra.mxu0 %v2225
    %v2298 = vpop.f32.mrf.mxu0
    %v2299 = vadd.f32 %v2220, %v2298
    %v2300 = vpop.f32.mrf.mxu0
    %2301 = vdwg.mxu0
    %v2302 = vmul.f32 %v2294, %v2294
    %v2303 = vmul.f32 %v2299, %v2299
    %v2304 = vmul.f32 %v2294, %v2302
    %v2305 = vmul.f32 %v2299, %v2303
    %v2306 = vmul.f32 %v2304, 0.044715
    %v2307 = vmul.f32 %v2305, 0.044715
    %v2308 = vadd.f32 %v2294, %v2306
    %v2309 = vadd.f32 %v2299, %v2307
    %v2310 = vmul.f32 %v2308, 0.7978846
    %v2311 = vmul.f32 %v2309, 0.7978846
    %v2312 = vtanh.pop %v2310
    %v2313 = vtanh.pop %v2311
    %v2314 = vadd.f32 %v2312, 1.0
    %v2315 = vadd.f32 %v2313, 1.0
    %v2316 = vmul.f32 %v2314, 0.5
    %v2317 = vmul.f32 %v2315, 0.5
    %v2318 = vmul.f32 %v2294, %v2316
    %v2319 = vmul.f32 %v2299, %v2317
    %v2320 = vlaneseq
    %v2321 = vshrl.u32 %v2320, 7
    %v2322 = vsub.s32 0, %v2321
    %v2323 = vrot.slane %v1320, %v2322
    %2324 = vmatprep.subr.mxu0 0.0
    %2325 = vmatpush1.msra.mxu0 %v1314
    %2326 = vmatprep.subr.mxu0 0.0
    %2327 = vmatpush1.msra.mxu0 %v1313
    %2328 = vmatprep.subr.mxu0 0.0
    %2329 = vmatpush1.msra.mxu0 %v1312
    %2330 = vmatprep.subr.mxu0 0.0
    %2331 = vmatpush1.msra.mxu0 %v1311
    %2332 = vmatprep.subr.mxu0 0.0
    %2333 = vmatpush1.msra.mxu0 %v1310
    %2334 = vmatprep.subr.mxu0 0.0
    %2335 = vmatpush1.msra.mxu0 %v1309
    %2336 = vmatprep.subr.mxu0 0.0
    %2337 = vmatpush1.msra.mxu0 %v1308
    %2338 = vmatprep.subr.mxu0 0.0
    %2339 = vmatpush1.msra.mxu0 %v1307
    %2340 = vmatprep.subr.mxu0 0.0
    %2341 = vmatpush1.msra.mxu0 %v1306
    %2342 = vmatprep.subr.mxu0 0.0
    %2343 = vmatpush1.msra.mxu0 %v1305
    %2344 = vmatprep.subr.mxu0 0.0
    %2345 = vmatpush1.msra.mxu0 %v1304
    %2346 = vmatprep.subr.mxu0 0.0
    %2347 = vmatpush1.msra.mxu0 %v1303
    %2348 = vmatprep.subr.mxu0 0.0
    %2349 = vmatpush1.msra.mxu0 %v1302
    %2350 = vmatprep.subr.mxu0 0.0
    %2351 = vmatpush1.msra.mxu0 %v1301
    %2352 = vmatprep.subr.mxu0 0.0
    %2353 = vmatpush1.msra.mxu0 %v1300
    %2354 = vmatprep.subr.mxu0 0.0
    %2355 = vmatpush1.msra.mxu0 %v1299
    %2356 = vmatprep.subr.mxu0 0.0
    %2357 = vmatpush2.msra.mxu0 0.0
    %2358 = vmatprep.subr.mxu0 0.0
    %2359 = vmatpush2.msra.mxu0 0.0
    %2360 = vmatprep.subr.mxu0 0.0
    %2361 = vmatpush2.msra.mxu0 0.0
    %2362 = vmatprep.subr.mxu0 0.0
    %2363 = vmatpush2.msra.mxu0 0.0
    %2364 = vmatprep.subr.mxu0 0.0
    %2365 = vmatpush2.msra.mxu0 0.0
    %2366 = vmatprep.subr.mxu0 0.0
    %2367 = vmatpush2.msra.mxu0 0.0
    %2368 = vmatprep.subr.mxu0 0.0
    %2369 = vmatpush2.msra.mxu0 0.0
    %2370 = vmatprep.subr.mxu0 0.0
    %2371 = vmatpush2.msra.mxu0 0.0
    %2372 = vmatprep.subr.mxu0 0.0
    %2373 = vmatpush2.msra.mxu0 0.0
    %2374 = vmatprep.subr.mxu0 0.0
    %2375 = vmatpush2.msra.mxu0 0.0
    %2376 = vmatprep.subr.mxu0 0.0
    %2377 = vmatpush2.msra.mxu0 0.0
    %2378 = vmatprep.subr.mxu0 0.0
    %2379 = vmatpush2.msra.mxu0 0.0
    %2380 = vmatprep.subr.mxu0 0.0
    %2381 = vmatpush2.msra.mxu0 0.0
    %2382 = vmatprep.subr.mxu0 0.0
    %2383 = vmatpush2.msra.mxu0 0.0
    %2384 = vmatprep.subr.mxu0 0.0
    %2385 = vmatpush2.msra.mxu0 0.0
    %2386 = vmatprep.subr.mxu0 0.0
    %2387 = vmatpush2.msra.mxu0 0.0
    %2388 = vmatprep.mubr.f32.mxu0 0.0
    %2389 = vmatmul.mubr.f32.gmra.mxu0 %v2318
    %v2390 = vpop.f32.mrf.mxu0
    %v2391 = vadd.f32 %v2323, %v2390
    %v2392 = vpop.f32.mrf.mxu0
    %2393 = vmatprep.mubr.f32.mxu0 0.0
    %2394 = vmatmul.mubr.f32.gmra.mxu0 %v2319
    %v2395 = vpop.f32.mrf.mxu0
    %v2396 = vadd.f32 %v2323, %v2395
    %v2397 = vpop.f32.mrf.mxu0
    %2398 = vdwg.mxu0
    %v2399 = vadd.f32 %v2391, %v2215
    %v2400 = vadd.f32 %v2396, %v2216
    %v2401 = vsel %vm58, %v2399, 0.0
    %2402 = vadd.xlane.f32.xlu0 %v2401
    %v2403 = vpop.xlane.xlu0 %2402
    %v2404 = vsel %vm58, %v2400, 0.0
    %2405 = vadd.xlane.f32.xlu0 %v2404
    %v2406 = vpop.xlane.xlu0 %2405
    %v2407 = vmul.f32 %v2403, %v65
    %v2408 = vmul.f32 %v2406, %v65
    %v2409 = vsub.f32 %v2399, %v2407
    %v2410 = vsub.f32 %v2400, %v2408
    %v2411 = vmul.f32 %v2409, %v2409
    %v2412 = vmul.f32 %v2410, %v2410
    %v2413 = vsel %vm58, %v2411, 0.0
    %2414 = vadd.xlane.f32.xlu0 %v2413
    %v2415 = vpop.xlane.xlu0 %2414
    %v2416 = vsel %vm58, %v2412, 0.0
    %2417 = vadd.xlane.f32.xlu0 %v2416
    %v2418 = vpop.xlane.xlu0 %2417
    %v2419 = vmul.f32 %v2415, %v65
    %v2420 = vmul.f32 %v2418, %v65
    %v2421 = vlaneseq
    %v2422 = vshrl.u32 %v2421, 7
    %v2423 = vsub.s32 0, %v2422
    %v2424 = vrot.slane %v1321, %v2423
    %v2425 = vmul.f32 %v2424, %v2409
    %v2426 = vmul.f32 %v2424, %v2410
    %v2427 = vadd.f32 %v2419, 1e-12
    %v2428 = vadd.f32 %v2420, 1e-12
    %v2429 = vrsqrt.pop %v2427
    %v2430 = vrsqrt.pop %v2428
    %v2431 = vmul.f32 %v2425, %v2429
    %v2432 = vmul.f32 %v2426, %v2430
    %v2433 = vlaneseq
    %v2434 = vshrl.u32 %v2433, 7
    %v2435 = vsub.s32 0, %v2434
    %v2436 = vrot.slane %v1322, %v2435
    %v2437 = vadd.f32 %v2431, %v2436
    %v2438 = vadd.f32 %v2432, %v2436
    %2439 = vst.msk [vmem:[#allocation9] sm:$0xff] %vm58, %v2437
    %2440 = vst.msk [vmem:[#allocation9 + $0x8] sm:$0xff] %vm58, %v2438
    // Predicated region
    $region26: #{tpu_custom_call.1} parent=1 // pred_check
      _
    $region27: #{tpu_custom_call.1} parent=1 // pred_check_branch
      %2442 = sbr.rel (0) target = $region29
    $region28: #{tpu_custom_call.1} parent=1 // pred_region
      %s2444 = ssub.s32 256, 256
      %2445 = vsyncadd [#allocation5], %s2444
      %s2446 = sshll.u32 [#allocation9], 4
      %s2447 = int_to_ptr.vmem [resolvable:$true] %s2446
      %2452 = dma.vmem_to_hbm [thread:$0]  %s2447, 256, %s3, [#allocation5], 128, 128, 8
    $region29: #{tpu_custom_call.1} parent=1 // pred_fallthru
      _
    // Predicated region
    $region30: #{tpu_custom_call.1} parent=1 // pred_check
      _
    $region31: #{tpu_custom_call.1} parent=1 // pred_check_branch
      %2454 = sbr.rel (0) target = $region33
    $region32: #{tpu_custom_call.1} parent=1 // pred_region
      %2455 = dma.done [#allocation5], 256
    $region33: #{tpu_custom_call.1} parent=1 // pred_fallthru
      _
    %2456 = vsyncpa [#allocation4], 1
    %2457 = vsyncpa [#allocation7], 1
    %2458 = vsyncpa [#allocation5], 1

</llo_original>
